<compile_context>
chip_gen: v5e
topology: v5e:2x2
jax: 0.10.0
libtpu: 0.0.40
codegen_flags: <defaults>
</compile_context>

<pallas_src>
import functools

import jax
import jax.numpy as jnp
from jax.experimental import pallas as pl
from jax.experimental.pallas import tpu as pltpu


def _iprmpnn_kernel(x_ref, w_fused_ref, b_fused_ref,
                    w_v1_ref, b_v1_ref, w_v2_ref, b_v2_ref,
                    w_m1_ref, b_m1_ref, w_m2_ref, b_m2_ref,
                    bmask_ref, out_ref,
                    *, gb, num_nodes, hidden, vp, v_real, top_k):
    n = num_nodes

    # ---- fused node embedding + affinity: one MXU matmul over gb*N rows ------
    fused = (jnp.dot(x_ref[...], w_fused_ref[...],
                     preferred_element_type=jnp.float32) + b_fused_ref[...])
    feats = fused[:, :hidden]                          # [gb*N, H]
    aff = fused[:, hidden:hidden + vp]                 # [gb*N, Vp]

    # ---- relayout affinities to lane-dense [N, gb*Vp] -------------------------
    # column block g holds graph g's [N, Vp] affinities; all top-k / softmax
    # temporaries are then only (N x gb*Vp) lane-dense vregs (no spills).
    aff_t = jnp.concatenate(
        [aff[g * n:(g + 1) * n, :] for g in range(gb)], axis=1)   # [N, gb*Vp]

    # ---- top-k mask over the node (sublane) axis per (graph, virtual) lane ----
    # iterative first-extremum selection (extremum + min-of-iota tie-break);
    # identical to torch.topk on untied data.  When k > N/2 it is cheaper to
    # exclude the (N - k) smallest entries instead of selecting the k largest.
    iota_n = jax.lax.broadcasted_iota(jnp.int32, aff_t.shape, 0)
    drop = n - top_k
    work = aff_t
    if drop < top_k:
        mask = jnp.ones_like(aff_t)
        for _ in range(drop):
            cmin = jnp.min(work, axis=0, keepdims=True)
            cand = jnp.where(work == cmin, iota_n, n)
            sel = iota_n == jnp.min(cand, axis=0, keepdims=True)
            mask = jnp.where(sel, 0.0, mask)
            work = jnp.where(sel, jnp.inf, work)
    else:
        mask = jnp.zeros_like(aff_t)
        for _ in range(top_k):
            cmax = jnp.max(work, axis=0, keepdims=True)
            cand = jnp.where(work == cmax, iota_n, n)
            sel = iota_n == jnp.min(cand, axis=0, keepdims=True)
            mask = jnp.where(sel, 1.0, mask)
            work = jnp.where(sel, -jnp.inf, work)

    # masked affinity + softmax over nodes (non-selected entries stay 0, as in
    # the reference); the denominator divide goes to the EUP.
    masked = aff_t * mask
    mmax = jnp.max(masked, axis=0, keepdims=True)
    e = jnp.exp(masked - mmax)
    nw_t = e * pl.reciprocal(jnp.sum(e, axis=0, keepdims=True), approx=True)

    # ---- aggregation: one block-diagonal MXU matmul ---------------------------
    # nw_bd[(g, v), (g', m)] = nw[g, v, m] * (g == g'), so vn = nw_bd @ feats is
    # the per-graph weighted node aggregation as a single K = gb*N matmul
    # instead of gb tiny K = N batched matmuls.
    nw2 = nw_t.T                                                   # [gb*Vp, N]
    nw_bd = jnp.concatenate([nw2] * gb, axis=1) * bmask_ref[...]   # [gb*Vp, gb*N]
    vn = jnp.dot(nw_bd, feats, preferred_element_type=jnp.float32)  # [gb*Vp, H]

    # ---- virtual_node_mlp: Linear -> ReLU -> Linear on gb*Vp rows -------------
    vn = jnp.maximum(
        jnp.dot(vn, w_v1_ref[...], preferred_element_type=jnp.float32)
        + b_v1_ref[...], 0.0)
    vn = (jnp.dot(vn, w_v2_ref[...], preferred_element_type=jnp.float32)
          + b_v2_ref[...])

    # ---- masked mean over the real virtual nodes (padded ones weighted 0) -----
    vn3 = vn.reshape(gb, vp, hidden)
    v_iota = jax.lax.broadcasted_iota(jnp.int32, (vp, 1), 0)
    v_weight = jnp.where(v_iota < v_real, jnp.float32(1.0 / v_real),
                         jnp.float32(0.0))                         # [Vp, 1]
    gf = jnp.sum(vn3 * v_weight, axis=1)                           # [gb, H]

    # ---- final mlp: Linear -> ReLU -> Linear (output padded to 128 lanes) -----
    o = jnp.maximum(
        jnp.dot(gf, w_m1_ref[...], preferred_element_type=jnp.float32)
        + b_m1_ref[...], 0.0)
    o = (jnp.dot(o, w_m2_ref[...], preferred_element_type=jnp.float32)
         + b_m2_ref[...])                                          # [gb, 128]

    out_ref[...] = o                # full-tile, unmasked lane-dense store


def _pick_graphs_per_block(num_graphs, nodes_per_graph):
    """Prefer a 2-step 'parallel' grid when shapes allow it.

    Two steps feed both v7x TensorCores, cost only ~0.35us extra on single-TC
    v5e/v6e, and halve the O(gb^2) block-diagonal construction per step while
    still giving the MXU >= 128 node rows per matmul.
    """
    if num_graphs % 2 == 0:
        gb = num_graphs // 2
        if gb % 8 == 0 and gb * nodes_per_graph >= 128:
            return gb
    return num_graphs


def iprmpnn_forward(x_dense, params, top_k_connections, graphs_per_block=None):
    """x_dense: [G, N, input_dim] dense node features (equal-size graphs)."""
    G, N, Din = x_dense.shape
    H = params["w_emb"].shape[1]
    V = params["w_aff"].shape[1]
    O = params["w_m2"].shape[1]
    k = min(top_k_connections, N)

    gb = graphs_per_block or _pick_graphs_per_block(G, N)
    assert G % gb == 0, (G, gb)
    grid = (G // gb,)

    # Pad virtual nodes to a sublane multiple so in-kernel shapes stay aligned;
    # padded virtual nodes have zero affinity and zero mean-pool weight.
    Vp = ((V + 7) // 8) * 8
    w_aff_p = jnp.zeros((H, Vp), jnp.float32).at[:, :V].set(params["w_aff"])

    # Fuse the affinity projection into the embedding matmul:
    #   aff = (x @ w_emb + b_emb) @ w_aff = x @ (w_emb @ w_aff) + b_emb @ w_aff
    w_fused = jnp.concatenate([params["w_emb"], params["w_emb"] @ w_aff_p],
                              axis=1)                              # [Din, H+Vp]
    b_fused = jnp.concatenate([params["b_emb"], params["b_emb"] @ w_aff_p],
                              axis=1)                              # [1, H+Vp]

    # Pad the final Linear to a full 128-lane tile -> unmasked output stores.
    Op = max(128, ((O + 127) // 128) * 128)
    w_m2p = jnp.zeros((H, Op), jnp.float32).at[:, :O].set(params["w_m2"])
    b_m2p = jnp.zeros((1, Op), jnp.float32).at[:, :O].set(params["b_m2"])

    # 0/1 block-diagonal mask for the one-shot aggregation matmul.
    rows = jnp.arange(gb * Vp)[:, None] // Vp
    cols = jnp.arange(gb * N)[None, :] // N
    bmask = (rows == cols).astype(jnp.float32)                     # [gb*Vp, gb*N]

    kernel = functools.partial(_iprmpnn_kernel, gb=gb, num_nodes=N, hidden=H,
                               vp=Vp, v_real=V, top_k=k)

    def full_spec(shape):
        nd = len(shape)
        return pl.BlockSpec(shape, lambda g, _nd=nd: (0,) * _nd)

    in_specs = [
        pl.BlockSpec((gb * N, Din), lambda g: (g, 0)),   # node rows of gb graphs
        full_spec((Din, H + Vp)), full_spec((1, H + Vp)),  # fused emb + affinity
        full_spec((H, H)), full_spec((1, H)),            # virtual_node_mlp[0]
        full_spec((H, H)), full_spec((1, H)),            # virtual_node_mlp[2]
        full_spec((H, H)), full_spec((1, H)),            # mlp[0]
        full_spec((H, Op)), full_spec((1, Op)),          # mlp[2] (lane-padded)
        full_spec((gb * Vp, gb * N)),                    # block-diagonal mask
    ]

    out_padded = pl.pallas_call(
        kernel,
        out_shape=jax.ShapeDtypeStruct((G, Op), jnp.float32),
        grid=grid,
        in_specs=in_specs,
        out_specs=pl.BlockSpec((gb, Op), lambda g: (g, 0)),
        compiler_params=pltpu.CompilerParams(
            dimension_semantics=("parallel",),
            vmem_limit_bytes=48 * 1024 * 1024),
    )(x_dense.reshape(G * N, Din), w_fused, b_fused,
      params["w_v1"], params["b_v1"], params["w_v2"], params["b_v2"],
      params["w_m1"], params["b_m1"], w_m2p, b_m2p, bmask)

    return out_padded[:, :O]


def iprmpnn_reference(x_dense, params, top_k_connections):
    """Pure-JAX reference mirroring the PyTorch forward (per-graph loop)."""
    G, N, _ = x_dense.shape
    V = params["w_aff"].shape[1]
    k = min(top_k_connections, N)
    outs = []
    for g in range(G):
        h = x_dense[g] @ params["w_emb"] + params["b_emb"]             # (N, H)
        aff = h @ params["w_aff"]                                      # (N, V)
        _, idx = jax.lax.top_k(aff.T, k)                               # (V, k)
        mask = jnp.zeros((V, N), jnp.float32)
        mask = mask.at[jnp.arange(V)[:, None], idx].set(1.0).T         # (N, V)
        nw = jax.nn.softmax(aff * mask, axis=0)
        vn = nw.T @ h                                                  # (V, H)
        vn = jnp.maximum(vn @ params["w_v1"] + params["b_v1"], 0.0)
        vn = vn @ params["w_v2"] + params["b_v2"]
        gf = vn.mean(axis=0, keepdims=True)                            # (1, H)
        o = jnp.maximum(gf @ params["w_m1"] + params["b_m1"], 0.0)
        o = o @ params["w_m2"] + params["b_m2"]                        # (1, O)
        outs.append(o[0])
    return jnp.stack(outs, axis=0)


def init_params(key, input_dim, hidden_dim, output_dim, num_virtual_nodes):
    """Deterministic parameter init mirroring the nn.Module shapes."""
    def linear(kk, fan_in, fan_out):
        kw, kb = jax.random.split(kk)
        bound = 1.0 / jnp.sqrt(jnp.float32(fan_in))
        w = jax.random.uniform(kw, (fan_in, fan_out), jnp.float32, -bound, bound)
        b = jax.random.uniform(kb, (1, fan_out), jnp.float32, -bound, bound)
        return w, b

    ks = jax.random.split(key, 6)
    w_emb, b_emb = linear(ks[0], input_dim, hidden_dim)
    w_aff = jax.random.normal(ks[1], (hidden_dim, num_virtual_nodes), jnp.float32)
    w_v1, b_v1 = linear(ks[2], hidden_dim, hidden_dim)
    w_v2, b_v2 = linear(ks[3], hidden_dim, hidden_dim)
    w_m1, b_m1 = linear(ks[4], hidden_dim, hidden_dim)
    w_m2, b_m2 = linear(ks[5], hidden_dim, output_dim)
    return dict(w_emb=w_emb, b_emb=b_emb, w_aff=w_aff,
                w_v1=w_v1, b_v1=b_v1, w_v2=w_v2, b_v2=b_v2,
                w_m1=w_m1, b_m1=b_m1, w_m2=w_m2, b_m2=b_m2)


if __name__ == "__main__":
    # Module-consistent sizes: input_dim=16, hidden_dim=32, output_dim=4,
    # num_virtual_nodes=10, top_k_connections=5.  64 graphs of 8 nodes -> the
    # default grid is 2 parallel steps of 32 graphs (256 node rows / step).
    G, N, INPUT_DIM, HIDDEN_DIM, OUTPUT_DIM = 64, 8, 16, 32, 4
    NUM_VIRTUAL, TOP_K = 10, 5

    key = jax.random.PRNGKey(0)
    k_x, k_p = jax.random.split(key)

    # data.x: [total_nodes, input_dim]; batch = graph id per node (equal sizes)
    x_flat = jax.random.normal(k_x, (G * N, INPUT_DIM), jnp.float32)
    x_dense = x_flat.reshape(G, N, INPUT_DIM)

    params = init_params(k_p, INPUT_DIM, HIDDEN_DIM, OUTPUT_DIM, NUM_VIRTUAL)

    out = iprmpnn_forward(x_dense, params, TOP_K)
    jax.block_until_ready(out)
    assert out.shape == (G, OUTPUT_DIM)

    ref = iprmpnn_reference(x_dense, params, TOP_K)
    max_err = float(jnp.max(jnp.abs(out - ref)))
    assert jnp.allclose(out, ref, rtol=1e-2, atol=1e-2), max_err

    print("KERNEL_OK")
</pallas_src>

<mosaic_0001>
module attributes {stable_mosaic.version = 11 : i64} {
  func.func @_iprmpnn_kernel(%arg0: i32, %arg1: memref<256x16xf32, #tpu.memory_space<vmem>>, %arg2: memref<16x48xf32, #tpu.memory_space<vmem>>, %arg3: memref<1x48xf32, #tpu.memory_space<vmem>>, %arg4: memref<32x32xf32, #tpu.memory_space<vmem>>, %arg5: memref<1x32xf32, #tpu.memory_space<vmem>>, %arg6: memref<32x32xf32, #tpu.memory_space<vmem>>, %arg7: memref<1x32xf32, #tpu.memory_space<vmem>>, %arg8: memref<32x32xf32, #tpu.memory_space<vmem>>, %arg9: memref<1x32xf32, #tpu.memory_space<vmem>>, %arg10: memref<32x128xf32, #tpu.memory_space<vmem>>, %arg11: memref<1x128xf32, #tpu.memory_space<vmem>>, %arg12: memref<512x256xf32, #tpu.memory_space<vmem>>, %arg13: memref<32x128xf32, #tpu.memory_space<vmem>>) attributes {dimension_semantics = [#tpu.dimension_semantics<parallel>], iteration_bounds = array<i64: 2>, scalar_prefetch = 0 : i64, scratch_operands = 0 : i64, tpu.core_type = #tpu.core_type<tc>, window_params = [{transform_indices = @transform_0, window_bounds = array<i64: 256, 16>}, {pipeline_mode = #tpu.pipeline_mode<synchronous>, transform_indices = @transform_1, window_bounds = array<i64: 16, 48>}, {pipeline_mode = #tpu.pipeline_mode<synchronous>, transform_indices = @transform_2, window_bounds = array<i64: 1, 48>}, {pipeline_mode = #tpu.pipeline_mode<synchronous>, transform_indices = @transform_3, window_bounds = array<i64: 32, 32>}, {pipeline_mode = #tpu.pipeline_mode<synchronous>, transform_indices = @transform_4, window_bounds = array<i64: 1, 32>}, {pipeline_mode = #tpu.pipeline_mode<synchronous>, transform_indices = @transform_5, window_bounds = array<i64: 32, 32>}, {pipeline_mode = #tpu.pipeline_mode<synchronous>, transform_indices = @transform_6, window_bounds = array<i64: 1, 32>}, {pipeline_mode = #tpu.pipeline_mode<synchronous>, transform_indices = @transform_7, window_bounds = array<i64: 32, 32>}, {pipeline_mode = #tpu.pipeline_mode<synchronous>, transform_indices = @transform_8, window_bounds = array<i64: 1, 32>}, {pipeline_mode = #tpu.pipeline_mode<synchronous>, transform_indices = @transform_9, window_bounds = array<i64: 32, 128>}, {pipeline_mode = #tpu.pipeline_mode<synchronous>, transform_indices = @transform_10, window_bounds = array<i64: 1, 128>}, {pipeline_mode = #tpu.pipeline_mode<synchronous>, transform_indices = @transform_11, window_bounds = array<i64: 512, 256>}, {transform_indices = @transform_12, window_bounds = array<i64: 32, 128>}]} {
    %c0 = arith.constant 0 : index
    %c0_0 = arith.constant 0 : index
    %0 = vector.load %arg1[%c0, %c0_0] : memref<256x16xf32, #tpu.memory_space<vmem>>, vector<256x16xf32>
    %c0_1 = arith.constant 0 : index
    %c0_2 = arith.constant 0 : index
    %1 = vector.load %arg2[%c0_1, %c0_2] : memref<16x48xf32, #tpu.memory_space<vmem>>, vector<16x48xf32>
    %cst = arith.constant dense<0.000000e+00> : vector<256x48xf32>
    %2 = tpu.matmul %0, %1, %cst {dimension_numbers = #tpu.dot_dimension_numbers<[1], [0], [0], [1], [0, 0, 1, 1], [], []>} : vector<256x16xf32>, vector<16x48xf32>, vector<256x48xf32> -> vector<256x48xf32>
    %c0_3 = arith.constant 0 : index
    %c0_4 = arith.constant 0 : index
    %3 = vector.load %arg3[%c0_3, %c0_4] : memref<1x48xf32, #tpu.memory_space<vmem>>, vector<1x48xf32>
    %4 = vector.broadcast %3 : vector<1x48xf32> to vector<256x48xf32>
    %5 = arith.addf %2, %4 : vector<256x48xf32>
    %6 = vector.extract_strided_slice %5 {offsets = [0, 0], sizes = [256, 32], strides = [1, 1]} : vector<256x48xf32> to vector<256x32xf32>
    %7 = vector.extract_strided_slice %5 {offsets = [0, 32], sizes = [256, 16], strides = [1, 1]} : vector<256x48xf32> to vector<256x16xf32>
    %8 = vector.extract_strided_slice %7 {offsets = [0, 0], sizes = [8, 16], strides = [1, 1]} : vector<256x16xf32> to vector<8x16xf32>
    %9 = vector.extract_strided_slice %7 {offsets = [8, 0], sizes = [8, 16], strides = [1, 1]} : vector<256x16xf32> to vector<8x16xf32>
    %10 = vector.extract_strided_slice %7 {offsets = [16, 0], sizes = [8, 16], strides = [1, 1]} : vector<256x16xf32> to vector<8x16xf32>
    %11 = vector.extract_strided_slice %7 {offsets = [24, 0], sizes = [8, 16], strides = [1, 1]} : vector<256x16xf32> to vector<8x16xf32>
    %12 = vector.extract_strided_slice %7 {offsets = [32, 0], sizes = [8, 16], strides = [1, 1]} : vector<256x16xf32> to vector<8x16xf32>
    %13 = vector.extract_strided_slice %7 {offsets = [40, 0], sizes = [8, 16], strides = [1, 1]} : vector<256x16xf32> to vector<8x16xf32>
    %14 = vector.extract_strided_slice %7 {offsets = [48, 0], sizes = [8, 16], strides = [1, 1]} : vector<256x16xf32> to vector<8x16xf32>
    %15 = vector.extract_strided_slice %7 {offsets = [56, 0], sizes = [8, 16], strides = [1, 1]} : vector<256x16xf32> to vector<8x16xf32>
    %16 = vector.extract_strided_slice %7 {offsets = [64, 0], sizes = [8, 16], strides = [1, 1]} : vector<256x16xf32> to vector<8x16xf32>
    %17 = vector.extract_strided_slice %7 {offsets = [72, 0], sizes = [8, 16], strides = [1, 1]} : vector<256x16xf32> to vector<8x16xf32>
    %18 = vector.extract_strided_slice %7 {offsets = [80, 0], sizes = [8, 16], strides = [1, 1]} : vector<256x16xf32> to vector<8x16xf32>
    %19 = vector.extract_strided_slice %7 {offsets = [88, 0], sizes = [8, 16], strides = [1, 1]} : vector<256x16xf32> to vector<8x16xf32>
    %20 = vector.extract_strided_slice %7 {offsets = [96, 0], sizes = [8, 16], strides = [1, 1]} : vector<256x16xf32> to vector<8x16xf32>
    %21 = vector.extract_strided_slice %7 {offsets = [104, 0], sizes = [8, 16], strides = [1, 1]} : vector<256x16xf32> to vector<8x16xf32>
    %22 = vector.extract_strided_slice %7 {offsets = [112, 0], sizes = [8, 16], strides = [1, 1]} : vector<256x16xf32> to vector<8x16xf32>
    %23 = vector.extract_strided_slice %7 {offsets = [120, 0], sizes = [8, 16], strides = [1, 1]} : vector<256x16xf32> to vector<8x16xf32>
    %24 = vector.extract_strided_slice %7 {offsets = [128, 0], sizes = [8, 16], strides = [1, 1]} : vector<256x16xf32> to vector<8x16xf32>
    %25 = vector.extract_strided_slice %7 {offsets = [136, 0], sizes = [8, 16], strides = [1, 1]} : vector<256x16xf32> to vector<8x16xf32>
    %26 = vector.extract_strided_slice %7 {offsets = [144, 0], sizes = [8, 16], strides = [1, 1]} : vector<256x16xf32> to vector<8x16xf32>
    %27 = vector.extract_strided_slice %7 {offsets = [152, 0], sizes = [8, 16], strides = [1, 1]} : vector<256x16xf32> to vector<8x16xf32>
    %28 = vector.extract_strided_slice %7 {offsets = [160, 0], sizes = [8, 16], strides = [1, 1]} : vector<256x16xf32> to vector<8x16xf32>
    %29 = vector.extract_strided_slice %7 {offsets = [168, 0], sizes = [8, 16], strides = [1, 1]} : vector<256x16xf32> to vector<8x16xf32>
    %30 = vector.extract_strided_slice %7 {offsets = [176, 0], sizes = [8, 16], strides = [1, 1]} : vector<256x16xf32> to vector<8x16xf32>
    %31 = vector.extract_strided_slice %7 {offsets = [184, 0], sizes = [8, 16], strides = [1, 1]} : vector<256x16xf32> to vector<8x16xf32>
    %32 = vector.extract_strided_slice %7 {offsets = [192, 0], sizes = [8, 16], strides = [1, 1]} : vector<256x16xf32> to vector<8x16xf32>
    %33 = vector.extract_strided_slice %7 {offsets = [200, 0], sizes = [8, 16], strides = [1, 1]} : vector<256x16xf32> to vector<8x16xf32>
    %34 = vector.extract_strided_slice %7 {offsets = [208, 0], sizes = [8, 16], strides = [1, 1]} : vector<256x16xf32> to vector<8x16xf32>
    %35 = vector.extract_strided_slice %7 {offsets = [216, 0], sizes = [8, 16], strides = [1, 1]} : vector<256x16xf32> to vector<8x16xf32>
    %36 = vector.extract_strided_slice %7 {offsets = [224, 0], sizes = [8, 16], strides = [1, 1]} : vector<256x16xf32> to vector<8x16xf32>
    %37 = vector.extract_strided_slice %7 {offsets = [232, 0], sizes = [8, 16], strides = [1, 1]} : vector<256x16xf32> to vector<8x16xf32>
    %38 = vector.extract_strided_slice %7 {offsets = [240, 0], sizes = [8, 16], strides = [1, 1]} : vector<256x16xf32> to vector<8x16xf32>
    %39 = vector.extract_strided_slice %7 {offsets = [248, 0], sizes = [8, 16], strides = [1, 1]} : vector<256x16xf32> to vector<8x16xf32>
    %40 = tpu.concatenate %8, %9, %10, %11, %12, %13, %14, %15, %16, %17, %18, %19, %20, %21, %22, %23 in 1 : vector<8x16xf32>, vector<8x16xf32>, vector<8x16xf32>, vector<8x16xf32>, vector<8x16xf32>, vector<8x16xf32>, vector<8x16xf32>, vector<8x16xf32>, vector<8x16xf32>, vector<8x16xf32>, vector<8x16xf32>, vector<8x16xf32>, vector<8x16xf32>, vector<8x16xf32>, vector<8x16xf32>, vector<8x16xf32> -> vector<8x256xf32>
    %41 = tpu.concatenate %24, %25, %26, %27, %28, %29, %30, %31, %32, %33, %34, %35, %36, %37, %38, %39 in 1 : vector<8x16xf32>, vector<8x16xf32>, vector<8x16xf32>, vector<8x16xf32>, vector<8x16xf32>, vector<8x16xf32>, vector<8x16xf32>, vector<8x16xf32>, vector<8x16xf32>, vector<8x16xf32>, vector<8x16xf32>, vector<8x16xf32>, vector<8x16xf32>, vector<8x16xf32>, vector<8x16xf32>, vector<8x16xf32> -> vector<8x256xf32>
    %42 = tpu.concatenate %40, %41 in 1 : vector<8x256xf32>, vector<8x256xf32> -> vector<8x512xf32>
    %43 = tpu.iota {dimensions = array<i32: 0>} : vector<8x512xi32>
    %cst_5 = arith.constant 1.000000e+00 : f32
    %44 = vector.broadcast %cst_5 : f32 to vector<8x512xf32>
    %cst_6 = arith.constant dense<0x7F800000> : vector<512xf32>
    %45 = vector.multi_reduction <minimumf>, %42, %cst_6 [0] : vector<8x512xf32> to vector<512xf32>
    %46 = vector.shape_cast %45 : vector<512xf32> to vector<1x512xf32>
    %47 = vector.broadcast %46 : vector<1x512xf32> to vector<8x512xf32>
    %48 = arith.cmpf oeq, %42, %47 : vector<8x512xf32>
    %c8_i32 = arith.constant 8 : i32
    %49 = vector.broadcast %c8_i32 : i32 to vector<8x512xi32>
    %50 = arith.select %48, %43, %49 : vector<8x512xi1>, vector<8x512xi32>
    %cst_7 = arith.constant dense<2147483647> : vector<512xi32>
    %51 = vector.multi_reduction <minsi>, %50, %cst_7 [0] : vector<8x512xi32> to vector<512xi32>
    %52 = vector.shape_cast %51 : vector<512xi32> to vector<1x512xi32>
    %53 = vector.broadcast %52 : vector<1x512xi32> to vector<8x512xi32>
    %54 = arith.cmpi eq, %43, %53 : vector<8x512xi32>
    %cst_8 = arith.constant 0.000000e+00 : f32
    %55 = vector.broadcast %cst_8 : f32 to vector<8x512xf32>
    %56 = arith.select %54, %55, %44 : vector<8x512xi1>, vector<8x512xf32>
    %cst_9 = arith.constant 0x7F800000 : f32
    %57 = vector.broadcast %cst_9 : f32 to vector<8x512xf32>
    %58 = arith.select %54, %57, %42 : vector<8x512xi1>, vector<8x512xf32>
    %cst_10 = arith.constant dense<0x7F800000> : vector<512xf32>
    %59 = vector.multi_reduction <minimumf>, %58, %cst_10 [0] : vector<8x512xf32> to vector<512xf32>
    %60 = vector.shape_cast %59 : vector<512xf32> to vector<1x512xf32>
    %61 = vector.broadcast %60 : vector<1x512xf32> to vector<8x512xf32>
    %62 = arith.cmpf oeq, %58, %61 : vector<8x512xf32>
    %c8_i32_11 = arith.constant 8 : i32
    %63 = vector.broadcast %c8_i32_11 : i32 to vector<8x512xi32>
    %64 = arith.select %62, %43, %63 : vector<8x512xi1>, vector<8x512xi32>
    %cst_12 = arith.constant dense<2147483647> : vector<512xi32>
    %65 = vector.multi_reduction <minsi>, %64, %cst_12 [0] : vector<8x512xi32> to vector<512xi32>
    %66 = vector.shape_cast %65 : vector<512xi32> to vector<1x512xi32>
    %67 = vector.broadcast %66 : vector<1x512xi32> to vector<8x512xi32>
    %68 = arith.cmpi eq, %43, %67 : vector<8x512xi32>
    %cst_13 = arith.constant 0.000000e+00 : f32
    %69 = vector.broadcast %cst_13 : f32 to vector<8x512xf32>
    %70 = arith.select %68, %69, %56 : vector<8x512xi1>, vector<8x512xf32>
    %cst_14 = arith.constant 0x7F800000 : f32
    %71 = vector.broadcast %cst_14 : f32 to vector<8x512xf32>
    %72 = arith.select %68, %71, %58 : vector<8x512xi1>, vector<8x512xf32>
    %cst_15 = arith.constant dense<0x7F800000> : vector<512xf32>
    %73 = vector.multi_reduction <minimumf>, %72, %cst_15 [0] : vector<8x512xf32> to vector<512xf32>
    %74 = vector.shape_cast %73 : vector<512xf32> to vector<1x512xf32>
    %75 = vector.broadcast %74 : vector<1x512xf32> to vector<8x512xf32>
    %76 = arith.cmpf oeq, %72, %75 : vector<8x512xf32>
    %c8_i32_16 = arith.constant 8 : i32
    %77 = vector.broadcast %c8_i32_16 : i32 to vector<8x512xi32>
    %78 = arith.select %76, %43, %77 : vector<8x512xi1>, vector<8x512xi32>
    %cst_17 = arith.constant dense<2147483647> : vector<512xi32>
    %79 = vector.multi_reduction <minsi>, %78, %cst_17 [0] : vector<8x512xi32> to vector<512xi32>
    %80 = vector.shape_cast %79 : vector<512xi32> to vector<1x512xi32>
    %81 = vector.broadcast %80 : vector<1x512xi32> to vector<8x512xi32>
    %82 = arith.cmpi eq, %43, %81 : vector<8x512xi32>
    %cst_18 = arith.constant 0.000000e+00 : f32
    %83 = vector.broadcast %cst_18 : f32 to vector<8x512xf32>
    %84 = arith.select %82, %83, %70 : vector<8x512xi1>, vector<8x512xf32>
    %85 = arith.mulf %42, %84 : vector<8x512xf32>
    %cst_19 = arith.constant dense<0xFF800000> : vector<512xf32>
    %86 = vector.multi_reduction <maximumf>, %85, %cst_19 [0] : vector<8x512xf32> to vector<512xf32>
    %87 = vector.shape_cast %86 : vector<512xf32> to vector<1x512xf32>
    %88 = vector.broadcast %87 : vector<1x512xf32> to vector<8x512xf32>
    %89 = arith.subf %85, %88 : vector<8x512xf32>
    %90 = math.exp %89 : vector<8x512xf32>
    %cst_20 = arith.constant dense<0.000000e+00> : vector<512xf32>
    %91 = vector.multi_reduction <add>, %90, %cst_20 [0] : vector<8x512xf32> to vector<512xf32>
    %92 = vector.shape_cast %91 : vector<512xf32> to vector<1x512xf32>
    %93 = tpu.reciprocal %92 {approx = true} : vector<1x512xf32> -> vector<1x512xf32>
    %94 = vector.broadcast %93 : vector<1x512xf32> to vector<8x512xf32>
    %95 = arith.mulf %90, %94 : vector<8x512xf32>
    %96 = tpu.transpose %95, [1, 0] : vector<8x512xf32> -> vector<512x8xf32>
    %97 = tpu.concatenate %96, %96, %96, %96, %96, %96, %96, %96, %96, %96, %96, %96, %96, %96, %96, %96 in 1 : vector<512x8xf32>, vector<512x8xf32>, vector<512x8xf32>, vector<512x8xf32>, vector<512x8xf32>, vector<512x8xf32>, vector<512x8xf32>, vector<512x8xf32>, vector<512x8xf32>, vector<512x8xf32>, vector<512x8xf32>, vector<512x8xf32>, vector<512x8xf32>, vector<512x8xf32>, vector<512x8xf32>, vector<512x8xf32> -> vector<512x128xf32>
    %98 = tpu.concatenate %96, %96, %96, %96, %96, %96, %96, %96, %96, %96, %96, %96, %96, %96, %96, %96 in 1 : vector<512x8xf32>, vector<512x8xf32>, vector<512x8xf32>, vector<512x8xf32>, vector<512x8xf32>, vector<512x8xf32>, vector<512x8xf32>, vector<512x8xf32>, vector<512x8xf32>, vector<512x8xf32>, vector<512x8xf32>, vector<512x8xf32>, vector<512x8xf32>, vector<512x8xf32>, vector<512x8xf32>, vector<512x8xf32> -> vector<512x128xf32>
    %99 = tpu.concatenate %97, %98 in 1 : vector<512x128xf32>, vector<512x128xf32> -> vector<512x256xf32>
    %c0_21 = arith.constant 0 : index
    %c0_22 = arith.constant 0 : index
    %100 = vector.load %arg12[%c0_21, %c0_22] : memref<512x256xf32, #tpu.memory_space<vmem>>, vector<512x256xf32>
    %101 = arith.mulf %99, %100 : vector<512x256xf32>
    %cst_23 = arith.constant dense<0.000000e+00> : vector<512x32xf32>
    %102 = tpu.matmul %101, %6, %cst_23 {dimension_numbers = #tpu.dot_dimension_numbers<[1], [0], [0], [1], [0, 0, 1, 1], [], []>} : vector<512x256xf32>, vector<256x32xf32>, vector<512x32xf32> -> vector<512x32xf32>
    %c0_24 = arith.constant 0 : index
    %c0_25 = arith.constant 0 : index
    %103 = vector.load %arg4[%c0_24, %c0_25] : memref<32x32xf32, #tpu.memory_space<vmem>>, vector<32x32xf32>
    %cst_26 = arith.constant dense<0.000000e+00> : vector<512x32xf32>
    %104 = tpu.matmul %102, %103, %cst_26 {dimension_numbers = #tpu.dot_dimension_numbers<[1], [0], [0], [1], [0, 0, 1, 1], [], []>} : vector<512x32xf32>, vector<32x32xf32>, vector<512x32xf32> -> vector<512x32xf32>
    %c0_27 = arith.constant 0 : index
    %c0_28 = arith.constant 0 : index
    %105 = vector.load %arg5[%c0_27, %c0_28] : memref<1x32xf32, #tpu.memory_space<vmem>>, vector<1x32xf32>
    %106 = vector.broadcast %105 : vector<1x32xf32> to vector<512x32xf32>
    %107 = arith.addf %104, %106 : vector<512x32xf32>
    %cst_29 = arith.constant 0.000000e+00 : f32
    %108 = vector.broadcast %cst_29 : f32 to vector<512x32xf32>
    %109 = arith.maximumf %107, %108 : vector<512x32xf32>
    %c0_30 = arith.constant 0 : index
    %c0_31 = arith.constant 0 : index
    %110 = vector.load %arg6[%c0_30, %c0_31] : memref<32x32xf32, #tpu.memory_space<vmem>>, vector<32x32xf32>
    %cst_32 = arith.constant dense<0.000000e+00> : vector<512x32xf32>
    %111 = tpu.matmul %109, %110, %cst_32 {dimension_numbers = #tpu.dot_dimension_numbers<[1], [0], [0], [1], [0, 0, 1, 1], [], []>} : vector<512x32xf32>, vector<32x32xf32>, vector<512x32xf32> -> vector<512x32xf32>
    %c0_33 = arith.constant 0 : index
    %c0_34 = arith.constant 0 : index
    %112 = vector.load %arg7[%c0_33, %c0_34] : memref<1x32xf32, #tpu.memory_space<vmem>>, vector<1x32xf32>
    %113 = vector.broadcast %112 : vector<1x32xf32> to vector<512x32xf32>
    %114 = arith.addf %111, %113 : vector<512x32xf32>
    %115 = vector.shape_cast %114 : vector<512x32xf32> to vector<32x16x32xf32>
    %116 = tpu.iota {dimensions = array<i32: 0>} : vector<16x1xi32>
    %c10_i32 = arith.constant 10 : i32
    %117 = vector.broadcast %c10_i32 : i32 to vector<16x1xi32>
    %118 = arith.cmpi slt, %116, %117 : vector<16x1xi32>
    %cst_35 = arith.constant 1.000000e-01 : f32
    %cst_36 = arith.constant 0.000000e+00 : f32
    %119 = vector.broadcast %cst_35 : f32 to vector<16x1xf32>
    %120 = vector.broadcast %cst_36 : f32 to vector<16x1xf32>
    %121 = arith.select %118, %119, %120 : vector<16x1xi1>, vector<16x1xf32>
    %122 = vector.shape_cast %121 : vector<16x1xf32> to vector<1x16x1xf32>
    %123 = vector.broadcast %122 : vector<1x16x1xf32> to vector<32x16x32xf32>
    %124 = arith.mulf %115, %123 : vector<32x16x32xf32>
    %cst_37 = arith.constant dense<0.000000e+00> : vector<32x32xf32>
    %125 = vector.multi_reduction <add>, %124, %cst_37 [1] : vector<32x16x32xf32> to vector<32x32xf32>
    %c0_38 = arith.constant 0 : index
    %c0_39 = arith.constant 0 : index
    %126 = vector.load %arg8[%c0_38, %c0_39] : memref<32x32xf32, #tpu.memory_space<vmem>>, vector<32x32xf32>
    %cst_40 = arith.constant dense<0.000000e+00> : vector<32x32xf32>
    %127 = tpu.matmul %125, %126, %cst_40 {dimension_numbers = #tpu.dot_dimension_numbers<[1], [0], [0], [1], [0, 0, 1, 1], [], []>} : vector<32x32xf32>, vector<32x32xf32>, vector<32x32xf32> -> vector<32x32xf32>
    %c0_41 = arith.constant 0 : index
    %c0_42 = arith.constant 0 : index
    %128 = vector.load %arg9[%c0_41, %c0_42] : memref<1x32xf32, #tpu.memory_space<vmem>>, vector<1x32xf32>
    %129 = vector.broadcast %128 : vector<1x32xf32> to vector<32x32xf32>
    %130 = arith.addf %127, %129 : vector<32x32xf32>
    %cst_43 = arith.constant 0.000000e+00 : f32
    %131 = vector.broadcast %cst_43 : f32 to vector<32x32xf32>
    %132 = arith.maximumf %130, %131 : vector<32x32xf32>
    %c0_44 = arith.constant 0 : index
    %c0_45 = arith.constant 0 : index
    %133 = vector.load %arg10[%c0_44, %c0_45] : memref<32x128xf32, #tpu.memory_space<vmem>>, vector<32x128xf32>
    %cst_46 = arith.constant dense<0.000000e+00> : vector<32x128xf32>
    %134 = tpu.matmul %132, %133, %cst_46 {dimension_numbers = #tpu.dot_dimension_numbers<[1], [0], [0], [1], [0, 0, 1, 1], [], []>} : vector<32x32xf32>, vector<32x128xf32>, vector<32x128xf32> -> vector<32x128xf32>
    %c0_47 = arith.constant 0 : index
    %c0_48 = arith.constant 0 : index
    %135 = vector.load %arg11[%c0_47, %c0_48] : memref<1x128xf32, #tpu.memory_space<vmem>>, vector<1x128xf32>
    %136 = vector.broadcast %135 : vector<1x128xf32> to vector<32x128xf32>
    %137 = arith.addf %134, %136 : vector<32x128xf32>
    %c0_49 = arith.constant 0 : index
    %c0_50 = arith.constant 0 : index
    %138 = vector.load %arg13[%c0_49, %c0_50] : memref<32x128xf32, #tpu.memory_space<vmem>>, vector<32x128xf32>
    tpu.vector_store %arg13[%c0_49, %c0_50], %137 {strides = array<i32>} : memref<32x128xf32, #tpu.memory_space<vmem>>, vector<32x128xf32>,
    return
  }
  func.func @transform_0(%arg0: i32) -> (i32, i32) {
    %c0_i32 = arith.constant 0 : i32
    %c0_i32_0 = arith.constant 0 : i32
    return %arg0, %c0_i32 : i32, i32
  }
  func.func @transform_1(%arg0: i32) -> (i32, i32) {
    %c0_i32 = arith.constant 0 : i32
    %c0_i32_0 = arith.constant 0 : i32
    %c0_i32_1 = arith.constant 0 : i32
    return %c0_i32, %c0_i32_0 : i32, i32
  }
  func.func @transform_2(%arg0: i32) -> (i32, i32) {
    %c0_i32 = arith.constant 0 : i32
    %c0_i32_0 = arith.constant 0 : i32
    %c0_i32_1 = arith.constant 0 : i32
    return %c0_i32, %c0_i32_0 : i32, i32
  }
  func.func @transform_3(%arg0: i32) -> (i32, i32) {
    %c0_i32 = arith.constant 0 : i32
    %c0_i32_0 = arith.constant 0 : i32
    %c0_i32_1 = arith.constant 0 : i32
    return %c0_i32, %c0_i32_0 : i32, i32
  }
  func.func @transform_4(%arg0: i32) -> (i32, i32) {
    %c0_i32 = arith.constant 0 : i32
    %c0_i32_0 = arith.constant 0 : i32
    %c0_i32_1 = arith.constant 0 : i32
    return %c0_i32, %c0_i32_0 : i32, i32
  }
  func.func @transform_5(%arg0: i32) -> (i32, i32) {
    %c0_i32 = arith.constant 0 : i32
    %c0_i32_0 = arith.constant 0 : i32
    %c0_i32_1 = arith.constant 0 : i32
    return %c0_i32, %c0_i32_0 : i32, i32
  }
  func.func @transform_6(%arg0: i32) -> (i32, i32) {
    %c0_i32 = arith.constant 0 : i32
    %c0_i32_0 = arith.constant 0 : i32
    %c0_i32_1 = arith.constant 0 : i32
    return %c0_i32, %c0_i32_0 : i32, i32
  }
  func.func @transform_7(%arg0: i32) -> (i32, i32) {
    %c0_i32 = arith.constant 0 : i32
    %c0_i32_0 = arith.constant 0 : i32
    %c0_i32_1 = arith.constant 0 : i32
    return %c0_i32, %c0_i32_0 : i32, i32
  }
  func.func @transform_8(%arg0: i32) -> (i32, i32) {
    %c0_i32 = arith.constant 0 : i32
    %c0_i32_0 = arith.constant 0 : i32
    %c0_i32_1 = arith.constant 0 : i32
    return %c0_i32, %c0_i32_0 : i32, i32
  }
  func.func @transform_9(%arg0: i32) -> (i32, i32) {
    %c0_i32 = arith.constant 0 : i32
    %c0_i32_0 = arith.constant 0 : i32
    %c0_i32_1 = arith.constant 0 : i32
    return %c0_i32, %c0_i32_0 : i32, i32
  }
  func.func @transform_10(%arg0: i32) -> (i32, i32) {
    %c0_i32 = arith.constant 0 : i32
    %c0_i32_0 = arith.constant 0 : i32
    %c0_i32_1 = arith.constant 0 : i32
    return %c0_i32, %c0_i32_0 : i32, i32
  }
  func.func @transform_11(%arg0: i32) -> (i32, i32) {
    %c0_i32 = arith.constant 0 : i32
    %c0_i32_0 = arith.constant 0 : i32
    %c0_i32_1 = arith.constant 0 : i32
    return %c0_i32, %c0_i32_0 : i32, i32
  }
  func.func @transform_12(%arg0: i32) -> (i32, i32) {
    %c0_i32 = arith.constant 0 : i32
    %c0_i32_0 = arith.constant 0 : i32
    return %arg0, %c0_i32 : i32, i32
  }
}

</mosaic_0001>

<llo_original>
// kernel: tpu_custom_call.1
$region0: #{tpu_custom_call.1}
  #allocation0 [shape = 'u32[]', space=smem, size = 0x4, offset = 0x4, fixed_abs, tag = 'smem constant byte address 0x4 - core index']
  #allocation1 [shape = 'u32[72,128]{1,0:T(1,128)}', space=vmem, size = 0x9000, scoped, tag = 'internal scratch']
  %s0 = inlined_call_operand.vmem [shape: f32[512,16], index: 0, kind: input, shape index: {}]
  %s1 = inlined_call_operand.vmem [shape: f32[16,48], index: 1, kind: input, shape index: {}]
  %s2 = inlined_call_operand.vmem [shape: f32[1,48], index: 2, kind: input, shape index: {}]
  %s3 = inlined_call_operand.vmem [shape: f32[32,32], index: 3, kind: input, shape index: {}]
  %s4 = inlined_call_operand.vmem [shape: f32[1,32], index: 4, kind: input, shape index: {}]
  %s5 = inlined_call_operand.vmem [shape: f32[32,32], index: 5, kind: input, shape index: {}]
  %s6 = inlined_call_operand.vmem [shape: f32[1,32], index: 6, kind: input, shape index: {}]
  %s7 = inlined_call_operand.vmem [shape: f32[32,32], index: 7, kind: input, shape index: {}]
  %s8 = inlined_call_operand.vmem [shape: f32[1,32], index: 8, kind: input, shape index: {}]
  %s9 = inlined_call_operand.vmem [shape: f32[32,128], index: 9, kind: input, shape index: {}]
  %s10 = inlined_call_operand.vmem [shape: f32[1,128], index: 10, kind: input, shape index: {}]
  %s11 = inlined_call_operand.hbm [shape: f32[512,256], index: 11, kind: input, shape index: {}]
  %s12 = inlined_call_operand.hbm [shape: f32[64,128], index: 12, kind: output, shape index: {}]
  %s13 = sld [smem:[#allocation0]]
  $region85: #{tpu_custom_call.1} parent=0
    _
  %s15 = ssub.s32 1, %s13
  %s16 = scalar_select 0, %s15, %s13
  $region1: #{tpu_custom_call.1} parent=0
    #allocation2 [shape = 'u8[524288]{0}', space=vmem, size = 0x80000, scoped, tag = 'input window, operand 11, single buffered']
    #allocation3 [shape = 's32[2]{0}', space=sflag, size = 0x8, scoped, tag = 'scoped memory for tpu_custom_call.1']
    #allocation4 [shape = 's32[2]{0}', space=sflag, size = 0x8, scoped, tag = 'scoped memory for tpu_custom_call.1']
    #allocation5 [shape = 'u8[32768]{0}', space=vmem, size = 0x8000, scoped, tag = 'output window, operand 0']
    %17 = vsyncpa [#allocation3], 0
    %18 = vsyncpa [#allocation4], 0
    %s19 = scalar_lea.sflag [#allocation4], 1
    %20 = vsyncpa %s19, 0
    loop: start=0, step=1, limit=4
    $region2: #{tpu_custom_call.1} parent=1 // loop_pre_header
      _
    $region3: #{tpu_custom_call.1} parent=1 // loop_header
      %s22 = sphi 0, %s26
      %p23 = scmp.ge.s32.totalorder %s22, 4
      %s32 = sphi 0, %s34
      %s35 = sphi 0, %s32
      %s36 = sphi 0, %s35
      %s52 = sphi 0, %s36
      %s56 = sphi 0, %s56
      %s58 = sphi 0, %s56
      %s59 = sphi 0, %s58
      %s73 = sphi 0, %s59
      %s77 = sphi 0, %s77
      %s79 = sphi 0, %s77
      %s80 = sphi 0, %s79
      %s94 = sphi 0, %s80
      %s98 = sphi 0, %s98
      %s100 = sphi 0, %s98
      %s101 = sphi 0, %s100
      %s115 = sphi 0, %s101
      %s119 = sphi 0, %s119
      %s121 = sphi 0, %s119
      %s122 = sphi 0, %s121
      %s136 = sphi 0, %s122
      %s140 = sphi 0, %s140
      %s142 = sphi 0, %s140
      %s143 = sphi 0, %s142
      %s157 = sphi 0, %s143
      %s161 = sphi 0, %s161
      %s163 = sphi 0, %s161
      %s164 = sphi 0, %s163
      %s178 = sphi 0, %s164
      %s182 = sphi 0, %s182
      %s184 = sphi 0, %s182
      %s185 = sphi 0, %s184
      %s199 = sphi 0, %s185
      %s203 = sphi 0, %s203
      %s205 = sphi 0, %s203
      %s206 = sphi 0, %s205
      %s220 = sphi 0, %s206
      %s224 = sphi 0, %s224
      %s226 = sphi 0, %s224
      %s227 = sphi 0, %s226
      %s241 = sphi 0, %s227
      %s245 = sphi 0, %s245
      %s247 = sphi 0, %s245
      %s248 = sphi 0, %s247
      %s262 = sphi 0, %s248
      %s266 = sphi 0, %s266
      %s268 = sphi 0, %s266
      %s269 = sphi 0, %s268
      %s283 = sphi 0, %s269
      %s289 = sphi 0, %s291
      %s292 = sphi 0, %s289
      %s293 = sphi 0, %s292
      %s309 = sphi 0, %s293
    $region4: #{tpu_custom_call.1} parent=1 // loop_header_branch
      %25 = sbr.rel (%p23) target = $region8
    $region5: #{tpu_custom_call.1} parent=1 // loop_body
      %s27 = ssub.s32 %s22, 1
      %s28 = ssub.s32 %s22, 2
      %s29 = sadd.s32 %s22, 1
      %s30 = ssub.s32 %s22, %s29
      %p31 = scmp.eq.s32.totalorder %s30, 0
      %s33 = sadd.s32 %s32, 1
      %s34 = scalar_select %p31, %s32, %s33
      %p37 = pneg %p31
      %p38 = scmp.eq.s32.totalorder %s22, 1
      %p39 = por %p37, %p38
      %p40 = scmp.ne.s32.totalorder %s32, %s35
      %p41 = scmp.eq.s32.totalorder %s22, 0
      %p42 = por %p40, %p41
      %p43 = scmp.ne.s32.totalorder %s32, %s35
      %p44 = scmp.eq.s32.totalorder %s27, 1
      %p45 = por %p43, %p44
      %p46 = scmp.ne.s32.totalorder %s35, %s36
      %p47 = scmp.eq.s32.totalorder %s27, 0
      %p48 = por %p46, %p47
      %p49 = scmp.ne.s32.totalorder %s35, %s36
      %p50 = scmp.eq.s32.totalorder %s28, 1
      %p51 = por %p49, %p50
      %p53 = scmp.ne.s32.totalorder %s36, %s52
      %p54 = scmp.eq.s32.totalorder %s28, 0
      %p55 = por %p53, %p54
      %s57 = sadd.s32 %s56, 1
      %p60 = scmp.eq.s32.totalorder %s22, 1
      %p61 = scmp.ne.s32.totalorder %s56, %s58
      %p62 = scmp.eq.s32.totalorder %s22, 0
      %p63 = por %p61, %p62
      %p64 = scmp.ne.s32.totalorder %s56, %s58
      %p65 = scmp.eq.s32.totalorder %s27, 1
      %p66 = por %p64, %p65
      %p67 = scmp.ne.s32.totalorder %s58, %s59
      %p68 = scmp.eq.s32.totalorder %s27, 0
      %p69 = por %p67, %p68
      %p70 = scmp.ne.s32.totalorder %s58, %s59
      %p71 = scmp.eq.s32.totalorder %s28, 1
      %p72 = por %p70, %p71
      %p74 = scmp.ne.s32.totalorder %s59, %s73
      %p75 = scmp.eq.s32.totalorder %s28, 0
      %p76 = por %p74, %p75
      %s78 = sadd.s32 %s77, 1
      %p81 = scmp.eq.s32.totalorder %s22, 1
      %p82 = scmp.ne.s32.totalorder %s77, %s79
      %p83 = scmp.eq.s32.totalorder %s22, 0
      %p84 = por %p82, %p83
      %p85 = scmp.ne.s32.totalorder %s77, %s79
      %p86 = scmp.eq.s32.totalorder %s27, 1
      %p87 = por %p85, %p86
      %p88 = scmp.ne.s32.totalorder %s79, %s80
      %p89 = scmp.eq.s32.totalorder %s27, 0
      %p90 = por %p88, %p89
      %p91 = scmp.ne.s32.totalorder %s79, %s80
      %p92 = scmp.eq.s32.totalorder %s28, 1
      %p93 = por %p91, %p92
      %p95 = scmp.ne.s32.totalorder %s80, %s94
      %p96 = scmp.eq.s32.totalorder %s28, 0
      %p97 = por %p95, %p96
      %s99 = sadd.s32 %s98, 1
      %p102 = scmp.eq.s32.totalorder %s22, 1
      %p103 = scmp.ne.s32.totalorder %s98, %s100
      %p104 = scmp.eq.s32.totalorder %s22, 0
      %p105 = por %p103, %p104
      %p106 = scmp.ne.s32.totalorder %s98, %s100
      %p107 = scmp.eq.s32.totalorder %s27, 1
      %p108 = por %p106, %p107
      %p109 = scmp.ne.s32.totalorder %s100, %s101
      %p110 = scmp.eq.s32.totalorder %s27, 0
      %p111 = por %p109, %p110
      %p112 = scmp.ne.s32.totalorder %s100, %s101
      %p113 = scmp.eq.s32.totalorder %s28, 1
      %p114 = por %p112, %p113
      %p116 = scmp.ne.s32.totalorder %s101, %s115
      %p117 = scmp.eq.s32.totalorder %s28, 0
      %p118 = por %p116, %p117
      %s120 = sadd.s32 %s119, 1
      %p123 = scmp.eq.s32.totalorder %s22, 1
      %p124 = scmp.ne.s32.totalorder %s119, %s121
      %p125 = scmp.eq.s32.totalorder %s22, 0
      %p126 = por %p124, %p125
      %p127 = scmp.ne.s32.totalorder %s119, %s121
      %p128 = scmp.eq.s32.totalorder %s27, 1
      %p129 = por %p127, %p128
      %p130 = scmp.ne.s32.totalorder %s121, %s122
      %p131 = scmp.eq.s32.totalorder %s27, 0
      %p132 = por %p130, %p131
      %p133 = scmp.ne.s32.totalorder %s121, %s122
      %p134 = scmp.eq.s32.totalorder %s28, 1
      %p135 = por %p133, %p134
      %p137 = scmp.ne.s32.totalorder %s122, %s136
      %p138 = scmp.eq.s32.totalorder %s28, 0
      %p139 = por %p137, %p138
      %s141 = sadd.s32 %s140, 1
      %p144 = scmp.eq.s32.totalorder %s22, 1
      %p145 = scmp.ne.s32.totalorder %s140, %s142
      %p146 = scmp.eq.s32.totalorder %s22, 0
      %p147 = por %p145, %p146
      %p148 = scmp.ne.s32.totalorder %s140, %s142
      %p149 = scmp.eq.s32.totalorder %s27, 1
      %p150 = por %p148, %p149
      %p151 = scmp.ne.s32.totalorder %s142, %s143
      %p152 = scmp.eq.s32.totalorder %s27, 0
      %p153 = por %p151, %p152
      %p154 = scmp.ne.s32.totalorder %s142, %s143
      %p155 = scmp.eq.s32.totalorder %s28, 1
      %p156 = por %p154, %p155
      %p158 = scmp.ne.s32.totalorder %s143, %s157
      %p159 = scmp.eq.s32.totalorder %s28, 0
      %p160 = por %p158, %p159
      %s162 = sadd.s32 %s161, 1
      %p165 = scmp.eq.s32.totalorder %s22, 1
      %p166 = scmp.ne.s32.totalorder %s161, %s163
      %p167 = scmp.eq.s32.totalorder %s22, 0
      %p168 = por %p166, %p167
      %p169 = scmp.ne.s32.totalorder %s161, %s163
      %p170 = scmp.eq.s32.totalorder %s27, 1
      %p171 = por %p169, %p170
      %p172 = scmp.ne.s32.totalorder %s163, %s164
      %p173 = scmp.eq.s32.totalorder %s27, 0
      %p174 = por %p172, %p173
      %p175 = scmp.ne.s32.totalorder %s163, %s164
      %p176 = scmp.eq.s32.totalorder %s28, 1
      %p177 = por %p175, %p176
      %p179 = scmp.ne.s32.totalorder %s164, %s178
      %p180 = scmp.eq.s32.totalorder %s28, 0
      %p181 = por %p179, %p180
      %s183 = sadd.s32 %s182, 1
      %p186 = scmp.eq.s32.totalorder %s22, 1
      %p187 = scmp.ne.s32.totalorder %s182, %s184
      %p188 = scmp.eq.s32.totalorder %s22, 0
      %p189 = por %p187, %p188
      %p190 = scmp.ne.s32.totalorder %s182, %s184
      %p191 = scmp.eq.s32.totalorder %s27, 1
      %p192 = por %p190, %p191
      %p193 = scmp.ne.s32.totalorder %s184, %s185
      %p194 = scmp.eq.s32.totalorder %s27, 0
      %p195 = por %p193, %p194
      %p196 = scmp.ne.s32.totalorder %s184, %s185
      %p197 = scmp.eq.s32.totalorder %s28, 1
      %p198 = por %p196, %p197
      %p200 = scmp.ne.s32.totalorder %s185, %s199
      %p201 = scmp.eq.s32.totalorder %s28, 0
      %p202 = por %p200, %p201
      %s204 = sadd.s32 %s203, 1
      %p207 = scmp.eq.s32.totalorder %s22, 1
      %p208 = scmp.ne.s32.totalorder %s203, %s205
      %p209 = scmp.eq.s32.totalorder %s22, 0
      %p210 = por %p208, %p209
      %p211 = scmp.ne.s32.totalorder %s203, %s205
      %p212 = scmp.eq.s32.totalorder %s27, 1
      %p213 = por %p211, %p212
      %p214 = scmp.ne.s32.totalorder %s205, %s206
      %p215 = scmp.eq.s32.totalorder %s27, 0
      %p216 = por %p214, %p215
      %p217 = scmp.ne.s32.totalorder %s205, %s206
      %p218 = scmp.eq.s32.totalorder %s28, 1
      %p219 = por %p217, %p218
      %p221 = scmp.ne.s32.totalorder %s206, %s220
      %p222 = scmp.eq.s32.totalorder %s28, 0
      %p223 = por %p221, %p222
      %s225 = sadd.s32 %s224, 1
      %p228 = scmp.eq.s32.totalorder %s22, 1
      %p229 = scmp.ne.s32.totalorder %s224, %s226
      %p230 = scmp.eq.s32.totalorder %s22, 0
      %p231 = por %p229, %p230
      %p232 = scmp.ne.s32.totalorder %s224, %s226
      %p233 = scmp.eq.s32.totalorder %s27, 1
      %p234 = por %p232, %p233
      %p235 = scmp.ne.s32.totalorder %s226, %s227
      %p236 = scmp.eq.s32.totalorder %s27, 0
      %p237 = por %p235, %p236
      %p238 = scmp.ne.s32.totalorder %s226, %s227
      %p239 = scmp.eq.s32.totalorder %s28, 1
      %p240 = por %p238, %p239
      %p242 = scmp.ne.s32.totalorder %s227, %s241
      %p243 = scmp.eq.s32.totalorder %s28, 0
      %p244 = por %p242, %p243
      %s246 = sadd.s32 %s245, 1
      %p249 = scmp.eq.s32.totalorder %s22, 1
      %p250 = scmp.ne.s32.totalorder %s245, %s247
      %p251 = scmp.eq.s32.totalorder %s22, 0
      %p252 = por %p250, %p251
      %p253 = scmp.ne.s32.totalorder %s245, %s247
      %p254 = scmp.eq.s32.totalorder %s27, 1
      %p255 = por %p253, %p254
      %p256 = scmp.ne.s32.totalorder %s247, %s248
      %p257 = scmp.eq.s32.totalorder %s27, 0
      %p258 = por %p256, %p257
      %p259 = scmp.ne.s32.totalorder %s247, %s248
      %p260 = scmp.eq.s32.totalorder %s28, 1
      %p261 = por %p259, %p260
      %p263 = scmp.ne.s32.totalorder %s248, %s262
      %p264 = scmp.eq.s32.totalorder %s28, 0
      %p265 = por %p263, %p264
      %s267 = sadd.s32 %s266, 1
      %p270 = scmp.eq.s32.totalorder %s22, 1
      %p271 = scmp.ne.s32.totalorder %s266, %s268
      %p272 = scmp.eq.s32.totalorder %s22, 0
      %p273 = por %p271, %p272
      %p274 = scmp.ne.s32.totalorder %s266, %s268
      %p275 = scmp.eq.s32.totalorder %s27, 1
      %p276 = por %p274, %p275
      %p277 = scmp.ne.s32.totalorder %s268, %s269
      %p278 = scmp.eq.s32.totalorder %s27, 0
      %p279 = por %p277, %p278
      %p280 = scmp.ne.s32.totalorder %s268, %s269
      %p281 = scmp.eq.s32.totalorder %s28, 1
      %p282 = por %p280, %p281
      %p284 = scmp.ne.s32.totalorder %s269, %s283
      %p285 = scmp.eq.s32.totalorder %s28, 0
      %p286 = por %p284, %p285
      %s287 = ssub.s32 %s22, %s29
      %p288 = scmp.eq.s32.totalorder %s287, 0
      %s290 = sadd.s32 %s289, 1
      %s291 = scalar_select %p288, %s289, %s290
      %p294 = pneg %p288
      %p295 = scmp.eq.s32.totalorder %s22, 1
      %p296 = por %p294, %p295
      %p297 = scmp.ne.s32.totalorder %s289, %s292
      %p298 = scmp.eq.s32.totalorder %s22, 0
      %p299 = por %p297, %p298
      %p300 = scmp.ne.s32.totalorder %s289, %s292
      %p301 = scmp.eq.s32.totalorder %s27, 1
      %p302 = por %p300, %p301
      %p303 = scmp.ne.s32.totalorder %s292, %s293
      %p304 = scmp.eq.s32.totalorder %s27, 0
      %p305 = por %p303, %p304
      %p306 = scmp.ne.s32.totalorder %s292, %s293
      %p307 = scmp.eq.s32.totalorder %s28, 1
      %p308 = por %p306, %p307
      %p310 = scmp.ne.s32.totalorder %s293, %s309
      %p311 = scmp.eq.s32.totalorder %s28, 0
      %p312 = por %p310, %p311
      %p313 = scmp.le.s32.totalorder 1, %s22
      %p314 = scmp.lt.s32.totalorder %s22, 3
      %p315 = pnand %p313, %p314
      %p316 = pneg %p315
      // Predicated region
      $region9: #{tpu_custom_call.1} parent=5 // pred_check
        _
      $region10: #{tpu_custom_call.1} parent=5 // pred_check_branch
        %318 = sbr.rel (%p315) target = $region12
      $region11: #{tpu_custom_call.1} parent=5 // pred_region
        %s319 = ssub.s32 %s22, 1
        // Predicated region
        $region13: #{tpu_custom_call.1} parent=11 // pred_check
          %p320 = pneg %p69
        $region14: #{tpu_custom_call.1} parent=11 // pred_check_branch
          %322 = sbr.rel (%p320) target = $region16
        $region15: #{tpu_custom_call.1} parent=11 // pred_region
          _
        $region16: #{tpu_custom_call.1} parent=11 // pred_fallthru
          _
        // Predicated region
        $region17: #{tpu_custom_call.1} parent=11 // pred_check
          %p323 = pneg %p90
        $region18: #{tpu_custom_call.1} parent=11 // pred_check_branch
          %325 = sbr.rel (%p323) target = $region20
        $region19: #{tpu_custom_call.1} parent=11 // pred_region
          _
        $region20: #{tpu_custom_call.1} parent=11 // pred_fallthru
          _
        // Predicated region
        $region21: #{tpu_custom_call.1} parent=11 // pred_check
          %p326 = pneg %p111
        $region22: #{tpu_custom_call.1} parent=11 // pred_check_branch
          %328 = sbr.rel (%p326) target = $region24
        $region23: #{tpu_custom_call.1} parent=11 // pred_region
          _
        $region24: #{tpu_custom_call.1} parent=11 // pred_fallthru
          _
        // Predicated region
        $region25: #{tpu_custom_call.1} parent=11 // pred_check
          %p329 = pneg %p132
        $region26: #{tpu_custom_call.1} parent=11 // pred_check_branch
          %331 = sbr.rel (%p329) target = $region28
        $region27: #{tpu_custom_call.1} parent=11 // pred_region
          _
        $region28: #{tpu_custom_call.1} parent=11 // pred_fallthru
          _
        // Predicated region
        $region29: #{tpu_custom_call.1} parent=11 // pred_check
          %p332 = pneg %p153
        $region30: #{tpu_custom_call.1} parent=11 // pred_check_branch
          %334 = sbr.rel (%p332) target = $region32
        $region31: #{tpu_custom_call.1} parent=11 // pred_region
          _
        $region32: #{tpu_custom_call.1} parent=11 // pred_fallthru
          _
        // Predicated region
        $region33: #{tpu_custom_call.1} parent=11 // pred_check
          %p335 = pneg %p174
        $region34: #{tpu_custom_call.1} parent=11 // pred_check_branch
          %337 = sbr.rel (%p335) target = $region36
        $region35: #{tpu_custom_call.1} parent=11 // pred_region
          _
        $region36: #{tpu_custom_call.1} parent=11 // pred_fallthru
          _
        // Predicated region
        $region37: #{tpu_custom_call.1} parent=11 // pred_check
          %p338 = pneg %p195
        $region38: #{tpu_custom_call.1} parent=11 // pred_check_branch
          %340 = sbr.rel (%p338) target = $region40
        $region39: #{tpu_custom_call.1} parent=11 // pred_region
          _
        $region40: #{tpu_custom_call.1} parent=11 // pred_fallthru
          _
        // Predicated region
        $region41: #{tpu_custom_call.1} parent=11 // pred_check
          %p341 = pneg %p216
        $region42: #{tpu_custom_call.1} parent=11 // pred_check_branch
          %343 = sbr.rel (%p341) target = $region44
        $region43: #{tpu_custom_call.1} parent=11 // pred_region
          _
        $region44: #{tpu_custom_call.1} parent=11 // pred_fallthru
          _
        // Predicated region
        $region45: #{tpu_custom_call.1} parent=11 // pred_check
          %p344 = pneg %p237
        $region46: #{tpu_custom_call.1} parent=11 // pred_check_branch
          %346 = sbr.rel (%p344) target = $region48
        $region47: #{tpu_custom_call.1} parent=11 // pred_region
          _
        $region48: #{tpu_custom_call.1} parent=11 // pred_fallthru
          _
        // Predicated region
        $region49: #{tpu_custom_call.1} parent=11 // pred_check
          %p347 = pneg %p258
        $region50: #{tpu_custom_call.1} parent=11 // pred_check_branch
          %349 = sbr.rel (%p347) target = $region52
        $region51: #{tpu_custom_call.1} parent=11 // pred_region
          _
        $region52: #{tpu_custom_call.1} parent=11 // pred_fallthru
          _
        // Predicated region
        $region53: #{tpu_custom_call.1} parent=11 // pred_check
          %p350 = pneg %p279
        $region54: #{tpu_custom_call.1} parent=11 // pred_check_branch
          %352 = sbr.rel (%p350) target = $region56
        $region55: #{tpu_custom_call.1} parent=11 // pred_region
          %354 = vsyncadd [#allocation3], 0
          %s355 = sshll.u32 %s11, 4
          %s356 = int_to_ptr.hbm [resolvable:$true] %s355
          %s357 = sshll.u32 [#allocation2], 4
          %s358 = int_to_ptr.vmem [resolvable:$true] %s357
          %363 = dma.hbm_to_vmem [thread:$0]  %s356, 16384, %s358, [#allocation3], 256, 256, 16
        $region56: #{tpu_custom_call.1} parent=11 // pred_fallthru
          _
      $region12: #{tpu_custom_call.1} parent=5 // pred_fallthru
        _
      %p364 = scmp.lt.s32.totalorder %s22, 2
      // Predicated region
      $region57: #{tpu_custom_call.1} parent=5 // pred_check
        %p365 = pneg %p364
      $region58: #{tpu_custom_call.1} parent=5 // pred_check_branch
        %367 = sbr.rel (%p365) target = $region60
      $region59: #{tpu_custom_call.1} parent=5 // pred_region
        // Predicated region
        $region61: #{tpu_custom_call.1} parent=59 // pred_check
          %p368 = pneg %p42
        $region62: #{tpu_custom_call.1} parent=59 // pred_check_branch
          %370 = sbr.rel (%p368) target = $region64
        $region63: #{tpu_custom_call.1} parent=59 // pred_region
          %s371 = smul.u32 32, %s22
          %p372 = scmp.lt.s32.totalorder %s371, 63
          %s373 = scalar_select %p372, %s371, 63
          %s374 = smul.addr %s373, 8
          %s375 = scalar_lea.vmem %s0, %s374
          %s376 = smul.u32 32, %s22
        $region64: #{tpu_custom_call.1} parent=59 // pred_fallthru
          _
      $region60: #{tpu_custom_call.1} parent=5 // pred_fallthru
        _
      %p377 = scmp.le.s32.totalorder 1, %s22
      %p378 = scmp.lt.s32.totalorder %s22, 3
      %p379 = pnand %p377, %p378
      %p380 = pneg %p379
      // Predicated region
      $region65: #{tpu_custom_call.1} parent=5 // pred_check
        _
      $region66: #{tpu_custom_call.1} parent=5 // pred_check_branch
        %382 = sbr.rel (%p379) target = $region68
      $region67: #{tpu_custom_call.1} parent=5 // pred_region
        %s383 = ssub.s32 %s22, 1
        // Predicated region
        $region69: #{tpu_custom_call.1} parent=67 // pred_check
          %p384 = pneg %p279
        $region70: #{tpu_custom_call.1} parent=67 // pred_check_branch
          %386 = sbr.rel (%p384) target = $region72
        $region71: #{tpu_custom_call.1} parent=67 // pred_region
          %388 = dma.done [#allocation3], 16384
        $region72: #{tpu_custom_call.1} parent=67 // pred_fallthru
          _
        %s389 = smul.u32 32, %s27
        %p390 = scmp.lt.s32.totalorder %s389, 63
        %s391 = scalar_select %p390, %s389, 63
        %s392 = smul.addr %s391, 8
        %s393 = scalar_lea.vmem %s0, %s392
        %p394 = pneg %p48
        %p395 = pneg %p45
        %p396 = pneg %p69
        %p397 = pneg %p66
        %p398 = pneg %p90
        %p399 = pneg %p87
        %p400 = pneg %p111
        %p401 = pneg %p108
        %p402 = pneg %p132
        %p403 = pneg %p129
        %p404 = pneg %p153
        %p405 = pneg %p150
        %p406 = pneg %p174
        %p407 = pneg %p171
        %p408 = pneg %p195
        %p409 = pneg %p192
        %p410 = pneg %p216
        %p411 = pneg %p213
        %p412 = pneg %p237
        %p413 = pneg %p234
        %p414 = pneg %p258
        %p415 = pneg %p255
        %p416 = pneg %p279
        %p417 = pneg %p276
        %p418 = pneg %p305
        %p419 = pneg %p302
        %s420 = sand.u32 %s292, 1
        %s421 = scalar_lea.sflag [#allocation4], %s420
        %s422 = sand.u32 %s292, 1
        %s423 = smul.addr %s422, 32
        %s424 = scalar_lea.vmem [#allocation5], %s423
        %s425 = smul.u32 32, %s27
        %p426 = scmp.lt.s32.totalorder %s425, 63
        %s427 = scalar_select %p426, %s425, 63
        %s428 = smul.addr %s427, 8
        %s429 = scalar_lea.vmem %s0, %s428
        %s430 = smul.u32 32, %s27
        %s431 = smul.u32 4, %s27
        %v432 = vld [vmem:[%s429] sm:$0xff]
        %v433 = vld [vmem:[%s429 + $0x8] sm:$0xff]
        %v434 = vld [vmem:[%s429 + $0x10] sm:$0xff]
        %v435 = vld [vmem:[%s429 + $0x18] sm:$0xff]
        %v436 = vld [vmem:[%s429 + $0x20] sm:$0xff]
        %v437 = vld [vmem:[%s429 + $0x28] sm:$0xff]
        %v438 = vld [vmem:[%s429 + $0x30] sm:$0xff]
        %v439 = vld [vmem:[%s429 + $0x38] sm:$0xff]
        %v440 = vld [vmem:[%s429 + $0x40] sm:$0xff]
        %v441 = vld [vmem:[%s429 + $0x48] sm:$0xff]
        %v442 = vld [vmem:[%s429 + $0x50] sm:$0xff]
        %v443 = vld [vmem:[%s429 + $0x58] sm:$0xff]
        %v444 = vld [vmem:[%s429 + $0x60] sm:$0xff]
        %v445 = vld [vmem:[%s429 + $0x68] sm:$0xff]
        %v446 = vld [vmem:[%s429 + $0x70] sm:$0xff]
        %v447 = vld [vmem:[%s429 + $0x78] sm:$0xff]
        %v448 = vld [vmem:[%s429 + $0x80] sm:$0xff]
        %v449 = vld [vmem:[%s429 + $0x88] sm:$0xff]
        %v450 = vld [vmem:[%s429 + $0x90] sm:$0xff]
        %v451 = vld [vmem:[%s429 + $0x98] sm:$0xff]
        %v452 = vld [vmem:[%s429 + $0xa0] sm:$0xff]
        %v453 = vld [vmem:[%s429 + $0xa8] sm:$0xff]
        %v454 = vld [vmem:[%s429 + $0xb0] sm:$0xff]
        %v455 = vld [vmem:[%s429 + $0xb8] sm:$0xff]
        %v456 = vld [vmem:[%s429 + $0xc0] sm:$0xff]
        %v457 = vld [vmem:[%s429 + $0xc8] sm:$0xff]
        %v458 = vld [vmem:[%s429 + $0xd0] sm:$0xff]
        %v459 = vld [vmem:[%s429 + $0xd8] sm:$0xff]
        %v460 = vld [vmem:[%s429 + $0xe0] sm:$0xff]
        %v461 = vld [vmem:[%s429 + $0xe8] sm:$0xff]
        %v462 = vld [vmem:[%s429 + $0xf0] sm:$0xff]
        %v463 = vld [vmem:[%s429 + $0xf8] sm:$0xff]
        %v464 = vld [vmem:[%s1] sm:$0xff]
        %v465 = vld [vmem:[%s1 + $0x8] sm:$0xff]
        %v466 = vld [vmem:[%s2] sm:$0x1]
        %v468 = vperm.slane %v466, 0
        %vm470 = vcmask 130048
        %v472 = vsel %vm470, %v432, 0
        %v475 = vsel %vm470, %v433, 0
        %v478 = vsel %vm470, %v434, 0
        %v481 = vsel %vm470, %v435, 0
        %v484 = vsel %vm470, %v436, 0
        %v487 = vsel %vm470, %v437, 0
        %v490 = vsel %vm470, %v438, 0
        %v493 = vsel %vm470, %v439, 0
        %v496 = vsel %vm470, %v440, 0
        %v499 = vsel %vm470, %v441, 0
        %v502 = vsel %vm470, %v442, 0
        %v505 = vsel %vm470, %v443, 0
        %v508 = vsel %vm470, %v444, 0
        %v511 = vsel %vm470, %v445, 0
        %v514 = vsel %vm470, %v446, 0
        %v517 = vsel %vm470, %v447, 0
        %v520 = vsel %vm470, %v448, 0
        %v523 = vsel %vm470, %v449, 0
        %v526 = vsel %vm470, %v450, 0
        %v529 = vsel %vm470, %v451, 0
        %v532 = vsel %vm470, %v452, 0
        %v535 = vsel %vm470, %v453, 0
        %v538 = vsel %vm470, %v454, 0
        %v541 = vsel %vm470, %v455, 0
        %v544 = vsel %vm470, %v456, 0
        %v547 = vsel %vm470, %v457, 0
        %v550 = vsel %vm470, %v458, 0
        %v553 = vsel %vm470, %v459, 0
        %v556 = vsel %vm470, %v460, 0
        %v559 = vsel %vm470, %v461, 0
        %v562 = vsel %vm470, %v462, 0
        %v565 = vsel %vm470, %v463, 0
        %567 = vmatpush.msra.mxu0 0.0
        %568 = vmatpush.msra.mxu0 0.0
        %569 = vmatpush.msra.mxu0 0.0
        %570 = vmatpush.msra.mxu0 0.0
        %571 = vmatpush.msra.mxu0 0.0
        %572 = vmatpush.msra.mxu0 0.0
        %573 = vmatpush.msra.mxu0 0.0
        %574 = vmatpush.msra.mxu0 0.0
        %575 = vmatpush.msra.mxu0 0.0
        %576 = vmatpush.msra.mxu0 0.0
        %577 = vmatpush.msra.mxu0 0.0
        %578 = vmatpush.msra.mxu0 0.0
        %579 = vmatpush.msra.mxu0 0.0
        %580 = vmatpush.msra.mxu0 0.0
        %581 = vmatpush.msra.mxu0 %v465
        %582 = vmatpush.msra.mxu0 %v464
        %583 = vmatmul.f32.gmra.mxu0 %v472
        %v584 = vpop.f32.mrf.mxu0
        %v585 = vadd.f32 %v468, %v584
        %586 = vmatmul.f32.gmra.mxu0 %v475
        %v587 = vpop.f32.mrf.mxu0
        %v588 = vadd.f32 %v468, %v587
        %589 = vmatmul.f32.gmra.mxu0 %v478
        %v590 = vpop.f32.mrf.mxu0
        %v591 = vadd.f32 %v468, %v590
        %592 = vmatmul.f32.gmra.mxu0 %v481
        %v593 = vpop.f32.mrf.mxu0
        %v594 = vadd.f32 %v468, %v593
        %595 = vmatmul.f32.gmra.mxu0 %v484
        %v596 = vpop.f32.mrf.mxu0
        %v597 = vadd.f32 %v468, %v596
        %598 = vmatmul.f32.gmra.mxu0 %v487
        %v599 = vpop.f32.mrf.mxu0
        %v600 = vadd.f32 %v468, %v599
        %601 = vmatmul.f32.gmra.mxu0 %v490
        %v602 = vpop.f32.mrf.mxu0
        %v603 = vadd.f32 %v468, %v602
        %604 = vmatmul.f32.gmra.mxu0 %v493
        %v605 = vpop.f32.mrf.mxu0
        %v606 = vadd.f32 %v468, %v605
        %607 = vmatmul.f32.gmra.mxu0 %v496
        %v608 = vpop.f32.mrf.mxu0
        %v609 = vadd.f32 %v468, %v608
        %610 = vmatmul.f32.gmra.mxu0 %v499
        %v611 = vpop.f32.mrf.mxu0
        %v612 = vadd.f32 %v468, %v611
        %613 = vmatmul.f32.gmra.mxu0 %v502
        %v614 = vpop.f32.mrf.mxu0
        %v615 = vadd.f32 %v468, %v614
        %616 = vmatmul.f32.gmra.mxu0 %v505
        %v617 = vpop.f32.mrf.mxu0
        %v618 = vadd.f32 %v468, %v617
        %619 = vmatmul.f32.gmra.mxu0 %v508
        %v620 = vpop.f32.mrf.mxu0
        %v621 = vadd.f32 %v468, %v620
        %622 = vmatmul.f32.gmra.mxu0 %v511
        %v623 = vpop.f32.mrf.mxu0
        %v624 = vadd.f32 %v468, %v623
        %625 = vmatmul.f32.gmra.mxu0 %v514
        %v626 = vpop.f32.mrf.mxu0
        %v627 = vadd.f32 %v468, %v626
        %628 = vmatmul.f32.gmra.mxu0 %v517
        %v629 = vpop.f32.mrf.mxu0
        %v630 = vadd.f32 %v468, %v629
        %631 = vmatmul.f32.gmra.mxu0 %v520
        %v632 = vpop.f32.mrf.mxu0
        %v633 = vadd.f32 %v468, %v632
        %634 = vmatmul.f32.gmra.mxu0 %v523
        %v635 = vpop.f32.mrf.mxu0
        %v636 = vadd.f32 %v468, %v635
        %637 = vmatmul.f32.gmra.mxu0 %v526
        %v638 = vpop.f32.mrf.mxu0
        %v639 = vadd.f32 %v468, %v638
        %640 = vmatmul.f32.gmra.mxu0 %v529
        %v641 = vpop.f32.mrf.mxu0
        %v642 = vadd.f32 %v468, %v641
        %643 = vmatmul.f32.gmra.mxu0 %v532
        %v644 = vpop.f32.mrf.mxu0
        %v645 = vadd.f32 %v468, %v644
        %646 = vmatmul.f32.gmra.mxu0 %v535
        %v647 = vpop.f32.mrf.mxu0
        %v648 = vadd.f32 %v468, %v647
        %649 = vmatmul.f32.gmra.mxu0 %v538
        %v650 = vpop.f32.mrf.mxu0
        %v651 = vadd.f32 %v468, %v650
        %652 = vmatmul.f32.gmra.mxu0 %v541
        %v653 = vpop.f32.mrf.mxu0
        %v654 = vadd.f32 %v468, %v653
        %655 = vmatmul.f32.gmra.mxu0 %v544
        %v656 = vpop.f32.mrf.mxu0
        %v657 = vadd.f32 %v468, %v656
        %658 = vmatmul.f32.gmra.mxu0 %v547
        %v659 = vpop.f32.mrf.mxu0
        %v660 = vadd.f32 %v468, %v659
        %661 = vmatmul.f32.gmra.mxu0 %v550
        %v662 = vpop.f32.mrf.mxu0
        %v663 = vadd.f32 %v468, %v662
        %664 = vmatmul.f32.gmra.mxu0 %v553
        %v665 = vpop.f32.mrf.mxu0
        %v666 = vadd.f32 %v468, %v665
        %667 = vmatmul.f32.gmra.mxu0 %v556
        %v668 = vpop.f32.mrf.mxu0
        %v669 = vadd.f32 %v468, %v668
        %670 = vmatmul.f32.gmra.mxu0 %v559
        %v671 = vpop.f32.mrf.mxu0
        %v672 = vadd.f32 %v468, %v671
        %673 = vmatmul.f32.gmra.mxu0 %v562
        %v674 = vpop.f32.mrf.mxu0
        %v675 = vadd.f32 %v468, %v674
        %676 = vmatmul.f32.gmra.mxu0 %v565
        %v677 = vpop.f32.mrf.mxu0
        %v678 = vadd.f32 %v468, %v677
        %679 = vdwg.mxu0
        %681 = vrot.lane.b32.xlu0 %v585, 96
        %v682 = vpop.permute.xlu0 %681
        %685 = vrot.lane.b32.xlu0 %v588, 112
        %v686 = vpop.permute.xlu0 %685
        %689 = vrot.lane.b32.xlu0 %v594, 16
        %v690 = vpop.permute.xlu0 %689
        %693 = vrot.lane.b32.xlu0 %v597, 32
        %v694 = vpop.permute.xlu0 %693
        %697 = vrot.lane.b32.xlu0 %v600, 48
        %v698 = vpop.permute.xlu0 %697
        %701 = vrot.lane.b32.xlu0 %v603, 64
        %v702 = vpop.permute.xlu0 %701
        %705 = vrot.lane.b32.xlu0 %v606, 80
        %v706 = vpop.permute.xlu0 %705
        %709 = vrot.lane.b32.xlu0 %v609, 96
        %v710 = vpop.permute.xlu0 %709
        %713 = vrot.lane.b32.xlu0 %v612, 112
        %v714 = vpop.permute.xlu0 %713
        %717 = vrot.lane.b32.xlu0 %v618, 16
        %v718 = vpop.permute.xlu0 %717
        %721 = vrot.lane.b32.xlu0 %v621, 32
        %v722 = vpop.permute.xlu0 %721
        %725 = vrot.lane.b32.xlu0 %v624, 48
        %v726 = vpop.permute.xlu0 %725
        %729 = vrot.lane.b32.xlu0 %v627, 64
        %v730 = vpop.permute.xlu0 %729
        %733 = vrot.lane.b32.xlu0 %v630, 80
        %v734 = vpop.permute.xlu0 %733
        %v736 = vsel %vm470, %v682, %v686
        %vm737 = vcmask 261120
        %v738 = vsel %vm737, %v736, %v591
        %vm739 = vcmask 392192
        %v740 = vsel %vm739, %v738, %v690
        %vm741 = vcmask 523264
        %v742 = vsel %vm741, %v740, %v694
        %vm743 = vcmask 654336
        %v744 = vsel %vm743, %v742, %v698
        %vm745 = vcmask 785408
        %v746 = vsel %vm745, %v744, %v702
        %vm747 = vcmask 916480
        %v748 = vsel %vm747, %v746, %v706
        %v749 = vsel %vm470, %v710, %v714
        %v750 = vsel %vm737, %v749, %v615
        %v751 = vsel %vm739, %v750, %v718
        %v752 = vsel %vm741, %v751, %v722
        %v753 = vsel %vm743, %v752, %v726
        %v754 = vsel %vm745, %v753, %v730
        %v755 = vsel %vm747, %v754, %v734
        %757 = vrot.lane.b32.xlu0 %v633, 96
        %v758 = vpop.permute.xlu0 %757
        %761 = vrot.lane.b32.xlu0 %v636, 112
        %v762 = vpop.permute.xlu0 %761
        %765 = vrot.lane.b32.xlu0 %v642, 16
        %v766 = vpop.permute.xlu0 %765
        %769 = vrot.lane.b32.xlu0 %v645, 32
        %v770 = vpop.permute.xlu0 %769
        %773 = vrot.lane.b32.xlu0 %v648, 48
        %v774 = vpop.permute.xlu0 %773
        %777 = vrot.lane.b32.xlu0 %v651, 64
        %v778 = vpop.permute.xlu0 %777
        %781 = vrot.lane.b32.xlu0 %v654, 80
        %v782 = vpop.permute.xlu0 %781
        %785 = vrot.lane.b32.xlu0 %v657, 96
        %v786 = vpop.permute.xlu0 %785
        %789 = vrot.lane.b32.xlu0 %v660, 112
        %v790 = vpop.permute.xlu0 %789
        %793 = vrot.lane.b32.xlu0 %v666, 16
        %v794 = vpop.permute.xlu0 %793
        %797 = vrot.lane.b32.xlu0 %v669, 32
        %v798 = vpop.permute.xlu0 %797
        %801 = vrot.lane.b32.xlu0 %v672, 48
        %v802 = vpop.permute.xlu0 %801
        %805 = vrot.lane.b32.xlu0 %v675, 64
        %v806 = vpop.permute.xlu0 %805
        %809 = vrot.lane.b32.xlu0 %v678, 80
        %v810 = vpop.permute.xlu0 %809
        %v812 = vsel %vm470, %v758, %v762
        %v813 = vsel %vm737, %v812, %v639
        %v814 = vsel %vm739, %v813, %v766
        %v815 = vsel %vm741, %v814, %v770
        %v816 = vsel %vm743, %v815, %v774
        %v817 = vsel %vm745, %v816, %v778
        %v818 = vsel %vm747, %v817, %v782
        %v819 = vsel %vm470, %v786, %v790
        %v820 = vsel %vm737, %v819, %v663
        %v821 = vsel %vm739, %v820, %v794
        %v822 = vsel %vm741, %v821, %v798
        %v823 = vsel %vm743, %v822, %v802
        %v824 = vsel %vm745, %v823, %v806
        %v825 = vsel %vm747, %v824, %v810
        %v826 = vlaneseq
        %v827 = vshrl.u32 %v826, 7
        %v828 = vrot.slane %v748, 4
        %v829 = vmin.f32 %v748, %v828
        %v830 = vrot.slane %v829, 2
        %v831 = vmin.f32 %v829, %v830
        %v832 = vrot.slane %v831, 1
        %v833 = vmin.f32 %v831, %v832
        %v834 = vrot.slane %v755, 4
        %v835 = vmin.f32 %v755, %v834
        %v836 = vrot.slane %v835, 2
        %v837 = vmin.f32 %v835, %v836
        %v838 = vrot.slane %v837, 1
        %v839 = vmin.f32 %v837, %v838
        %v840 = vrot.slane %v818, 4
        %v841 = vmin.f32 %v818, %v840
        %v842 = vrot.slane %v841, 2
        %v843 = vmin.f32 %v841, %v842
        %v844 = vrot.slane %v843, 1
        %v845 = vmin.f32 %v843, %v844
        %v846 = vrot.slane %v825, 4
        %v847 = vmin.f32 %v825, %v846
        %v848 = vrot.slane %v847, 2
        %v849 = vmin.f32 %v847, %v848
        %v850 = vrot.slane %v849, 1
        %v851 = vmin.f32 %v849, %v850
        %vm852 = vcmp.eq.f32.partialorder %v748, %v833
        %vm853 = vcmp.eq.f32.partialorder %v755, %v839
        %vm854 = vcmp.eq.f32.partialorder %v818, %v845
        %vm855 = vcmp.eq.f32.partialorder %v825, %v851
        %v856 = vsel %vm852, %v827, 8
        %v857 = vsel %vm853, %v827, 8
        %v858 = vsel %vm854, %v827, 8
        %v859 = vsel %vm855, %v827, 8
        %v860 = vrot.slane %v856, 4
        %vm861 = vcmp.lt.s32.totalorder %v856, %v860
        %v862 = vsel %vm861, %v856, %v860
        %v863 = vrot.slane %v862, 2
        %vm864 = vcmp.lt.s32.totalorder %v862, %v863
        %v865 = vsel %vm864, %v862, %v863
        %v866 = vrot.slane %v865, 1
        %vm867 = vcmp.lt.s32.totalorder %v865, %v866
        %v868 = vsel %vm867, %v865, %v866
        %v869 = vrot.slane %v857, 4
        %vm870 = vcmp.lt.s32.totalorder %v857, %v869
        %v871 = vsel %vm870, %v857, %v869
        %v872 = vrot.slane %v871, 2
        %vm873 = vcmp.lt.s32.totalorder %v871, %v872
        %v874 = vsel %vm873, %v871, %v872
        %v875 = vrot.slane %v874, 1
        %vm876 = vcmp.lt.s32.totalorder %v874, %v875
        %v877 = vsel %vm876, %v874, %v875
        %v878 = vrot.slane %v858, 4
        %vm879 = vcmp.lt.s32.totalorder %v858, %v878
        %v880 = vsel %vm879, %v858, %v878
        %v881 = vrot.slane %v880, 2
        %vm882 = vcmp.lt.s32.totalorder %v880, %v881
        %v883 = vsel %vm882, %v880, %v881
        %v884 = vrot.slane %v883, 1
        %vm885 = vcmp.lt.s32.totalorder %v883, %v884
        %v886 = vsel %vm885, %v883, %v884
        %v887 = vrot.slane %v859, 4
        %vm888 = vcmp.lt.s32.totalorder %v859, %v887
        %v889 = vsel %vm888, %v859, %v887
        %v890 = vrot.slane %v889, 2
        %vm891 = vcmp.lt.s32.totalorder %v889, %v890
        %v892 = vsel %vm891, %v889, %v890
        %v893 = vrot.slane %v892, 1
        %vm894 = vcmp.lt.s32.totalorder %v892, %v893
        %v895 = vsel %vm894, %v892, %v893
        %vm896 = vcmp.eq.s32.totalorder %v827, %v868
        %vm897 = vcmp.eq.s32.totalorder %v827, %v877
        %vm898 = vcmp.eq.s32.totalorder %v827, %v886
        %vm899 = vcmp.eq.s32.totalorder %v827, %v895
        %v900 = vsel %vm896, 0.0, 1.0
        %v901 = vsel %vm897, 0.0, 1.0
        %v902 = vsel %vm898, 0.0, 1.0
        %v903 = vsel %vm899, 0.0, 1.0
        %v904 = vsel %vm896, inf, %v748
        %v905 = vsel %vm897, inf, %v755
        %v906 = vsel %vm898, inf, %v818
        %v907 = vsel %vm899, inf, %v825
        %v908 = vrot.slane %v904, 4
        %v909 = vmin.f32 %v904, %v908
        %v910 = vrot.slane %v909, 2
        %v911 = vmin.f32 %v909, %v910
        %v912 = vrot.slane %v911, 1
        %v913 = vmin.f32 %v911, %v912
        %v914 = vrot.slane %v905, 4
        %v915 = vmin.f32 %v905, %v914
        %v916 = vrot.slane %v915, 2
        %v917 = vmin.f32 %v915, %v916
        %v918 = vrot.slane %v917, 1
        %v919 = vmin.f32 %v917, %v918
        %v920 = vrot.slane %v906, 4
        %v921 = vmin.f32 %v906, %v920
        %v922 = vrot.slane %v921, 2
        %v923 = vmin.f32 %v921, %v922
        %v924 = vrot.slane %v923, 1
        %v925 = vmin.f32 %v923, %v924
        %v926 = vrot.slane %v907, 4
        %v927 = vmin.f32 %v907, %v926
        %v928 = vrot.slane %v927, 2
        %v929 = vmin.f32 %v927, %v928
        %v930 = vrot.slane %v929, 1
        %v931 = vmin.f32 %v929, %v930
        %vm932 = vcmp.eq.f32.partialorder %v904, %v913
        %vm933 = vcmp.eq.f32.partialorder %v905, %v919
        %vm934 = vcmp.eq.f32.partialorder %v906, %v925
        %vm935 = vcmp.eq.f32.partialorder %v907, %v931
        %v936 = vsel %vm932, %v827, 8
        %v937 = vsel %vm933, %v827, 8
        %v938 = vsel %vm934, %v827, 8
        %v939 = vsel %vm935, %v827, 8
        %v940 = vrot.slane %v936, 4
        %vm941 = vcmp.lt.s32.totalorder %v936, %v940
        %v942 = vsel %vm941, %v936, %v940
        %v943 = vrot.slane %v942, 2
        %vm944 = vcmp.lt.s32.totalorder %v942, %v943
        %v945 = vsel %vm944, %v942, %v943
        %v946 = vrot.slane %v945, 1
        %vm947 = vcmp.lt.s32.totalorder %v945, %v946
        %v948 = vsel %vm947, %v945, %v946
        %v949 = vrot.slane %v937, 4
        %vm950 = vcmp.lt.s32.totalorder %v937, %v949
        %v951 = vsel %vm950, %v937, %v949
        %v952 = vrot.slane %v951, 2
        %vm953 = vcmp.lt.s32.totalorder %v951, %v952
        %v954 = vsel %vm953, %v951, %v952
        %v955 = vrot.slane %v954, 1
        %vm956 = vcmp.lt.s32.totalorder %v954, %v955
        %v957 = vsel %vm956, %v954, %v955
        %v958 = vrot.slane %v938, 4
        %vm959 = vcmp.lt.s32.totalorder %v938, %v958
        %v960 = vsel %vm959, %v938, %v958
        %v961 = vrot.slane %v960, 2
        %vm962 = vcmp.lt.s32.totalorder %v960, %v961
        %v963 = vsel %vm962, %v960, %v961
        %v964 = vrot.slane %v963, 1
        %vm965 = vcmp.lt.s32.totalorder %v963, %v964
        %v966 = vsel %vm965, %v963, %v964
        %v967 = vrot.slane %v939, 4
        %vm968 = vcmp.lt.s32.totalorder %v939, %v967
        %v969 = vsel %vm968, %v939, %v967
        %v970 = vrot.slane %v969, 2
        %vm971 = vcmp.lt.s32.totalorder %v969, %v970
        %v972 = vsel %vm971, %v969, %v970
        %v973 = vrot.slane %v972, 1
        %vm974 = vcmp.lt.s32.totalorder %v972, %v973
        %v975 = vsel %vm974, %v972, %v973
        %vm976 = vcmp.eq.s32.totalorder %v827, %v948
        %vm977 = vcmp.eq.s32.totalorder %v827, %v957
        %vm978 = vcmp.eq.s32.totalorder %v827, %v966
        %vm979 = vcmp.eq.s32.totalorder %v827, %v975
        %v980 = vsel %vm976, 0.0, %v900
        %v981 = vsel %vm977, 0.0, %v901
        %v982 = vsel %vm978, 0.0, %v902
        %v983 = vsel %vm979, 0.0, %v903
        %v984 = vsel %vm976, inf, %v904
        %v985 = vsel %vm977, inf, %v905
        %v986 = vsel %vm978, inf, %v906
        %v987 = vsel %vm979, inf, %v907
        %v988 = vrot.slane %v984, 4
        %v989 = vmin.f32 %v984, %v988
        %v990 = vrot.slane %v989, 2
        %v991 = vmin.f32 %v989, %v990
        %v992 = vrot.slane %v991, 1
        %v993 = vmin.f32 %v991, %v992
        %v994 = vrot.slane %v985, 4
        %v995 = vmin.f32 %v985, %v994
        %v996 = vrot.slane %v995, 2
        %v997 = vmin.f32 %v995, %v996
        %v998 = vrot.slane %v997, 1
        %v999 = vmin.f32 %v997, %v998
        %v1000 = vrot.slane %v986, 4
        %v1001 = vmin.f32 %v986, %v1000
        %v1002 = vrot.slane %v1001, 2
        %v1003 = vmin.f32 %v1001, %v1002
        %v1004 = vrot.slane %v1003, 1
        %v1005 = vmin.f32 %v1003, %v1004
        %v1006 = vrot.slane %v987, 4
        %v1007 = vmin.f32 %v987, %v1006
        %v1008 = vrot.slane %v1007, 2
        %v1009 = vmin.f32 %v1007, %v1008
        %v1010 = vrot.slane %v1009, 1
        %v1011 = vmin.f32 %v1009, %v1010
        %vm1012 = vcmp.eq.f32.partialorder %v984, %v993
        %vm1013 = vcmp.eq.f32.partialorder %v985, %v999
        %vm1014 = vcmp.eq.f32.partialorder %v986, %v1005
        %vm1015 = vcmp.eq.f32.partialorder %v987, %v1011
        %v1016 = vsel %vm1012, %v827, 8
        %v1017 = vsel %vm1013, %v827, 8
        %v1018 = vsel %vm1014, %v827, 8
        %v1019 = vsel %vm1015, %v827, 8
        %v1020 = vrot.slane %v1016, 4
        %vm1021 = vcmp.lt.s32.totalorder %v1016, %v1020
        %v1022 = vsel %vm1021, %v1016, %v1020
        %v1023 = vrot.slane %v1022, 2
        %vm1024 = vcmp.lt.s32.totalorder %v1022, %v1023
        %v1025 = vsel %vm1024, %v1022, %v1023
        %v1026 = vrot.slane %v1025, 1
        %vm1027 = vcmp.lt.s32.totalorder %v1025, %v1026
        %v1028 = vsel %vm1027, %v1025, %v1026
        %v1029 = vrot.slane %v1017, 4
        %vm1030 = vcmp.lt.s32.totalorder %v1017, %v1029
        %v1031 = vsel %vm1030, %v1017, %v1029
        %v1032 = vrot.slane %v1031, 2
        %vm1033 = vcmp.lt.s32.totalorder %v1031, %v1032
        %v1034 = vsel %vm1033, %v1031, %v1032
        %v1035 = vrot.slane %v1034, 1
        %vm1036 = vcmp.lt.s32.totalorder %v1034, %v1035
        %v1037 = vsel %vm1036, %v1034, %v1035
        %v1038 = vrot.slane %v1018, 4
        %vm1039 = vcmp.lt.s32.totalorder %v1018, %v1038
        %v1040 = vsel %vm1039, %v1018, %v1038
        %v1041 = vrot.slane %v1040, 2
        %vm1042 = vcmp.lt.s32.totalorder %v1040, %v1041
        %v1043 = vsel %vm1042, %v1040, %v1041
        %v1044 = vrot.slane %v1043, 1
        %vm1045 = vcmp.lt.s32.totalorder %v1043, %v1044
        %v1046 = vsel %vm1045, %v1043, %v1044
        %v1047 = vrot.slane %v1019, 4
        %vm1048 = vcmp.lt.s32.totalorder %v1019, %v1047
        %v1049 = vsel %vm1048, %v1019, %v1047
        %v1050 = vrot.slane %v1049, 2
        %vm1051 = vcmp.lt.s32.totalorder %v1049, %v1050
        %v1052 = vsel %vm1051, %v1049, %v1050
        %v1053 = vrot.slane %v1052, 1
        %vm1054 = vcmp.lt.s32.totalorder %v1052, %v1053
        %v1055 = vsel %vm1054, %v1052, %v1053
        %vm1056 = vcmp.eq.s32.totalorder %v827, %v1028
        %vm1057 = vcmp.eq.s32.totalorder %v827, %v1037
        %vm1058 = vcmp.eq.s32.totalorder %v827, %v1046
        %vm1059 = vcmp.eq.s32.totalorder %v827, %v1055
        %v1060 = vsel %vm1056, 0.0, %v980
        %v1061 = vsel %vm1057, 0.0, %v981
        %v1062 = vsel %vm1058, 0.0, %v982
        %v1063 = vsel %vm1059, 0.0, %v983
        %v1064 = vmul.f32 %v748, %v1060
        %v1065 = vmul.f32 %v755, %v1061
        %v1066 = vmul.f32 %v818, %v1062
        %v1067 = vmul.f32 %v825, %v1063
        %v1068 = vrot.slane %v1064, 4
        %v1069 = vmax.f32 %v1064, %v1068
        %v1070 = vrot.slane %v1069, 2
        %v1071 = vmax.f32 %v1069, %v1070
        %v1072 = vrot.slane %v1071, 1
        %v1073 = vmax.f32 %v1071, %v1072
        %v1074 = vrot.slane %v1065, 4
        %v1075 = vmax.f32 %v1065, %v1074
        %v1076 = vrot.slane %v1075, 2
        %v1077 = vmax.f32 %v1075, %v1076
        %v1078 = vrot.slane %v1077, 1
        %v1079 = vmax.f32 %v1077, %v1078
        %v1080 = vrot.slane %v1066, 4
        %v1081 = vmax.f32 %v1066, %v1080
        %v1082 = vrot.slane %v1081, 2
        %v1083 = vmax.f32 %v1081, %v1082
        %v1084 = vrot.slane %v1083, 1
        %v1085 = vmax.f32 %v1083, %v1084
        %v1086 = vrot.slane %v1067, 4
        %v1087 = vmax.f32 %v1067, %v1086
        %v1088 = vrot.slane %v1087, 2
        %v1089 = vmax.f32 %v1087, %v1088
        %v1090 = vrot.slane %v1089, 1
        %v1091 = vmax.f32 %v1089, %v1090
        %v1092 = vsub.f32 %v1064, %v1073
        %v1093 = vsub.f32 %v1065, %v1079
        %v1094 = vsub.f32 %v1066, %v1085
        %v1095 = vsub.f32 %v1067, %v1091
        %v1096 = vmul.f32 %v1092, 1.442695
        %v1097 = vpow.pop %v1096
        %v1098 = vmul.f32 %v1093, 1.442695
        %v1099 = vpow.pop %v1098
        %v1100 = vmul.f32 %v1094, 1.442695
        %v1101 = vpow.pop %v1100
        %v1102 = vmul.f32 %v1095, 1.442695
        %v1103 = vpow.pop %v1102
        %v1104 = vrot.slane %v1097, 4
        %v1105 = vadd.f32 %v1097, %v1104
        %v1106 = vrot.slane %v1105, 2
        %v1107 = vadd.f32 %v1105, %v1106
        %v1108 = vrot.slane %v1107, 1
        %v1109 = vadd.f32 %v1107, %v1108
        %v1110 = vrot.slane %v1099, 4
        %v1111 = vadd.f32 %v1099, %v1110
        %v1112 = vrot.slane %v1111, 2
        %v1113 = vadd.f32 %v1111, %v1112
        %v1114 = vrot.slane %v1113, 1
        %v1115 = vadd.f32 %v1113, %v1114
        %v1116 = vrot.slane %v1101, 4
        %v1117 = vadd.f32 %v1101, %v1116
        %v1118 = vrot.slane %v1117, 2
        %v1119 = vadd.f32 %v1117, %v1118
        %v1120 = vrot.slane %v1119, 1
        %v1121 = vadd.f32 %v1119, %v1120
        %v1122 = vrot.slane %v1103, 4
        %v1123 = vadd.f32 %v1103, %v1122
        %v1124 = vrot.slane %v1123, 2
        %v1125 = vadd.f32 %v1123, %v1124
        %v1126 = vrot.slane %v1125, 1
        %v1127 = vadd.f32 %v1125, %v1126
        %v1128 = vrcp.pop %v1109
        %v1129 = vrcp.pop %v1115
        %v1130 = vrcp.pop %v1121
        %v1131 = vrcp.pop %v1127
        %v1132 = vmul.f32 %v1097, %v1128
        %v1133 = vmul.f32 %v1099, %v1129
        %v1134 = vmul.f32 %v1101, %v1130
        %v1135 = vmul.f32 %v1103, %v1131
        %1136 = vxpose.xlu0.b32.start [1/16] %v1132, 128
        %1137 = vxpose.xlu0.b32.cont [2/16] 0.0, 128
        %1138 = vxpose.xlu0.b32.cont [3/16] 0.0, 128
        %1139 = vxpose.xlu0.b32.cont [4/16] 0.0, 128
        %1140 = vxpose.xlu0.b32.cont [5/16] 0.0, 128
        %1141 = vxpose.xlu0.b32.cont [6/16] 0.0, 128
        %1142 = vxpose.xlu0.b32.cont [7/16] 0.0, 128
        %1143 = vxpose.xlu0.b32.cont [8/16] 0.0, 128
        %1144 = vxpose.xlu0.b32.cont [9/16] 0.0, 128
        %1145 = vxpose.xlu0.b32.cont [10/16] 0.0, 128
        %1146 = vxpose.xlu0.b32.cont [11/16] 0.0, 128
        %1147 = vxpose.xlu0.b32.cont [12/16] 0.0, 128
        %1148 = vxpose.xlu0.b32.cont [13/16] 0.0, 128
        %1149 = vxpose.xlu0.b32.cont [14/16] 0.0, 128
        %1150 = vxpose.xlu0.b32.cont [15/16] 0.0, 128
        %1151 = vxpose.xlu0.b32.end [16/16] 0.0, 128
        %v1152 = vpop.trf.xlu0
        %v1153 = vpop.trf.xlu0
        %v1154 = vpop.trf.xlu0
        %v1155 = vpop.trf.xlu0
        %v1156 = vpop.trf.xlu0
        %v1157 = vpop.trf.xlu0
        %v1158 = vpop.trf.xlu0
        %v1159 = vpop.trf.xlu0
        %v1160 = vpop.trf.xlu0
        %v1161 = vpop.trf.xlu0
        %v1162 = vpop.trf.xlu0
        %v1163 = vpop.trf.xlu0
        %v1164 = vpop.trf.xlu0
        %v1165 = vpop.trf.xlu0
        %v1166 = vpop.trf.xlu0
        %v1167 = vpop.trf.xlu0
        %1168 = vxpose.xlu0.b32.start [1/16] %v1133, 128
        %1169 = vxpose.xlu0.b32.cont [2/16] 0.0, 128
        %1170 = vxpose.xlu0.b32.cont [3/16] 0.0, 128
        %1171 = vxpose.xlu0.b32.cont [4/16] 0.0, 128
        %1172 = vxpose.xlu0.b32.cont [5/16] 0.0, 128
        %1173 = vxpose.xlu0.b32.cont [6/16] 0.0, 128
        %1174 = vxpose.xlu0.b32.cont [7/16] 0.0, 128
        %1175 = vxpose.xlu0.b32.cont [8/16] 0.0, 128
        %1176 = vxpose.xlu0.b32.cont [9/16] 0.0, 128
        %1177 = vxpose.xlu0.b32.cont [10/16] 0.0, 128
        %1178 = vxpose.xlu0.b32.cont [11/16] 0.0, 128
        %1179 = vxpose.xlu0.b32.cont [12/16] 0.0, 128
        %1180 = vxpose.xlu0.b32.cont [13/16] 0.0, 128
        %1181 = vxpose.xlu0.b32.cont [14/16] 0.0, 128
        %1182 = vxpose.xlu0.b32.cont [15/16] 0.0, 128
        %1183 = vxpose.xlu0.b32.end [16/16] 0.0, 128
        %v1184 = vpop.trf.xlu0
        %v1185 = vpop.trf.xlu0
        %v1186 = vpop.trf.xlu0
        %v1187 = vpop.trf.xlu0
        %v1188 = vpop.trf.xlu0
        %v1189 = vpop.trf.xlu0
        %v1190 = vpop.trf.xlu0
        %v1191 = vpop.trf.xlu0
        %v1192 = vpop.trf.xlu0
        %v1193 = vpop.trf.xlu0
        %v1194 = vpop.trf.xlu0
        %v1195 = vpop.trf.xlu0
        %v1196 = vpop.trf.xlu0
        %v1197 = vpop.trf.xlu0
        %v1198 = vpop.trf.xlu0
        %v1199 = vpop.trf.xlu0
        %1200 = vxpose.xlu0.b32.start [1/16] %v1134, 128
        %1201 = vxpose.xlu0.b32.cont [2/16] 0.0, 128
        %1202 = vxpose.xlu0.b32.cont [3/16] 0.0, 128
        %1203 = vxpose.xlu0.b32.cont [4/16] 0.0, 128
        %1204 = vxpose.xlu0.b32.cont [5/16] 0.0, 128
        %1205 = vxpose.xlu0.b32.cont [6/16] 0.0, 128
        %1206 = vxpose.xlu0.b32.cont [7/16] 0.0, 128
        %1207 = vxpose.xlu0.b32.cont [8/16] 0.0, 128
        %1208 = vxpose.xlu0.b32.cont [9/16] 0.0, 128
        %1209 = vxpose.xlu0.b32.cont [10/16] 0.0, 128
        %1210 = vxpose.xlu0.b32.cont [11/16] 0.0, 128
        %1211 = vxpose.xlu0.b32.cont [12/16] 0.0, 128
        %1212 = vxpose.xlu0.b32.cont [13/16] 0.0, 128
        %1213 = vxpose.xlu0.b32.cont [14/16] 0.0, 128
        %1214 = vxpose.xlu0.b32.cont [15/16] 0.0, 128
        %1215 = vxpose.xlu0.b32.end [16/16] 0.0, 128
        %v1216 = vpop.trf.xlu0
        %v1217 = vpop.trf.xlu0
        %v1218 = vpop.trf.xlu0
        %v1219 = vpop.trf.xlu0
        %v1220 = vpop.trf.xlu0
        %v1221 = vpop.trf.xlu0
        %v1222 = vpop.trf.xlu0
        %v1223 = vpop.trf.xlu0
        %v1224 = vpop.trf.xlu0
        %v1225 = vpop.trf.xlu0
        %v1226 = vpop.trf.xlu0
        %v1227 = vpop.trf.xlu0
        %v1228 = vpop.trf.xlu0
        %v1229 = vpop.trf.xlu0
        %v1230 = vpop.trf.xlu0
        %v1231 = vpop.trf.xlu0
        %1232 = vxpose.xlu0.b32.start [1/16] %v1135, 128
        %1233 = vxpose.xlu0.b32.cont [2/16] 0.0, 128
        %1234 = vxpose.xlu0.b32.cont [3/16] 0.0, 128
        %1235 = vxpose.xlu0.b32.cont [4/16] 0.0, 128
        %1236 = vxpose.xlu0.b32.cont [5/16] 0.0, 128
        %1237 = vxpose.xlu0.b32.cont [6/16] 0.0, 128
        %1238 = vxpose.xlu0.b32.cont [7/16] 0.0, 128
        %1239 = vxpose.xlu0.b32.cont [8/16] 0.0, 128
        %1240 = vxpose.xlu0.b32.cont [9/16] 0.0, 128
        %1241 = vxpose.xlu0.b32.cont [10/16] 0.0, 128
        %1242 = vxpose.xlu0.b32.cont [11/16] 0.0, 128
        %1243 = vxpose.xlu0.b32.cont [12/16] 0.0, 128
        %1244 = vxpose.xlu0.b32.cont [13/16] 0.0, 128
        %1245 = vxpose.xlu0.b32.cont [14/16] 0.0, 128
        %1246 = vxpose.xlu0.b32.cont [15/16] 0.0, 128
        %1247 = vxpose.xlu0.b32.end [16/16] 0.0, 128
        %v1248 = vpop.trf.xlu0
        %v1249 = vpop.trf.xlu0
        %v1250 = vpop.trf.xlu0
        %v1251 = vpop.trf.xlu0
        %v1252 = vpop.trf.xlu0
        %v1253 = vpop.trf.xlu0
        %v1254 = vpop.trf.xlu0
        %v1255 = vpop.trf.xlu0
        %v1256 = vpop.trf.xlu0
        %v1257 = vpop.trf.xlu0
        %v1258 = vpop.trf.xlu0
        %v1259 = vpop.trf.xlu0
        %v1260 = vpop.trf.xlu0
        %v1261 = vpop.trf.xlu0
        %v1262 = vpop.trf.xlu0
        %v1263 = vpop.trf.xlu0
        %1328 = vrot.lane.b32.xlu0 %v1152, 8
        %v1329 = vpop.permute.xlu0 %1328
        %1330 = vrot.lane.b32.xlu0 %v1153, 8
        %v1331 = vpop.permute.xlu0 %1330
        %1332 = vrot.lane.b32.xlu0 %v1154, 8
        %v1333 = vpop.permute.xlu0 %1332
        %1334 = vrot.lane.b32.xlu0 %v1155, 8
        %v1335 = vpop.permute.xlu0 %1334
        %1336 = vrot.lane.b32.xlu0 %v1156, 8
        %v1337 = vpop.permute.xlu0 %1336
        %1338 = vrot.lane.b32.xlu0 %v1157, 8
        %v1339 = vpop.permute.xlu0 %1338
        %1340 = vrot.lane.b32.xlu0 %v1158, 8
        %v1341 = vpop.permute.xlu0 %1340
        %1342 = vrot.lane.b32.xlu0 %v1159, 8
        %v1343 = vpop.permute.xlu0 %1342
        %1344 = vrot.lane.b32.xlu0 %v1160, 8
        %v1345 = vpop.permute.xlu0 %1344
        %1346 = vrot.lane.b32.xlu0 %v1161, 8
        %v1347 = vpop.permute.xlu0 %1346
        %1348 = vrot.lane.b32.xlu0 %v1162, 8
        %v1349 = vpop.permute.xlu0 %1348
        %1350 = vrot.lane.b32.xlu0 %v1163, 8
        %v1351 = vpop.permute.xlu0 %1350
        %1352 = vrot.lane.b32.xlu0 %v1164, 8
        %v1353 = vpop.permute.xlu0 %1352
        %1354 = vrot.lane.b32.xlu0 %v1165, 8
        %v1355 = vpop.permute.xlu0 %1354
        %1356 = vrot.lane.b32.xlu0 %v1166, 8
        %v1357 = vpop.permute.xlu0 %1356
        %1358 = vrot.lane.b32.xlu0 %v1167, 8
        %v1359 = vpop.permute.xlu0 %1358
        %1360 = vrot.lane.b32.xlu0 %v1184, 8
        %v1361 = vpop.permute.xlu0 %1360
        %1362 = vrot.lane.b32.xlu0 %v1185, 8
        %v1363 = vpop.permute.xlu0 %1362
        %1364 = vrot.lane.b32.xlu0 %v1186, 8
        %v1365 = vpop.permute.xlu0 %1364
        %1366 = vrot.lane.b32.xlu0 %v1187, 8
        %v1367 = vpop.permute.xlu0 %1366
        %1368 = vrot.lane.b32.xlu0 %v1188, 8
        %v1369 = vpop.permute.xlu0 %1368
        %1370 = vrot.lane.b32.xlu0 %v1189, 8
        %v1371 = vpop.permute.xlu0 %1370
        %1372 = vrot.lane.b32.xlu0 %v1190, 8
        %v1373 = vpop.permute.xlu0 %1372
        %1374 = vrot.lane.b32.xlu0 %v1191, 8
        %v1375 = vpop.permute.xlu0 %1374
        %1376 = vrot.lane.b32.xlu0 %v1192, 8
        %v1377 = vpop.permute.xlu0 %1376
        %1378 = vrot.lane.b32.xlu0 %v1193, 8
        %v1379 = vpop.permute.xlu0 %1378
        %1380 = vrot.lane.b32.xlu0 %v1194, 8
        %v1381 = vpop.permute.xlu0 %1380
        %1382 = vrot.lane.b32.xlu0 %v1195, 8
        %v1383 = vpop.permute.xlu0 %1382
        %1384 = vrot.lane.b32.xlu0 %v1196, 8
        %v1385 = vpop.permute.xlu0 %1384
        %1386 = vrot.lane.b32.xlu0 %v1197, 8
        %v1387 = vpop.permute.xlu0 %1386
        %1388 = vrot.lane.b32.xlu0 %v1198, 8
        %v1389 = vpop.permute.xlu0 %1388
        %1390 = vrot.lane.b32.xlu0 %v1199, 8
        %v1391 = vpop.permute.xlu0 %1390
        %1392 = vrot.lane.b32.xlu0 %v1216, 8
        %v1393 = vpop.permute.xlu0 %1392
        %1394 = vrot.lane.b32.xlu0 %v1217, 8
        %v1395 = vpop.permute.xlu0 %1394
        %1396 = vrot.lane.b32.xlu0 %v1218, 8
        %v1397 = vpop.permute.xlu0 %1396
        %1398 = vrot.lane.b32.xlu0 %v1219, 8
        %v1399 = vpop.permute.xlu0 %1398
        %1400 = vrot.lane.b32.xlu0 %v1220, 8
        %v1401 = vpop.permute.xlu0 %1400
        %1402 = vrot.lane.b32.xlu0 %v1221, 8
        %v1403 = vpop.permute.xlu0 %1402
        %1404 = vrot.lane.b32.xlu0 %v1222, 8
        %v1405 = vpop.permute.xlu0 %1404
        %1406 = vrot.lane.b32.xlu0 %v1223, 8
        %v1407 = vpop.permute.xlu0 %1406
        %1408 = vrot.lane.b32.xlu0 %v1224, 8
        %v1409 = vpop.permute.xlu0 %1408
        %1410 = vrot.lane.b32.xlu0 %v1225, 8
        %v1411 = vpop.permute.xlu0 %1410
        %1412 = vrot.lane.b32.xlu0 %v1226, 8
        %v1413 = vpop.permute.xlu0 %1412
        %1414 = vrot.lane.b32.xlu0 %v1227, 8
        %v1415 = vpop.permute.xlu0 %1414
        %1416 = vrot.lane.b32.xlu0 %v1228, 8
        %v1417 = vpop.permute.xlu0 %1416
        %1418 = vrot.lane.b32.xlu0 %v1229, 8
        %v1419 = vpop.permute.xlu0 %1418
        %1420 = vrot.lane.b32.xlu0 %v1230, 8
        %v1421 = vpop.permute.xlu0 %1420
        %1422 = vrot.lane.b32.xlu0 %v1231, 8
        %v1423 = vpop.permute.xlu0 %1422
        %1424 = vrot.lane.b32.xlu0 %v1248, 8
        %v1425 = vpop.permute.xlu0 %1424
        %1426 = vrot.lane.b32.xlu0 %v1249, 8
        %v1427 = vpop.permute.xlu0 %1426
        %1428 = vrot.lane.b32.xlu0 %v1250, 8
        %v1429 = vpop.permute.xlu0 %1428
        %1430 = vrot.lane.b32.xlu0 %v1251, 8
        %v1431 = vpop.permute.xlu0 %1430
        %1432 = vrot.lane.b32.xlu0 %v1252, 8
        %v1433 = vpop.permute.xlu0 %1432
        %1434 = vrot.lane.b32.xlu0 %v1253, 8
        %v1435 = vpop.permute.xlu0 %1434
        %1436 = vrot.lane.b32.xlu0 %v1254, 8
        %v1437 = vpop.permute.xlu0 %1436
        %1438 = vrot.lane.b32.xlu0 %v1255, 8
        %v1439 = vpop.permute.xlu0 %1438
        %1440 = vrot.lane.b32.xlu0 %v1256, 8
        %v1441 = vpop.permute.xlu0 %1440
        %1442 = vrot.lane.b32.xlu0 %v1257, 8
        %v1443 = vpop.permute.xlu0 %1442
        %1444 = vrot.lane.b32.xlu0 %v1258, 8
        %v1445 = vpop.permute.xlu0 %1444
        %1446 = vrot.lane.b32.xlu0 %v1259, 8
        %v1447 = vpop.permute.xlu0 %1446
        %1448 = vrot.lane.b32.xlu0 %v1260, 8
        %v1449 = vpop.permute.xlu0 %1448
        %1450 = vrot.lane.b32.xlu0 %v1261, 8
        %v1451 = vpop.permute.xlu0 %1450
        %1452 = vrot.lane.b32.xlu0 %v1262, 8
        %v1453 = vpop.permute.xlu0 %1452
        %1454 = vrot.lane.b32.xlu0 %v1263, 8
        %v1455 = vpop.permute.xlu0 %1454
        %1520 = vrot.lane.b32.xlu0 %v1152, 16
        %v1521 = vpop.permute.xlu0 %1520
        %1522 = vrot.lane.b32.xlu0 %v1153, 16
        %v1523 = vpop.permute.xlu0 %1522
        %1524 = vrot.lane.b32.xlu0 %v1154, 16
        %v1525 = vpop.permute.xlu0 %1524
        %1526 = vrot.lane.b32.xlu0 %v1155, 16
        %v1527 = vpop.permute.xlu0 %1526
        %1528 = vrot.lane.b32.xlu0 %v1156, 16
        %v1529 = vpop.permute.xlu0 %1528
        %1530 = vrot.lane.b32.xlu0 %v1157, 16
        %v1531 = vpop.permute.xlu0 %1530
        %1532 = vrot.lane.b32.xlu0 %v1158, 16
        %v1533 = vpop.permute.xlu0 %1532
        %1534 = vrot.lane.b32.xlu0 %v1159, 16
        %v1535 = vpop.permute.xlu0 %1534
        %1536 = vrot.lane.b32.xlu0 %v1160, 16
        %v1537 = vpop.permute.xlu0 %1536
        %1538 = vrot.lane.b32.xlu0 %v1161, 16
        %v1539 = vpop.permute.xlu0 %1538
        %1540 = vrot.lane.b32.xlu0 %v1162, 16
        %v1541 = vpop.permute.xlu0 %1540
        %1542 = vrot.lane.b32.xlu0 %v1163, 16
        %v1543 = vpop.permute.xlu0 %1542
        %1544 = vrot.lane.b32.xlu0 %v1164, 16
        %v1545 = vpop.permute.xlu0 %1544
        %1546 = vrot.lane.b32.xlu0 %v1165, 16
        %v1547 = vpop.permute.xlu0 %1546
        %1548 = vrot.lane.b32.xlu0 %v1166, 16
        %v1549 = vpop.permute.xlu0 %1548
        %1550 = vrot.lane.b32.xlu0 %v1167, 16
        %v1551 = vpop.permute.xlu0 %1550
        %1552 = vrot.lane.b32.xlu0 %v1184, 16
        %v1553 = vpop.permute.xlu0 %1552
        %1554 = vrot.lane.b32.xlu0 %v1185, 16
        %v1555 = vpop.permute.xlu0 %1554
        %1556 = vrot.lane.b32.xlu0 %v1186, 16
        %v1557 = vpop.permute.xlu0 %1556
        %1558 = vrot.lane.b32.xlu0 %v1187, 16
        %v1559 = vpop.permute.xlu0 %1558
        %1560 = vrot.lane.b32.xlu0 %v1188, 16
        %v1561 = vpop.permute.xlu0 %1560
        %1562 = vrot.lane.b32.xlu0 %v1189, 16
        %v1563 = vpop.permute.xlu0 %1562
        %1564 = vrot.lane.b32.xlu0 %v1190, 16
        %v1565 = vpop.permute.xlu0 %1564
        %1566 = vrot.lane.b32.xlu0 %v1191, 16
        %v1567 = vpop.permute.xlu0 %1566
        %1568 = vrot.lane.b32.xlu0 %v1192, 16
        %v1569 = vpop.permute.xlu0 %1568
        %1570 = vrot.lane.b32.xlu0 %v1193, 16
        %v1571 = vpop.permute.xlu0 %1570
        %1572 = vrot.lane.b32.xlu0 %v1194, 16
        %v1573 = vpop.permute.xlu0 %1572
        %1574 = vrot.lane.b32.xlu0 %v1195, 16
        %v1575 = vpop.permute.xlu0 %1574
        %1576 = vrot.lane.b32.xlu0 %v1196, 16
        %v1577 = vpop.permute.xlu0 %1576
        %1578 = vrot.lane.b32.xlu0 %v1197, 16
        %v1579 = vpop.permute.xlu0 %1578
        %1580 = vrot.lane.b32.xlu0 %v1198, 16
        %v1581 = vpop.permute.xlu0 %1580
        %1582 = vrot.lane.b32.xlu0 %v1199, 16
        %v1583 = vpop.permute.xlu0 %1582
        %1584 = vrot.lane.b32.xlu0 %v1216, 16
        %v1585 = vpop.permute.xlu0 %1584
        %1586 = vrot.lane.b32.xlu0 %v1217, 16
        %v1587 = vpop.permute.xlu0 %1586
        %1588 = vrot.lane.b32.xlu0 %v1218, 16
        %v1589 = vpop.permute.xlu0 %1588
        %1590 = vrot.lane.b32.xlu0 %v1219, 16
        %v1591 = vpop.permute.xlu0 %1590
        %1592 = vrot.lane.b32.xlu0 %v1220, 16
        %v1593 = vpop.permute.xlu0 %1592
        %1594 = vrot.lane.b32.xlu0 %v1221, 16
        %v1595 = vpop.permute.xlu0 %1594
        %1596 = vrot.lane.b32.xlu0 %v1222, 16
        %v1597 = vpop.permute.xlu0 %1596
        %1598 = vrot.lane.b32.xlu0 %v1223, 16
        %v1599 = vpop.permute.xlu0 %1598
        %1600 = vrot.lane.b32.xlu0 %v1224, 16
        %v1601 = vpop.permute.xlu0 %1600
        %1602 = vrot.lane.b32.xlu0 %v1225, 16
        %v1603 = vpop.permute.xlu0 %1602
        %1604 = vrot.lane.b32.xlu0 %v1226, 16
        %v1605 = vpop.permute.xlu0 %1604
        %1606 = vrot.lane.b32.xlu0 %v1227, 16
        %v1607 = vpop.permute.xlu0 %1606
        %1608 = vrot.lane.b32.xlu0 %v1228, 16
        %v1609 = vpop.permute.xlu0 %1608
        %1610 = vrot.lane.b32.xlu0 %v1229, 16
        %v1611 = vpop.permute.xlu0 %1610
        %1612 = vrot.lane.b32.xlu0 %v1230, 16
        %v1613 = vpop.permute.xlu0 %1612
        %1614 = vrot.lane.b32.xlu0 %v1231, 16
        %v1615 = vpop.permute.xlu0 %1614
        %1616 = vrot.lane.b32.xlu0 %v1248, 16
        %v1617 = vpop.permute.xlu0 %1616
        %1618 = vrot.lane.b32.xlu0 %v1249, 16
        %v1619 = vpop.permute.xlu0 %1618
        %1620 = vrot.lane.b32.xlu0 %v1250, 16
        %v1621 = vpop.permute.xlu0 %1620
        %1622 = vrot.lane.b32.xlu0 %v1251, 16
        %v1623 = vpop.permute.xlu0 %1622
        %1624 = vrot.lane.b32.xlu0 %v1252, 16
        %v1625 = vpop.permute.xlu0 %1624
        %1626 = vrot.lane.b32.xlu0 %v1253, 16
        %v1627 = vpop.permute.xlu0 %1626
        %1628 = vrot.lane.b32.xlu0 %v1254, 16
        %v1629 = vpop.permute.xlu0 %1628
        %1630 = vrot.lane.b32.xlu0 %v1255, 16
        %v1631 = vpop.permute.xlu0 %1630
        %1632 = vrot.lane.b32.xlu0 %v1256, 16
        %v1633 = vpop.permute.xlu0 %1632
        %1634 = vrot.lane.b32.xlu0 %v1257, 16
        %v1635 = vpop.permute.xlu0 %1634
        %1636 = vrot.lane.b32.xlu0 %v1258, 16
        %v1637 = vpop.permute.xlu0 %1636
        %1638 = vrot.lane.b32.xlu0 %v1259, 16
        %v1639 = vpop.permute.xlu0 %1638
        %1640 = vrot.lane.b32.xlu0 %v1260, 16
        %v1641 = vpop.permute.xlu0 %1640
        %1642 = vrot.lane.b32.xlu0 %v1261, 16
        %v1643 = vpop.permute.xlu0 %1642
        %1644 = vrot.lane.b32.xlu0 %v1262, 16
        %v1645 = vpop.permute.xlu0 %1644
        %1646 = vrot.lane.b32.xlu0 %v1263, 16
        %v1647 = vpop.permute.xlu0 %1646
        %1712 = vrot.lane.b32.xlu0 %v1152, 24
        %v1713 = vpop.permute.xlu0 %1712
        %1714 = vrot.lane.b32.xlu0 %v1153, 24
        %v1715 = vpop.permute.xlu0 %1714
        %1716 = vrot.lane.b32.xlu0 %v1154, 24
        %v1717 = vpop.permute.xlu0 %1716
        %1718 = vrot.lane.b32.xlu0 %v1155, 24
        %v1719 = vpop.permute.xlu0 %1718
        %1720 = vrot.lane.b32.xlu0 %v1156, 24
        %v1721 = vpop.permute.xlu0 %1720
        %1722 = vrot.lane.b32.xlu0 %v1157, 24
        %v1723 = vpop.permute.xlu0 %1722
        %1724 = vrot.lane.b32.xlu0 %v1158, 24
        %v1725 = vpop.permute.xlu0 %1724
        %1726 = vrot.lane.b32.xlu0 %v1159, 24
        %v1727 = vpop.permute.xlu0 %1726
        %1728 = vrot.lane.b32.xlu0 %v1160, 24
        %v1729 = vpop.permute.xlu0 %1728
        %1730 = vrot.lane.b32.xlu0 %v1161, 24
        %v1731 = vpop.permute.xlu0 %1730
        %1732 = vrot.lane.b32.xlu0 %v1162, 24
        %v1733 = vpop.permute.xlu0 %1732
        %1734 = vrot.lane.b32.xlu0 %v1163, 24
        %v1735 = vpop.permute.xlu0 %1734
        %1736 = vrot.lane.b32.xlu0 %v1164, 24
        %v1737 = vpop.permute.xlu0 %1736
        %1738 = vrot.lane.b32.xlu0 %v1165, 24
        %v1739 = vpop.permute.xlu0 %1738
        %1740 = vrot.lane.b32.xlu0 %v1166, 24
        %v1741 = vpop.permute.xlu0 %1740
        %1742 = vrot.lane.b32.xlu0 %v1167, 24
        %v1743 = vpop.permute.xlu0 %1742
        %1744 = vrot.lane.b32.xlu0 %v1184, 24
        %v1745 = vpop.permute.xlu0 %1744
        %1746 = vrot.lane.b32.xlu0 %v1185, 24
        %v1747 = vpop.permute.xlu0 %1746
        %1748 = vrot.lane.b32.xlu0 %v1186, 24
        %v1749 = vpop.permute.xlu0 %1748
        %1750 = vrot.lane.b32.xlu0 %v1187, 24
        %v1751 = vpop.permute.xlu0 %1750
        %1752 = vrot.lane.b32.xlu0 %v1188, 24
        %v1753 = vpop.permute.xlu0 %1752
        %1754 = vrot.lane.b32.xlu0 %v1189, 24
        %v1755 = vpop.permute.xlu0 %1754
        %1756 = vrot.lane.b32.xlu0 %v1190, 24
        %v1757 = vpop.permute.xlu0 %1756
        %1758 = vrot.lane.b32.xlu0 %v1191, 24
        %v1759 = vpop.permute.xlu0 %1758
        %1760 = vrot.lane.b32.xlu0 %v1192, 24
        %v1761 = vpop.permute.xlu0 %1760
        %1762 = vrot.lane.b32.xlu0 %v1193, 24
        %v1763 = vpop.permute.xlu0 %1762
        %1764 = vrot.lane.b32.xlu0 %v1194, 24
        %v1765 = vpop.permute.xlu0 %1764
        %1766 = vrot.lane.b32.xlu0 %v1195, 24
        %v1767 = vpop.permute.xlu0 %1766
        %1768 = vrot.lane.b32.xlu0 %v1196, 24
        %v1769 = vpop.permute.xlu0 %1768
        %1770 = vrot.lane.b32.xlu0 %v1197, 24
        %v1771 = vpop.permute.xlu0 %1770
        %1772 = vrot.lane.b32.xlu0 %v1198, 24
        %v1773 = vpop.permute.xlu0 %1772
        %1774 = vrot.lane.b32.xlu0 %v1199, 24
        %v1775 = vpop.permute.xlu0 %1774
        %1776 = vrot.lane.b32.xlu0 %v1216, 24
        %v1777 = vpop.permute.xlu0 %1776
        %1778 = vrot.lane.b32.xlu0 %v1217, 24
        %v1779 = vpop.permute.xlu0 %1778
        %1780 = vrot.lane.b32.xlu0 %v1218, 24
        %v1781 = vpop.permute.xlu0 %1780
        %1782 = vrot.lane.b32.xlu0 %v1219, 24
        %v1783 = vpop.permute.xlu0 %1782
        %1784 = vrot.lane.b32.xlu0 %v1220, 24
        %v1785 = vpop.permute.xlu0 %1784
        %1786 = vrot.lane.b32.xlu0 %v1221, 24
        %v1787 = vpop.permute.xlu0 %1786
        %1788 = vrot.lane.b32.xlu0 %v1222, 24
        %v1789 = vpop.permute.xlu0 %1788
        %1790 = vrot.lane.b32.xlu0 %v1223, 24
        %v1791 = vpop.permute.xlu0 %1790
        %1792 = vrot.lane.b32.xlu0 %v1224, 24
        %v1793 = vpop.permute.xlu0 %1792
        %1794 = vrot.lane.b32.xlu0 %v1225, 24
        %v1795 = vpop.permute.xlu0 %1794
        %1796 = vrot.lane.b32.xlu0 %v1226, 24
        %v1797 = vpop.permute.xlu0 %1796
        %1798 = vrot.lane.b32.xlu0 %v1227, 24
        %v1799 = vpop.permute.xlu0 %1798
        %1800 = vrot.lane.b32.xlu0 %v1228, 24
        %v1801 = vpop.permute.xlu0 %1800
        %1802 = vrot.lane.b32.xlu0 %v1229, 24
        %v1803 = vpop.permute.xlu0 %1802
        %1804 = vrot.lane.b32.xlu0 %v1230, 24
        %v1805 = vpop.permute.xlu0 %1804
        %1806 = vrot.lane.b32.xlu0 %v1231, 24
        %v1807 = vpop.permute.xlu0 %1806
        %1808 = vrot.lane.b32.xlu0 %v1248, 24
        %v1809 = vpop.permute.xlu0 %1808
        %1810 = vrot.lane.b32.xlu0 %v1249, 24
        %v1811 = vpop.permute.xlu0 %1810
        %1812 = vrot.lane.b32.xlu0 %v1250, 24
        %v1813 = vpop.permute.xlu0 %1812
        %1814 = vrot.lane.b32.xlu0 %v1251, 24
        %v1815 = vpop.permute.xlu0 %1814
        %1816 = vrot.lane.b32.xlu0 %v1252, 24
        %v1817 = vpop.permute.xlu0 %1816
        %1818 = vrot.lane.b32.xlu0 %v1253, 24
        %v1819 = vpop.permute.xlu0 %1818
        %1820 = vrot.lane.b32.xlu0 %v1254, 24
        %v1821 = vpop.permute.xlu0 %1820
        %1822 = vrot.lane.b32.xlu0 %v1255, 24
        %v1823 = vpop.permute.xlu0 %1822
        %1824 = vrot.lane.b32.xlu0 %v1256, 24
        %v1825 = vpop.permute.xlu0 %1824
        %1826 = vrot.lane.b32.xlu0 %v1257, 24
        %v1827 = vpop.permute.xlu0 %1826
        %1828 = vrot.lane.b32.xlu0 %v1258, 24
        %v1829 = vpop.permute.xlu0 %1828
        %1830 = vrot.lane.b32.xlu0 %v1259, 24
        %v1831 = vpop.permute.xlu0 %1830
        %1832 = vrot.lane.b32.xlu0 %v1260, 24
        %v1833 = vpop.permute.xlu0 %1832
        %1834 = vrot.lane.b32.xlu0 %v1261, 24
        %v1835 = vpop.permute.xlu0 %1834
        %1836 = vrot.lane.b32.xlu0 %v1262, 24
        %v1837 = vpop.permute.xlu0 %1836
        %1838 = vrot.lane.b32.xlu0 %v1263, 24
        %v1839 = vpop.permute.xlu0 %1838
        %1904 = vrot.lane.b32.xlu0 %v1152, 32
        %v1905 = vpop.permute.xlu0 %1904
        %1906 = vrot.lane.b32.xlu0 %v1153, 32
        %v1907 = vpop.permute.xlu0 %1906
        %1908 = vrot.lane.b32.xlu0 %v1154, 32
        %v1909 = vpop.permute.xlu0 %1908
        %1910 = vrot.lane.b32.xlu0 %v1155, 32
        %v1911 = vpop.permute.xlu0 %1910
        %1912 = vrot.lane.b32.xlu0 %v1156, 32
        %v1913 = vpop.permute.xlu0 %1912
        %1914 = vrot.lane.b32.xlu0 %v1157, 32
        %v1915 = vpop.permute.xlu0 %1914
        %1916 = vrot.lane.b32.xlu0 %v1158, 32
        %v1917 = vpop.permute.xlu0 %1916
        %1918 = vrot.lane.b32.xlu0 %v1159, 32
        %v1919 = vpop.permute.xlu0 %1918
        %1920 = vrot.lane.b32.xlu0 %v1160, 32
        %v1921 = vpop.permute.xlu0 %1920
        %1922 = vrot.lane.b32.xlu0 %v1161, 32
        %v1923 = vpop.permute.xlu0 %1922
        %1924 = vrot.lane.b32.xlu0 %v1162, 32
        %v1925 = vpop.permute.xlu0 %1924
        %1926 = vrot.lane.b32.xlu0 %v1163, 32
        %v1927 = vpop.permute.xlu0 %1926
        %1928 = vrot.lane.b32.xlu0 %v1164, 32
        %v1929 = vpop.permute.xlu0 %1928
        %1930 = vrot.lane.b32.xlu0 %v1165, 32
        %v1931 = vpop.permute.xlu0 %1930
        %1932 = vrot.lane.b32.xlu0 %v1166, 32
        %v1933 = vpop.permute.xlu0 %1932
        %1934 = vrot.lane.b32.xlu0 %v1167, 32
        %v1935 = vpop.permute.xlu0 %1934
        %1936 = vrot.lane.b32.xlu0 %v1184, 32
        %v1937 = vpop.permute.xlu0 %1936
        %1938 = vrot.lane.b32.xlu0 %v1185, 32
        %v1939 = vpop.permute.xlu0 %1938
        %1940 = vrot.lane.b32.xlu0 %v1186, 32
        %v1941 = vpop.permute.xlu0 %1940
        %1942 = vrot.lane.b32.xlu0 %v1187, 32
        %v1943 = vpop.permute.xlu0 %1942
        %1944 = vrot.lane.b32.xlu0 %v1188, 32
        %v1945 = vpop.permute.xlu0 %1944
        %1946 = vrot.lane.b32.xlu0 %v1189, 32
        %v1947 = vpop.permute.xlu0 %1946
        %1948 = vrot.lane.b32.xlu0 %v1190, 32
        %v1949 = vpop.permute.xlu0 %1948
        %1950 = vrot.lane.b32.xlu0 %v1191, 32
        %v1951 = vpop.permute.xlu0 %1950
        %1952 = vrot.lane.b32.xlu0 %v1192, 32
        %v1953 = vpop.permute.xlu0 %1952
        %1954 = vrot.lane.b32.xlu0 %v1193, 32
        %v1955 = vpop.permute.xlu0 %1954
        %1956 = vrot.lane.b32.xlu0 %v1194, 32
        %v1957 = vpop.permute.xlu0 %1956
        %1958 = vrot.lane.b32.xlu0 %v1195, 32
        %v1959 = vpop.permute.xlu0 %1958
        %1960 = vrot.lane.b32.xlu0 %v1196, 32
        %v1961 = vpop.permute.xlu0 %1960
        %1962 = vrot.lane.b32.xlu0 %v1197, 32
        %v1963 = vpop.permute.xlu0 %1962
        %1964 = vrot.lane.b32.xlu0 %v1198, 32
        %v1965 = vpop.permute.xlu0 %1964
        %1966 = vrot.lane.b32.xlu0 %v1199, 32
        %v1967 = vpop.permute.xlu0 %1966
        %1968 = vrot.lane.b32.xlu0 %v1216, 32
        %v1969 = vpop.permute.xlu0 %1968
        %1970 = vrot.lane.b32.xlu0 %v1217, 32
        %v1971 = vpop.permute.xlu0 %1970
        %1972 = vrot.lane.b32.xlu0 %v1218, 32
        %v1973 = vpop.permute.xlu0 %1972
        %1974 = vrot.lane.b32.xlu0 %v1219, 32
        %v1975 = vpop.permute.xlu0 %1974
        %1976 = vrot.lane.b32.xlu0 %v1220, 32
        %v1977 = vpop.permute.xlu0 %1976
        %1978 = vrot.lane.b32.xlu0 %v1221, 32
        %v1979 = vpop.permute.xlu0 %1978
        %1980 = vrot.lane.b32.xlu0 %v1222, 32
        %v1981 = vpop.permute.xlu0 %1980
        %1982 = vrot.lane.b32.xlu0 %v1223, 32
        %v1983 = vpop.permute.xlu0 %1982
        %1984 = vrot.lane.b32.xlu0 %v1224, 32
        %v1985 = vpop.permute.xlu0 %1984
        %1986 = vrot.lane.b32.xlu0 %v1225, 32
        %v1987 = vpop.permute.xlu0 %1986
        %1988 = vrot.lane.b32.xlu0 %v1226, 32
        %v1989 = vpop.permute.xlu0 %1988
        %1990 = vrot.lane.b32.xlu0 %v1227, 32
        %v1991 = vpop.permute.xlu0 %1990
        %1992 = vrot.lane.b32.xlu0 %v1228, 32
        %v1993 = vpop.permute.xlu0 %1992
        %1994 = vrot.lane.b32.xlu0 %v1229, 32
        %v1995 = vpop.permute.xlu0 %1994
        %1996 = vrot.lane.b32.xlu0 %v1230, 32
        %v1997 = vpop.permute.xlu0 %1996
        %1998 = vrot.lane.b32.xlu0 %v1231, 32
        %v1999 = vpop.permute.xlu0 %1998
        %2000 = vrot.lane.b32.xlu0 %v1248, 32
        %v2001 = vpop.permute.xlu0 %2000
        %2002 = vrot.lane.b32.xlu0 %v1249, 32
        %v2003 = vpop.permute.xlu0 %2002
        %2004 = vrot.lane.b32.xlu0 %v1250, 32
        %v2005 = vpop.permute.xlu0 %2004
        %2006 = vrot.lane.b32.xlu0 %v1251, 32
        %v2007 = vpop.permute.xlu0 %2006
        %2008 = vrot.lane.b32.xlu0 %v1252, 32
        %v2009 = vpop.permute.xlu0 %2008
        %2010 = vrot.lane.b32.xlu0 %v1253, 32
        %v2011 = vpop.permute.xlu0 %2010
        %2012 = vrot.lane.b32.xlu0 %v1254, 32
        %v2013 = vpop.permute.xlu0 %2012
        %2014 = vrot.lane.b32.xlu0 %v1255, 32
        %v2015 = vpop.permute.xlu0 %2014
        %2016 = vrot.lane.b32.xlu0 %v1256, 32
        %v2017 = vpop.permute.xlu0 %2016
        %2018 = vrot.lane.b32.xlu0 %v1257, 32
        %v2019 = vpop.permute.xlu0 %2018
        %2020 = vrot.lane.b32.xlu0 %v1258, 32
        %v2021 = vpop.permute.xlu0 %2020
        %2022 = vrot.lane.b32.xlu0 %v1259, 32
        %v2023 = vpop.permute.xlu0 %2022
        %2024 = vrot.lane.b32.xlu0 %v1260, 32
        %v2025 = vpop.permute.xlu0 %2024
        %2026 = vrot.lane.b32.xlu0 %v1261, 32
        %v2027 = vpop.permute.xlu0 %2026
        %2028 = vrot.lane.b32.xlu0 %v1262, 32
        %v2029 = vpop.permute.xlu0 %2028
        %2030 = vrot.lane.b32.xlu0 %v1263, 32
        %v2031 = vpop.permute.xlu0 %2030
        %2096 = vrot.lane.b32.xlu0 %v1152, 40
        %v2097 = vpop.permute.xlu0 %2096
        %2098 = vrot.lane.b32.xlu0 %v1153, 40
        %v2099 = vpop.permute.xlu0 %2098
        %2100 = vrot.lane.b32.xlu0 %v1154, 40
        %v2101 = vpop.permute.xlu0 %2100
        %2102 = vrot.lane.b32.xlu0 %v1155, 40
        %v2103 = vpop.permute.xlu0 %2102
        %2104 = vrot.lane.b32.xlu0 %v1156, 40
        %v2105 = vpop.permute.xlu0 %2104
        %2106 = vrot.lane.b32.xlu0 %v1157, 40
        %v2107 = vpop.permute.xlu0 %2106
        %2108 = vrot.lane.b32.xlu0 %v1158, 40
        %v2109 = vpop.permute.xlu0 %2108
        %2110 = vrot.lane.b32.xlu0 %v1159, 40
        %v2111 = vpop.permute.xlu0 %2110
        %2112 = vrot.lane.b32.xlu0 %v1160, 40
        %v2113 = vpop.permute.xlu0 %2112
        %2114 = vrot.lane.b32.xlu0 %v1161, 40
        %v2115 = vpop.permute.xlu0 %2114
        %2116 = vrot.lane.b32.xlu0 %v1162, 40
        %v2117 = vpop.permute.xlu0 %2116
        %2118 = vrot.lane.b32.xlu0 %v1163, 40
        %v2119 = vpop.permute.xlu0 %2118
        %2120 = vrot.lane.b32.xlu0 %v1164, 40
        %v2121 = vpop.permute.xlu0 %2120
        %2122 = vrot.lane.b32.xlu0 %v1165, 40
        %v2123 = vpop.permute.xlu0 %2122
        %2124 = vrot.lane.b32.xlu0 %v1166, 40
        %v2125 = vpop.permute.xlu0 %2124
        %2126 = vrot.lane.b32.xlu0 %v1167, 40
        %v2127 = vpop.permute.xlu0 %2126
        %2128 = vrot.lane.b32.xlu0 %v1184, 40
        %v2129 = vpop.permute.xlu0 %2128
        %2130 = vrot.lane.b32.xlu0 %v1185, 40
        %v2131 = vpop.permute.xlu0 %2130
        %2132 = vrot.lane.b32.xlu0 %v1186, 40
        %v2133 = vpop.permute.xlu0 %2132
        %2134 = vrot.lane.b32.xlu0 %v1187, 40
        %v2135 = vpop.permute.xlu0 %2134
        %2136 = vrot.lane.b32.xlu0 %v1188, 40
        %v2137 = vpop.permute.xlu0 %2136
        %2138 = vrot.lane.b32.xlu0 %v1189, 40
        %v2139 = vpop.permute.xlu0 %2138
        %2140 = vrot.lane.b32.xlu0 %v1190, 40
        %v2141 = vpop.permute.xlu0 %2140
        %2142 = vrot.lane.b32.xlu0 %v1191, 40
        %v2143 = vpop.permute.xlu0 %2142
        %2144 = vrot.lane.b32.xlu0 %v1192, 40
        %v2145 = vpop.permute.xlu0 %2144
        %2146 = vrot.lane.b32.xlu0 %v1193, 40
        %v2147 = vpop.permute.xlu0 %2146
        %2148 = vrot.lane.b32.xlu0 %v1194, 40
        %v2149 = vpop.permute.xlu0 %2148
        %2150 = vrot.lane.b32.xlu0 %v1195, 40
        %v2151 = vpop.permute.xlu0 %2150
        %2152 = vrot.lane.b32.xlu0 %v1196, 40
        %v2153 = vpop.permute.xlu0 %2152
        %2154 = vrot.lane.b32.xlu0 %v1197, 40
        %v2155 = vpop.permute.xlu0 %2154
        %2156 = vrot.lane.b32.xlu0 %v1198, 40
        %v2157 = vpop.permute.xlu0 %2156
        %2158 = vrot.lane.b32.xlu0 %v1199, 40
        %v2159 = vpop.permute.xlu0 %2158
        %2160 = vrot.lane.b32.xlu0 %v1216, 40
        %v2161 = vpop.permute.xlu0 %2160
        %2162 = vrot.lane.b32.xlu0 %v1217, 40
        %v2163 = vpop.permute.xlu0 %2162
        %2164 = vrot.lane.b32.xlu0 %v1218, 40
        %v2165 = vpop.permute.xlu0 %2164
        %2166 = vrot.lane.b32.xlu0 %v1219, 40
        %v2167 = vpop.permute.xlu0 %2166
        %2168 = vrot.lane.b32.xlu0 %v1220, 40
        %v2169 = vpop.permute.xlu0 %2168
        %2170 = vrot.lane.b32.xlu0 %v1221, 40
        %v2171 = vpop.permute.xlu0 %2170
        %2172 = vrot.lane.b32.xlu0 %v1222, 40
        %v2173 = vpop.permute.xlu0 %2172
        %2174 = vrot.lane.b32.xlu0 %v1223, 40
        %v2175 = vpop.permute.xlu0 %2174
        %2176 = vrot.lane.b32.xlu0 %v1224, 40
        %v2177 = vpop.permute.xlu0 %2176
        %2178 = vrot.lane.b32.xlu0 %v1225, 40
        %v2179 = vpop.permute.xlu0 %2178
        %2180 = vrot.lane.b32.xlu0 %v1226, 40
        %v2181 = vpop.permute.xlu0 %2180
        %2182 = vrot.lane.b32.xlu0 %v1227, 40
        %v2183 = vpop.permute.xlu0 %2182
        %2184 = vrot.lane.b32.xlu0 %v1228, 40
        %v2185 = vpop.permute.xlu0 %2184
        %2186 = vrot.lane.b32.xlu0 %v1229, 40
        %v2187 = vpop.permute.xlu0 %2186
        %2188 = vrot.lane.b32.xlu0 %v1230, 40
        %v2189 = vpop.permute.xlu0 %2188
        %2190 = vrot.lane.b32.xlu0 %v1231, 40
        %v2191 = vpop.permute.xlu0 %2190
        %2192 = vrot.lane.b32.xlu0 %v1248, 40
        %v2193 = vpop.permute.xlu0 %2192
        %2194 = vrot.lane.b32.xlu0 %v1249, 40
        %v2195 = vpop.permute.xlu0 %2194
        %2196 = vrot.lane.b32.xlu0 %v1250, 40
        %v2197 = vpop.permute.xlu0 %2196
        %2198 = vrot.lane.b32.xlu0 %v1251, 40
        %v2199 = vpop.permute.xlu0 %2198
        %2200 = vrot.lane.b32.xlu0 %v1252, 40
        %v2201 = vpop.permute.xlu0 %2200
        %2202 = vrot.lane.b32.xlu0 %v1253, 40
        %v2203 = vpop.permute.xlu0 %2202
        %2204 = vrot.lane.b32.xlu0 %v1254, 40
        %v2205 = vpop.permute.xlu0 %2204
        %2206 = vrot.lane.b32.xlu0 %v1255, 40
        %v2207 = vpop.permute.xlu0 %2206
        %2208 = vrot.lane.b32.xlu0 %v1256, 40
        %v2209 = vpop.permute.xlu0 %2208
        %2210 = vrot.lane.b32.xlu0 %v1257, 40
        %v2211 = vpop.permute.xlu0 %2210
        %2212 = vrot.lane.b32.xlu0 %v1258, 40
        %v2213 = vpop.permute.xlu0 %2212
        %2214 = vrot.lane.b32.xlu0 %v1259, 40
        %v2215 = vpop.permute.xlu0 %2214
        %2216 = vrot.lane.b32.xlu0 %v1260, 40
        %v2217 = vpop.permute.xlu0 %2216
        %2218 = vrot.lane.b32.xlu0 %v1261, 40
        %v2219 = vpop.permute.xlu0 %2218
        %2220 = vrot.lane.b32.xlu0 %v1262, 40
        %v2221 = vpop.permute.xlu0 %2220
        %2222 = vrot.lane.b32.xlu0 %v1263, 40
        %v2223 = vpop.permute.xlu0 %2222
        %2288 = vrot.lane.b32.xlu0 %v1152, 48
        %v2289 = vpop.permute.xlu0 %2288
        %2290 = vrot.lane.b32.xlu0 %v1153, 48
        %v2291 = vpop.permute.xlu0 %2290
        %2292 = vrot.lane.b32.xlu0 %v1154, 48
        %v2293 = vpop.permute.xlu0 %2292
        %2294 = vrot.lane.b32.xlu0 %v1155, 48
        %v2295 = vpop.permute.xlu0 %2294
        %2296 = vrot.lane.b32.xlu0 %v1156, 48
        %v2297 = vpop.permute.xlu0 %2296
        %2298 = vrot.lane.b32.xlu0 %v1157, 48
        %v2299 = vpop.permute.xlu0 %2298
        %2300 = vrot.lane.b32.xlu0 %v1158, 48
        %v2301 = vpop.permute.xlu0 %2300
        %2302 = vrot.lane.b32.xlu0 %v1159, 48
        %v2303 = vpop.permute.xlu0 %2302
        %2304 = vrot.lane.b32.xlu0 %v1160, 48
        %v2305 = vpop.permute.xlu0 %2304
        %2306 = vrot.lane.b32.xlu0 %v1161, 48
        %v2307 = vpop.permute.xlu0 %2306
        %2308 = vrot.lane.b32.xlu0 %v1162, 48
        %v2309 = vpop.permute.xlu0 %2308
        %2310 = vrot.lane.b32.xlu0 %v1163, 48
        %v2311 = vpop.permute.xlu0 %2310
        %2312 = vrot.lane.b32.xlu0 %v1164, 48
        %v2313 = vpop.permute.xlu0 %2312
        %2314 = vrot.lane.b32.xlu0 %v1165, 48
        %v2315 = vpop.permute.xlu0 %2314
        %2316 = vrot.lane.b32.xlu0 %v1166, 48
        %v2317 = vpop.permute.xlu0 %2316
        %2318 = vrot.lane.b32.xlu0 %v1167, 48
        %v2319 = vpop.permute.xlu0 %2318
        %2320 = vrot.lane.b32.xlu0 %v1184, 48
        %v2321 = vpop.permute.xlu0 %2320
        %2322 = vrot.lane.b32.xlu0 %v1185, 48
        %v2323 = vpop.permute.xlu0 %2322
        %2324 = vrot.lane.b32.xlu0 %v1186, 48
        %v2325 = vpop.permute.xlu0 %2324
        %2326 = vrot.lane.b32.xlu0 %v1187, 48
        %v2327 = vpop.permute.xlu0 %2326
        %2328 = vrot.lane.b32.xlu0 %v1188, 48
        %v2329 = vpop.permute.xlu0 %2328
        %2330 = vrot.lane.b32.xlu0 %v1189, 48
        %v2331 = vpop.permute.xlu0 %2330
        %2332 = vrot.lane.b32.xlu0 %v1190, 48
        %v2333 = vpop.permute.xlu0 %2332
        %2334 = vrot.lane.b32.xlu0 %v1191, 48
        %v2335 = vpop.permute.xlu0 %2334
        %2336 = vrot.lane.b32.xlu0 %v1192, 48
        %v2337 = vpop.permute.xlu0 %2336
        %2338 = vrot.lane.b32.xlu0 %v1193, 48
        %v2339 = vpop.permute.xlu0 %2338
        %2340 = vrot.lane.b32.xlu0 %v1194, 48
        %v2341 = vpop.permute.xlu0 %2340
        %2342 = vrot.lane.b32.xlu0 %v1195, 48
        %v2343 = vpop.permute.xlu0 %2342
        %2344 = vrot.lane.b32.xlu0 %v1196, 48
        %v2345 = vpop.permute.xlu0 %2344
        %2346 = vrot.lane.b32.xlu0 %v1197, 48
        %v2347 = vpop.permute.xlu0 %2346
        %2348 = vrot.lane.b32.xlu0 %v1198, 48
        %v2349 = vpop.permute.xlu0 %2348
        %2350 = vrot.lane.b32.xlu0 %v1199, 48
        %v2351 = vpop.permute.xlu0 %2350
        %2352 = vrot.lane.b32.xlu0 %v1216, 48
        %v2353 = vpop.permute.xlu0 %2352
        %2354 = vrot.lane.b32.xlu0 %v1217, 48
        %v2355 = vpop.permute.xlu0 %2354
        %2356 = vrot.lane.b32.xlu0 %v1218, 48
        %v2357 = vpop.permute.xlu0 %2356
        %2358 = vrot.lane.b32.xlu0 %v1219, 48
        %v2359 = vpop.permute.xlu0 %2358
        %2360 = vrot.lane.b32.xlu0 %v1220, 48
        %v2361 = vpop.permute.xlu0 %2360
        %2362 = vrot.lane.b32.xlu0 %v1221, 48
        %v2363 = vpop.permute.xlu0 %2362
        %2364 = vrot.lane.b32.xlu0 %v1222, 48
        %v2365 = vpop.permute.xlu0 %2364
        %2366 = vrot.lane.b32.xlu0 %v1223, 48
        %v2367 = vpop.permute.xlu0 %2366
        %2368 = vrot.lane.b32.xlu0 %v1224, 48
        %v2369 = vpop.permute.xlu0 %2368
        %2370 = vrot.lane.b32.xlu0 %v1225, 48
        %v2371 = vpop.permute.xlu0 %2370
        %2372 = vrot.lane.b32.xlu0 %v1226, 48
        %v2373 = vpop.permute.xlu0 %2372
        %2374 = vrot.lane.b32.xlu0 %v1227, 48
        %v2375 = vpop.permute.xlu0 %2374
        %2376 = vrot.lane.b32.xlu0 %v1228, 48
        %v2377 = vpop.permute.xlu0 %2376
        %2378 = vrot.lane.b32.xlu0 %v1229, 48
        %v2379 = vpop.permute.xlu0 %2378
        %2380 = vrot.lane.b32.xlu0 %v1230, 48
        %v2381 = vpop.permute.xlu0 %2380
        %2382 = vrot.lane.b32.xlu0 %v1231, 48
        %v2383 = vpop.permute.xlu0 %2382
        %2384 = vrot.lane.b32.xlu0 %v1248, 48
        %v2385 = vpop.permute.xlu0 %2384
        %2386 = vrot.lane.b32.xlu0 %v1249, 48
        %v2387 = vpop.permute.xlu0 %2386
        %2388 = vrot.lane.b32.xlu0 %v1250, 48
        %v2389 = vpop.permute.xlu0 %2388
        %2390 = vrot.lane.b32.xlu0 %v1251, 48
        %v2391 = vpop.permute.xlu0 %2390
        %2392 = vrot.lane.b32.xlu0 %v1252, 48
        %v2393 = vpop.permute.xlu0 %2392
        %2394 = vrot.lane.b32.xlu0 %v1253, 48
        %v2395 = vpop.permute.xlu0 %2394
        %2396 = vrot.lane.b32.xlu0 %v1254, 48
        %v2397 = vpop.permute.xlu0 %2396
        %2398 = vrot.lane.b32.xlu0 %v1255, 48
        %v2399 = vpop.permute.xlu0 %2398
        %2400 = vrot.lane.b32.xlu0 %v1256, 48
        %v2401 = vpop.permute.xlu0 %2400
        %2402 = vrot.lane.b32.xlu0 %v1257, 48
        %v2403 = vpop.permute.xlu0 %2402
        %2404 = vrot.lane.b32.xlu0 %v1258, 48
        %v2405 = vpop.permute.xlu0 %2404
        %2406 = vrot.lane.b32.xlu0 %v1259, 48
        %v2407 = vpop.permute.xlu0 %2406
        %2408 = vrot.lane.b32.xlu0 %v1260, 48
        %v2409 = vpop.permute.xlu0 %2408
        %2410 = vrot.lane.b32.xlu0 %v1261, 48
        %v2411 = vpop.permute.xlu0 %2410
        %2412 = vrot.lane.b32.xlu0 %v1262, 48
        %v2413 = vpop.permute.xlu0 %2412
        %2414 = vrot.lane.b32.xlu0 %v1263, 48
        %v2415 = vpop.permute.xlu0 %2414
        %2480 = vrot.lane.b32.xlu0 %v1152, 56
        %v2481 = vpop.permute.xlu0 %2480
        %2482 = vrot.lane.b32.xlu0 %v1153, 56
        %v2483 = vpop.permute.xlu0 %2482
        %2484 = vrot.lane.b32.xlu0 %v1154, 56
        %v2485 = vpop.permute.xlu0 %2484
        %2486 = vrot.lane.b32.xlu0 %v1155, 56
        %v2487 = vpop.permute.xlu0 %2486
        %2488 = vrot.lane.b32.xlu0 %v1156, 56
        %v2489 = vpop.permute.xlu0 %2488
        %2490 = vrot.lane.b32.xlu0 %v1157, 56
        %v2491 = vpop.permute.xlu0 %2490
        %2492 = vrot.lane.b32.xlu0 %v1158, 56
        %v2493 = vpop.permute.xlu0 %2492
        %2494 = vrot.lane.b32.xlu0 %v1159, 56
        %v2495 = vpop.permute.xlu0 %2494
        %2496 = vrot.lane.b32.xlu0 %v1160, 56
        %v2497 = vpop.permute.xlu0 %2496
        %2498 = vrot.lane.b32.xlu0 %v1161, 56
        %v2499 = vpop.permute.xlu0 %2498
        %2500 = vrot.lane.b32.xlu0 %v1162, 56
        %v2501 = vpop.permute.xlu0 %2500
        %2502 = vrot.lane.b32.xlu0 %v1163, 56
        %v2503 = vpop.permute.xlu0 %2502
        %2504 = vrot.lane.b32.xlu0 %v1164, 56
        %v2505 = vpop.permute.xlu0 %2504
        %2506 = vrot.lane.b32.xlu0 %v1165, 56
        %v2507 = vpop.permute.xlu0 %2506
        %2508 = vrot.lane.b32.xlu0 %v1166, 56
        %v2509 = vpop.permute.xlu0 %2508
        %2510 = vrot.lane.b32.xlu0 %v1167, 56
        %v2511 = vpop.permute.xlu0 %2510
        %2512 = vrot.lane.b32.xlu0 %v1184, 56
        %v2513 = vpop.permute.xlu0 %2512
        %2514 = vrot.lane.b32.xlu0 %v1185, 56
        %v2515 = vpop.permute.xlu0 %2514
        %2516 = vrot.lane.b32.xlu0 %v1186, 56
        %v2517 = vpop.permute.xlu0 %2516
        %2518 = vrot.lane.b32.xlu0 %v1187, 56
        %v2519 = vpop.permute.xlu0 %2518
        %2520 = vrot.lane.b32.xlu0 %v1188, 56
        %v2521 = vpop.permute.xlu0 %2520
        %2522 = vrot.lane.b32.xlu0 %v1189, 56
        %v2523 = vpop.permute.xlu0 %2522
        %2524 = vrot.lane.b32.xlu0 %v1190, 56
        %v2525 = vpop.permute.xlu0 %2524
        %2526 = vrot.lane.b32.xlu0 %v1191, 56
        %v2527 = vpop.permute.xlu0 %2526
        %2528 = vrot.lane.b32.xlu0 %v1192, 56
        %v2529 = vpop.permute.xlu0 %2528
        %2530 = vrot.lane.b32.xlu0 %v1193, 56
        %v2531 = vpop.permute.xlu0 %2530
        %2532 = vrot.lane.b32.xlu0 %v1194, 56
        %v2533 = vpop.permute.xlu0 %2532
        %2534 = vrot.lane.b32.xlu0 %v1195, 56
        %v2535 = vpop.permute.xlu0 %2534
        %2536 = vrot.lane.b32.xlu0 %v1196, 56
        %v2537 = vpop.permute.xlu0 %2536
        %2538 = vrot.lane.b32.xlu0 %v1197, 56
        %v2539 = vpop.permute.xlu0 %2538
        %2540 = vrot.lane.b32.xlu0 %v1198, 56
        %v2541 = vpop.permute.xlu0 %2540
        %2542 = vrot.lane.b32.xlu0 %v1199, 56
        %v2543 = vpop.permute.xlu0 %2542
        %2544 = vrot.lane.b32.xlu0 %v1216, 56
        %v2545 = vpop.permute.xlu0 %2544
        %2546 = vrot.lane.b32.xlu0 %v1217, 56
        %v2547 = vpop.permute.xlu0 %2546
        %2548 = vrot.lane.b32.xlu0 %v1218, 56
        %v2549 = vpop.permute.xlu0 %2548
        %2550 = vrot.lane.b32.xlu0 %v1219, 56
        %v2551 = vpop.permute.xlu0 %2550
        %2552 = vrot.lane.b32.xlu0 %v1220, 56
        %v2553 = vpop.permute.xlu0 %2552
        %2554 = vrot.lane.b32.xlu0 %v1221, 56
        %v2555 = vpop.permute.xlu0 %2554
        %2556 = vrot.lane.b32.xlu0 %v1222, 56
        %v2557 = vpop.permute.xlu0 %2556
        %2558 = vrot.lane.b32.xlu0 %v1223, 56
        %v2559 = vpop.permute.xlu0 %2558
        %2560 = vrot.lane.b32.xlu0 %v1224, 56
        %v2561 = vpop.permute.xlu0 %2560
        %2562 = vrot.lane.b32.xlu0 %v1225, 56
        %v2563 = vpop.permute.xlu0 %2562
        %2564 = vrot.lane.b32.xlu0 %v1226, 56
        %v2565 = vpop.permute.xlu0 %2564
        %2566 = vrot.lane.b32.xlu0 %v1227, 56
        %v2567 = vpop.permute.xlu0 %2566
        %2568 = vrot.lane.b32.xlu0 %v1228, 56
        %v2569 = vpop.permute.xlu0 %2568
        %2570 = vrot.lane.b32.xlu0 %v1229, 56
        %v2571 = vpop.permute.xlu0 %2570
        %2572 = vrot.lane.b32.xlu0 %v1230, 56
        %v2573 = vpop.permute.xlu0 %2572
        %2574 = vrot.lane.b32.xlu0 %v1231, 56
        %v2575 = vpop.permute.xlu0 %2574
        %2576 = vrot.lane.b32.xlu0 %v1248, 56
        %v2577 = vpop.permute.xlu0 %2576
        %2578 = vrot.lane.b32.xlu0 %v1249, 56
        %v2579 = vpop.permute.xlu0 %2578
        %2580 = vrot.lane.b32.xlu0 %v1250, 56
        %v2581 = vpop.permute.xlu0 %2580
        %2582 = vrot.lane.b32.xlu0 %v1251, 56
        %v2583 = vpop.permute.xlu0 %2582
        %2584 = vrot.lane.b32.xlu0 %v1252, 56
        %v2585 = vpop.permute.xlu0 %2584
        %2586 = vrot.lane.b32.xlu0 %v1253, 56
        %v2587 = vpop.permute.xlu0 %2586
        %2588 = vrot.lane.b32.xlu0 %v1254, 56
        %v2589 = vpop.permute.xlu0 %2588
        %2590 = vrot.lane.b32.xlu0 %v1255, 56
        %v2591 = vpop.permute.xlu0 %2590
        %2592 = vrot.lane.b32.xlu0 %v1256, 56
        %v2593 = vpop.permute.xlu0 %2592
        %2594 = vrot.lane.b32.xlu0 %v1257, 56
        %v2595 = vpop.permute.xlu0 %2594
        %2596 = vrot.lane.b32.xlu0 %v1258, 56
        %v2597 = vpop.permute.xlu0 %2596
        %2598 = vrot.lane.b32.xlu0 %v1259, 56
        %v2599 = vpop.permute.xlu0 %2598
        %2600 = vrot.lane.b32.xlu0 %v1260, 56
        %v2601 = vpop.permute.xlu0 %2600
        %2602 = vrot.lane.b32.xlu0 %v1261, 56
        %v2603 = vpop.permute.xlu0 %2602
        %2604 = vrot.lane.b32.xlu0 %v1262, 56
        %v2605 = vpop.permute.xlu0 %2604
        %2606 = vrot.lane.b32.xlu0 %v1263, 56
        %v2607 = vpop.permute.xlu0 %2606
        %2672 = vrot.lane.b32.xlu0 %v1152, 64
        %v2673 = vpop.permute.xlu0 %2672
        %2674 = vrot.lane.b32.xlu0 %v1153, 64
        %v2675 = vpop.permute.xlu0 %2674
        %2676 = vrot.lane.b32.xlu0 %v1154, 64
        %v2677 = vpop.permute.xlu0 %2676
        %2678 = vrot.lane.b32.xlu0 %v1155, 64
        %v2679 = vpop.permute.xlu0 %2678
        %2680 = vrot.lane.b32.xlu0 %v1156, 64
        %v2681 = vpop.permute.xlu0 %2680
        %2682 = vrot.lane.b32.xlu0 %v1157, 64
        %v2683 = vpop.permute.xlu0 %2682
        %2684 = vrot.lane.b32.xlu0 %v1158, 64
        %v2685 = vpop.permute.xlu0 %2684
        %2686 = vrot.lane.b32.xlu0 %v1159, 64
        %v2687 = vpop.permute.xlu0 %2686
        %2688 = vrot.lane.b32.xlu0 %v1160, 64
        %v2689 = vpop.permute.xlu0 %2688
        %2690 = vrot.lane.b32.xlu0 %v1161, 64
        %v2691 = vpop.permute.xlu0 %2690
        %2692 = vrot.lane.b32.xlu0 %v1162, 64
        %v2693 = vpop.permute.xlu0 %2692
        %2694 = vrot.lane.b32.xlu0 %v1163, 64
        %v2695 = vpop.permute.xlu0 %2694
        %2696 = vrot.lane.b32.xlu0 %v1164, 64
        %v2697 = vpop.permute.xlu0 %2696
        %2698 = vrot.lane.b32.xlu0 %v1165, 64
        %v2699 = vpop.permute.xlu0 %2698
        %2700 = vrot.lane.b32.xlu0 %v1166, 64
        %v2701 = vpop.permute.xlu0 %2700
        %2702 = vrot.lane.b32.xlu0 %v1167, 64
        %v2703 = vpop.permute.xlu0 %2702
        %2704 = vrot.lane.b32.xlu0 %v1184, 64
        %v2705 = vpop.permute.xlu0 %2704
        %2706 = vrot.lane.b32.xlu0 %v1185, 64
        %v2707 = vpop.permute.xlu0 %2706
        %2708 = vrot.lane.b32.xlu0 %v1186, 64
        %v2709 = vpop.permute.xlu0 %2708
        %2710 = vrot.lane.b32.xlu0 %v1187, 64
        %v2711 = vpop.permute.xlu0 %2710
        %2712 = vrot.lane.b32.xlu0 %v1188, 64
        %v2713 = vpop.permute.xlu0 %2712
        %2714 = vrot.lane.b32.xlu0 %v1189, 64
        %v2715 = vpop.permute.xlu0 %2714
        %2716 = vrot.lane.b32.xlu0 %v1190, 64
        %v2717 = vpop.permute.xlu0 %2716
        %2718 = vrot.lane.b32.xlu0 %v1191, 64
        %v2719 = vpop.permute.xlu0 %2718
        %2720 = vrot.lane.b32.xlu0 %v1192, 64
        %v2721 = vpop.permute.xlu0 %2720
        %2722 = vrot.lane.b32.xlu0 %v1193, 64
        %v2723 = vpop.permute.xlu0 %2722
        %2724 = vrot.lane.b32.xlu0 %v1194, 64
        %v2725 = vpop.permute.xlu0 %2724
        %2726 = vrot.lane.b32.xlu0 %v1195, 64
        %v2727 = vpop.permute.xlu0 %2726
        %2728 = vrot.lane.b32.xlu0 %v1196, 64
        %v2729 = vpop.permute.xlu0 %2728
        %2730 = vrot.lane.b32.xlu0 %v1197, 64
        %v2731 = vpop.permute.xlu0 %2730
        %2732 = vrot.lane.b32.xlu0 %v1198, 64
        %v2733 = vpop.permute.xlu0 %2732
        %2734 = vrot.lane.b32.xlu0 %v1199, 64
        %v2735 = vpop.permute.xlu0 %2734
        %2736 = vrot.lane.b32.xlu0 %v1216, 64
        %v2737 = vpop.permute.xlu0 %2736
        %2738 = vrot.lane.b32.xlu0 %v1217, 64
        %v2739 = vpop.permute.xlu0 %2738
        %2740 = vrot.lane.b32.xlu0 %v1218, 64
        %v2741 = vpop.permute.xlu0 %2740
        %2742 = vrot.lane.b32.xlu0 %v1219, 64
        %v2743 = vpop.permute.xlu0 %2742
        %2744 = vrot.lane.b32.xlu0 %v1220, 64
        %v2745 = vpop.permute.xlu0 %2744
        %2746 = vrot.lane.b32.xlu0 %v1221, 64
        %v2747 = vpop.permute.xlu0 %2746
        %2748 = vrot.lane.b32.xlu0 %v1222, 64
        %v2749 = vpop.permute.xlu0 %2748
        %2750 = vrot.lane.b32.xlu0 %v1223, 64
        %v2751 = vpop.permute.xlu0 %2750
        %2752 = vrot.lane.b32.xlu0 %v1224, 64
        %v2753 = vpop.permute.xlu0 %2752
        %2754 = vrot.lane.b32.xlu0 %v1225, 64
        %v2755 = vpop.permute.xlu0 %2754
        %2756 = vrot.lane.b32.xlu0 %v1226, 64
        %v2757 = vpop.permute.xlu0 %2756
        %2758 = vrot.lane.b32.xlu0 %v1227, 64
        %v2759 = vpop.permute.xlu0 %2758
        %2760 = vrot.lane.b32.xlu0 %v1228, 64
        %v2761 = vpop.permute.xlu0 %2760
        %2762 = vrot.lane.b32.xlu0 %v1229, 64
        %v2763 = vpop.permute.xlu0 %2762
        %2764 = vrot.lane.b32.xlu0 %v1230, 64
        %v2765 = vpop.permute.xlu0 %2764
        %2766 = vrot.lane.b32.xlu0 %v1231, 64
        %v2767 = vpop.permute.xlu0 %2766
        %2768 = vrot.lane.b32.xlu0 %v1248, 64
        %v2769 = vpop.permute.xlu0 %2768
        %2770 = vrot.lane.b32.xlu0 %v1249, 64
        %v2771 = vpop.permute.xlu0 %2770
        %2772 = vrot.lane.b32.xlu0 %v1250, 64
        %v2773 = vpop.permute.xlu0 %2772
        %2774 = vrot.lane.b32.xlu0 %v1251, 64
        %v2775 = vpop.permute.xlu0 %2774
        %2776 = vrot.lane.b32.xlu0 %v1252, 64
        %v2777 = vpop.permute.xlu0 %2776
        %2778 = vrot.lane.b32.xlu0 %v1253, 64
        %v2779 = vpop.permute.xlu0 %2778
        %2780 = vrot.lane.b32.xlu0 %v1254, 64
        %v2781 = vpop.permute.xlu0 %2780
        %2782 = vrot.lane.b32.xlu0 %v1255, 64
        %v2783 = vpop.permute.xlu0 %2782
        %2784 = vrot.lane.b32.xlu0 %v1256, 64
        %v2785 = vpop.permute.xlu0 %2784
        %2786 = vrot.lane.b32.xlu0 %v1257, 64
        %v2787 = vpop.permute.xlu0 %2786
        %2788 = vrot.lane.b32.xlu0 %v1258, 64
        %v2789 = vpop.permute.xlu0 %2788
        %2790 = vrot.lane.b32.xlu0 %v1259, 64
        %v2791 = vpop.permute.xlu0 %2790
        %2792 = vrot.lane.b32.xlu0 %v1260, 64
        %v2793 = vpop.permute.xlu0 %2792
        %2794 = vrot.lane.b32.xlu0 %v1261, 64
        %v2795 = vpop.permute.xlu0 %2794
        %2796 = vrot.lane.b32.xlu0 %v1262, 64
        %v2797 = vpop.permute.xlu0 %2796
        %2798 = vrot.lane.b32.xlu0 %v1263, 64
        %v2799 = vpop.permute.xlu0 %2798
        %2864 = vrot.lane.b32.xlu0 %v1152, 72
        %v2865 = vpop.permute.xlu0 %2864
        %2866 = vrot.lane.b32.xlu0 %v1153, 72
        %v2867 = vpop.permute.xlu0 %2866
        %2868 = vrot.lane.b32.xlu0 %v1154, 72
        %v2869 = vpop.permute.xlu0 %2868
        %2870 = vrot.lane.b32.xlu0 %v1155, 72
        %v2871 = vpop.permute.xlu0 %2870
        %2872 = vrot.lane.b32.xlu0 %v1156, 72
        %v2873 = vpop.permute.xlu0 %2872
        %2874 = vrot.lane.b32.xlu0 %v1157, 72
        %v2875 = vpop.permute.xlu0 %2874
        %2876 = vrot.lane.b32.xlu0 %v1158, 72
        %v2877 = vpop.permute.xlu0 %2876
        %2878 = vrot.lane.b32.xlu0 %v1159, 72
        %v2879 = vpop.permute.xlu0 %2878
        %2880 = vrot.lane.b32.xlu0 %v1160, 72
        %v2881 = vpop.permute.xlu0 %2880
        %2882 = vrot.lane.b32.xlu0 %v1161, 72
        %v2883 = vpop.permute.xlu0 %2882
        %2884 = vrot.lane.b32.xlu0 %v1162, 72
        %v2885 = vpop.permute.xlu0 %2884
        %2886 = vrot.lane.b32.xlu0 %v1163, 72
        %v2887 = vpop.permute.xlu0 %2886
        %2888 = vrot.lane.b32.xlu0 %v1164, 72
        %v2889 = vpop.permute.xlu0 %2888
        %2890 = vrot.lane.b32.xlu0 %v1165, 72
        %v2891 = vpop.permute.xlu0 %2890
        %2892 = vrot.lane.b32.xlu0 %v1166, 72
        %v2893 = vpop.permute.xlu0 %2892
        %2894 = vrot.lane.b32.xlu0 %v1167, 72
        %v2895 = vpop.permute.xlu0 %2894
        %2896 = vrot.lane.b32.xlu0 %v1184, 72
        %v2897 = vpop.permute.xlu0 %2896
        %2898 = vrot.lane.b32.xlu0 %v1185, 72
        %v2899 = vpop.permute.xlu0 %2898
        %2900 = vrot.lane.b32.xlu0 %v1186, 72
        %v2901 = vpop.permute.xlu0 %2900
        %2902 = vrot.lane.b32.xlu0 %v1187, 72
        %v2903 = vpop.permute.xlu0 %2902
        %2904 = vrot.lane.b32.xlu0 %v1188, 72
        %v2905 = vpop.permute.xlu0 %2904
        %2906 = vrot.lane.b32.xlu0 %v1189, 72
        %v2907 = vpop.permute.xlu0 %2906
        %2908 = vrot.lane.b32.xlu0 %v1190, 72
        %v2909 = vpop.permute.xlu0 %2908
        %2910 = vrot.lane.b32.xlu0 %v1191, 72
        %v2911 = vpop.permute.xlu0 %2910
        %2912 = vrot.lane.b32.xlu0 %v1192, 72
        %v2913 = vpop.permute.xlu0 %2912
        %2914 = vrot.lane.b32.xlu0 %v1193, 72
        %v2915 = vpop.permute.xlu0 %2914
        %2916 = vrot.lane.b32.xlu0 %v1194, 72
        %v2917 = vpop.permute.xlu0 %2916
        %2918 = vrot.lane.b32.xlu0 %v1195, 72
        %v2919 = vpop.permute.xlu0 %2918
        %2920 = vrot.lane.b32.xlu0 %v1196, 72
        %v2921 = vpop.permute.xlu0 %2920
        %2922 = vrot.lane.b32.xlu0 %v1197, 72
        %v2923 = vpop.permute.xlu0 %2922
        %2924 = vrot.lane.b32.xlu0 %v1198, 72
        %v2925 = vpop.permute.xlu0 %2924
        %2926 = vrot.lane.b32.xlu0 %v1199, 72
        %v2927 = vpop.permute.xlu0 %2926
        %2928 = vrot.lane.b32.xlu0 %v1216, 72
        %v2929 = vpop.permute.xlu0 %2928
        %2930 = vrot.lane.b32.xlu0 %v1217, 72
        %v2931 = vpop.permute.xlu0 %2930
        %2932 = vrot.lane.b32.xlu0 %v1218, 72
        %v2933 = vpop.permute.xlu0 %2932
        %2934 = vrot.lane.b32.xlu0 %v1219, 72
        %v2935 = vpop.permute.xlu0 %2934
        %2936 = vrot.lane.b32.xlu0 %v1220, 72
        %v2937 = vpop.permute.xlu0 %2936
        %2938 = vrot.lane.b32.xlu0 %v1221, 72
        %v2939 = vpop.permute.xlu0 %2938
        %2940 = vrot.lane.b32.xlu0 %v1222, 72
        %v2941 = vpop.permute.xlu0 %2940
        %2942 = vrot.lane.b32.xlu0 %v1223, 72
        %v2943 = vpop.permute.xlu0 %2942
        %2944 = vrot.lane.b32.xlu0 %v1224, 72
        %v2945 = vpop.permute.xlu0 %2944
        %2946 = vrot.lane.b32.xlu0 %v1225, 72
        %v2947 = vpop.permute.xlu0 %2946
        %2948 = vrot.lane.b32.xlu0 %v1226, 72
        %v2949 = vpop.permute.xlu0 %2948
        %2950 = vrot.lane.b32.xlu0 %v1227, 72
        %v2951 = vpop.permute.xlu0 %2950
        %2952 = vrot.lane.b32.xlu0 %v1228, 72
        %v2953 = vpop.permute.xlu0 %2952
        %2954 = vrot.lane.b32.xlu0 %v1229, 72
        %v2955 = vpop.permute.xlu0 %2954
        %2956 = vrot.lane.b32.xlu0 %v1230, 72
        %v2957 = vpop.permute.xlu0 %2956
        %2958 = vrot.lane.b32.xlu0 %v1231, 72
        %v2959 = vpop.permute.xlu0 %2958
        %2960 = vrot.lane.b32.xlu0 %v1248, 72
        %v2961 = vpop.permute.xlu0 %2960
        %2962 = vrot.lane.b32.xlu0 %v1249, 72
        %v2963 = vpop.permute.xlu0 %2962
        %2964 = vrot.lane.b32.xlu0 %v1250, 72
        %v2965 = vpop.permute.xlu0 %2964
        %2966 = vrot.lane.b32.xlu0 %v1251, 72
        %v2967 = vpop.permute.xlu0 %2966
        %2968 = vrot.lane.b32.xlu0 %v1252, 72
        %v2969 = vpop.permute.xlu0 %2968
        %2970 = vrot.lane.b32.xlu0 %v1253, 72
        %v2971 = vpop.permute.xlu0 %2970
        %2972 = vrot.lane.b32.xlu0 %v1254, 72
        %v2973 = vpop.permute.xlu0 %2972
        %2974 = vrot.lane.b32.xlu0 %v1255, 72
        %v2975 = vpop.permute.xlu0 %2974
        %2976 = vrot.lane.b32.xlu0 %v1256, 72
        %v2977 = vpop.permute.xlu0 %2976
        %2978 = vrot.lane.b32.xlu0 %v1257, 72
        %v2979 = vpop.permute.xlu0 %2978
        %2980 = vrot.lane.b32.xlu0 %v1258, 72
        %v2981 = vpop.permute.xlu0 %2980
        %2982 = vrot.lane.b32.xlu0 %v1259, 72
        %v2983 = vpop.permute.xlu0 %2982
        %2984 = vrot.lane.b32.xlu0 %v1260, 72
        %v2985 = vpop.permute.xlu0 %2984
        %2986 = vrot.lane.b32.xlu0 %v1261, 72
        %v2987 = vpop.permute.xlu0 %2986
        %2988 = vrot.lane.b32.xlu0 %v1262, 72
        %v2989 = vpop.permute.xlu0 %2988
        %2990 = vrot.lane.b32.xlu0 %v1263, 72
        %v2991 = vpop.permute.xlu0 %2990
        %3056 = vrot.lane.b32.xlu0 %v1152, 80
        %v3057 = vpop.permute.xlu0 %3056
        %3058 = vrot.lane.b32.xlu0 %v1153, 80
        %v3059 = vpop.permute.xlu0 %3058
        %3060 = vrot.lane.b32.xlu0 %v1154, 80
        %v3061 = vpop.permute.xlu0 %3060
        %3062 = vrot.lane.b32.xlu0 %v1155, 80
        %v3063 = vpop.permute.xlu0 %3062
        %3064 = vrot.lane.b32.xlu0 %v1156, 80
        %v3065 = vpop.permute.xlu0 %3064
        %3066 = vrot.lane.b32.xlu0 %v1157, 80
        %v3067 = vpop.permute.xlu0 %3066
        %3068 = vrot.lane.b32.xlu0 %v1158, 80
        %v3069 = vpop.permute.xlu0 %3068
        %3070 = vrot.lane.b32.xlu0 %v1159, 80
        %v3071 = vpop.permute.xlu0 %3070
        %3072 = vrot.lane.b32.xlu0 %v1160, 80
        %v3073 = vpop.permute.xlu0 %3072
        %3074 = vrot.lane.b32.xlu0 %v1161, 80
        %v3075 = vpop.permute.xlu0 %3074
        %3076 = vrot.lane.b32.xlu0 %v1162, 80
        %v3077 = vpop.permute.xlu0 %3076
        %3078 = vrot.lane.b32.xlu0 %v1163, 80
        %v3079 = vpop.permute.xlu0 %3078
        %3080 = vrot.lane.b32.xlu0 %v1164, 80
        %v3081 = vpop.permute.xlu0 %3080
        %3082 = vrot.lane.b32.xlu0 %v1165, 80
        %v3083 = vpop.permute.xlu0 %3082
        %3084 = vrot.lane.b32.xlu0 %v1166, 80
        %v3085 = vpop.permute.xlu0 %3084
        %3086 = vrot.lane.b32.xlu0 %v1167, 80
        %v3087 = vpop.permute.xlu0 %3086
        %3088 = vrot.lane.b32.xlu0 %v1184, 80
        %v3089 = vpop.permute.xlu0 %3088
        %3090 = vrot.lane.b32.xlu0 %v1185, 80
        %v3091 = vpop.permute.xlu0 %3090
        %3092 = vrot.lane.b32.xlu0 %v1186, 80
        %v3093 = vpop.permute.xlu0 %3092
        %3094 = vrot.lane.b32.xlu0 %v1187, 80
        %v3095 = vpop.permute.xlu0 %3094
        %3096 = vrot.lane.b32.xlu0 %v1188, 80
        %v3097 = vpop.permute.xlu0 %3096
        %3098 = vrot.lane.b32.xlu0 %v1189, 80
        %v3099 = vpop.permute.xlu0 %3098
        %3100 = vrot.lane.b32.xlu0 %v1190, 80
        %v3101 = vpop.permute.xlu0 %3100
        %3102 = vrot.lane.b32.xlu0 %v1191, 80
        %v3103 = vpop.permute.xlu0 %3102
        %3104 = vrot.lane.b32.xlu0 %v1192, 80
        %v3105 = vpop.permute.xlu0 %3104
        %3106 = vrot.lane.b32.xlu0 %v1193, 80
        %v3107 = vpop.permute.xlu0 %3106
        %3108 = vrot.lane.b32.xlu0 %v1194, 80
        %v3109 = vpop.permute.xlu0 %3108
        %3110 = vrot.lane.b32.xlu0 %v1195, 80
        %v3111 = vpop.permute.xlu0 %3110
        %3112 = vrot.lane.b32.xlu0 %v1196, 80
        %v3113 = vpop.permute.xlu0 %3112
        %3114 = vrot.lane.b32.xlu0 %v1197, 80
        %v3115 = vpop.permute.xlu0 %3114
        %3116 = vrot.lane.b32.xlu0 %v1198, 80
        %v3117 = vpop.permute.xlu0 %3116
        %3118 = vrot.lane.b32.xlu0 %v1199, 80
        %v3119 = vpop.permute.xlu0 %3118
        %3120 = vrot.lane.b32.xlu0 %v1216, 80
        %v3121 = vpop.permute.xlu0 %3120
        %3122 = vrot.lane.b32.xlu0 %v1217, 80
        %v3123 = vpop.permute.xlu0 %3122
        %3124 = vrot.lane.b32.xlu0 %v1218, 80
        %v3125 = vpop.permute.xlu0 %3124
        %3126 = vrot.lane.b32.xlu0 %v1219, 80
        %v3127 = vpop.permute.xlu0 %3126
        %3128 = vrot.lane.b32.xlu0 %v1220, 80
        %v3129 = vpop.permute.xlu0 %3128
        %3130 = vrot.lane.b32.xlu0 %v1221, 80
        %v3131 = vpop.permute.xlu0 %3130
        %3132 = vrot.lane.b32.xlu0 %v1222, 80
        %v3133 = vpop.permute.xlu0 %3132
        %3134 = vrot.lane.b32.xlu0 %v1223, 80
        %v3135 = vpop.permute.xlu0 %3134
        %3136 = vrot.lane.b32.xlu0 %v1224, 80
        %v3137 = vpop.permute.xlu0 %3136
        %3138 = vrot.lane.b32.xlu0 %v1225, 80
        %v3139 = vpop.permute.xlu0 %3138
        %3140 = vrot.lane.b32.xlu0 %v1226, 80
        %v3141 = vpop.permute.xlu0 %3140
        %3142 = vrot.lane.b32.xlu0 %v1227, 80
        %v3143 = vpop.permute.xlu0 %3142
        %3144 = vrot.lane.b32.xlu0 %v1228, 80
        %v3145 = vpop.permute.xlu0 %3144
        %3146 = vrot.lane.b32.xlu0 %v1229, 80
        %v3147 = vpop.permute.xlu0 %3146
        %3148 = vrot.lane.b32.xlu0 %v1230, 80
        %v3149 = vpop.permute.xlu0 %3148
        %3150 = vrot.lane.b32.xlu0 %v1231, 80
        %v3151 = vpop.permute.xlu0 %3150
        %3152 = vrot.lane.b32.xlu0 %v1248, 80
        %v3153 = vpop.permute.xlu0 %3152
        %3154 = vrot.lane.b32.xlu0 %v1249, 80
        %v3155 = vpop.permute.xlu0 %3154
        %3156 = vrot.lane.b32.xlu0 %v1250, 80
        %v3157 = vpop.permute.xlu0 %3156
        %3158 = vrot.lane.b32.xlu0 %v1251, 80
        %v3159 = vpop.permute.xlu0 %3158
        %3160 = vrot.lane.b32.xlu0 %v1252, 80
        %v3161 = vpop.permute.xlu0 %3160
        %3162 = vrot.lane.b32.xlu0 %v1253, 80
        %v3163 = vpop.permute.xlu0 %3162
        %3164 = vrot.lane.b32.xlu0 %v1254, 80
        %v3165 = vpop.permute.xlu0 %3164
        %3166 = vrot.lane.b32.xlu0 %v1255, 80
        %v3167 = vpop.permute.xlu0 %3166
        %3168 = vrot.lane.b32.xlu0 %v1256, 80
        %v3169 = vpop.permute.xlu0 %3168
        %3170 = vrot.lane.b32.xlu0 %v1257, 80
        %v3171 = vpop.permute.xlu0 %3170
        %3172 = vrot.lane.b32.xlu0 %v1258, 80
        %v3173 = vpop.permute.xlu0 %3172
        %3174 = vrot.lane.b32.xlu0 %v1259, 80
        %v3175 = vpop.permute.xlu0 %3174
        %3176 = vrot.lane.b32.xlu0 %v1260, 80
        %v3177 = vpop.permute.xlu0 %3176
        %3178 = vrot.lane.b32.xlu0 %v1261, 80
        %v3179 = vpop.permute.xlu0 %3178
        %3180 = vrot.lane.b32.xlu0 %v1262, 80
        %v3181 = vpop.permute.xlu0 %3180
        %3182 = vrot.lane.b32.xlu0 %v1263, 80
        %v3183 = vpop.permute.xlu0 %3182
        %3248 = vrot.lane.b32.xlu0 %v1152, 88
        %v3249 = vpop.permute.xlu0 %3248
        %3250 = vrot.lane.b32.xlu0 %v1153, 88
        %v3251 = vpop.permute.xlu0 %3250
        %3252 = vrot.lane.b32.xlu0 %v1154, 88
        %v3253 = vpop.permute.xlu0 %3252
        %3254 = vrot.lane.b32.xlu0 %v1155, 88
        %v3255 = vpop.permute.xlu0 %3254
        %3256 = vrot.lane.b32.xlu0 %v1156, 88
        %v3257 = vpop.permute.xlu0 %3256
        %3258 = vrot.lane.b32.xlu0 %v1157, 88
        %v3259 = vpop.permute.xlu0 %3258
        %3260 = vrot.lane.b32.xlu0 %v1158, 88
        %v3261 = vpop.permute.xlu0 %3260
        %3262 = vrot.lane.b32.xlu0 %v1159, 88
        %v3263 = vpop.permute.xlu0 %3262
        %3264 = vrot.lane.b32.xlu0 %v1160, 88
        %v3265 = vpop.permute.xlu0 %3264
        %3266 = vrot.lane.b32.xlu0 %v1161, 88
        %v3267 = vpop.permute.xlu0 %3266
        %3268 = vrot.lane.b32.xlu0 %v1162, 88
        %v3269 = vpop.permute.xlu0 %3268
        %3270 = vrot.lane.b32.xlu0 %v1163, 88
        %v3271 = vpop.permute.xlu0 %3270
        %3272 = vrot.lane.b32.xlu0 %v1164, 88
        %v3273 = vpop.permute.xlu0 %3272
        %3274 = vrot.lane.b32.xlu0 %v1165, 88
        %v3275 = vpop.permute.xlu0 %3274
        %3276 = vrot.lane.b32.xlu0 %v1166, 88
        %v3277 = vpop.permute.xlu0 %3276
        %3278 = vrot.lane.b32.xlu0 %v1167, 88
        %v3279 = vpop.permute.xlu0 %3278
        %3280 = vrot.lane.b32.xlu0 %v1184, 88
        %v3281 = vpop.permute.xlu0 %3280
        %3282 = vrot.lane.b32.xlu0 %v1185, 88
        %v3283 = vpop.permute.xlu0 %3282
        %3284 = vrot.lane.b32.xlu0 %v1186, 88
        %v3285 = vpop.permute.xlu0 %3284
        %3286 = vrot.lane.b32.xlu0 %v1187, 88
        %v3287 = vpop.permute.xlu0 %3286
        %3288 = vrot.lane.b32.xlu0 %v1188, 88
        %v3289 = vpop.permute.xlu0 %3288
        %3290 = vrot.lane.b32.xlu0 %v1189, 88
        %v3291 = vpop.permute.xlu0 %3290
        %3292 = vrot.lane.b32.xlu0 %v1190, 88
        %v3293 = vpop.permute.xlu0 %3292
        %3294 = vrot.lane.b32.xlu0 %v1191, 88
        %v3295 = vpop.permute.xlu0 %3294
        %3296 = vrot.lane.b32.xlu0 %v1192, 88
        %v3297 = vpop.permute.xlu0 %3296
        %3298 = vrot.lane.b32.xlu0 %v1193, 88
        %v3299 = vpop.permute.xlu0 %3298
        %3300 = vrot.lane.b32.xlu0 %v1194, 88
        %v3301 = vpop.permute.xlu0 %3300
        %3302 = vrot.lane.b32.xlu0 %v1195, 88
        %v3303 = vpop.permute.xlu0 %3302
        %3304 = vrot.lane.b32.xlu0 %v1196, 88
        %v3305 = vpop.permute.xlu0 %3304
        %3306 = vrot.lane.b32.xlu0 %v1197, 88
        %v3307 = vpop.permute.xlu0 %3306
        %3308 = vrot.lane.b32.xlu0 %v1198, 88
        %v3309 = vpop.permute.xlu0 %3308
        %3310 = vrot.lane.b32.xlu0 %v1199, 88
        %v3311 = vpop.permute.xlu0 %3310
        %3312 = vrot.lane.b32.xlu0 %v1216, 88
        %v3313 = vpop.permute.xlu0 %3312
        %3314 = vrot.lane.b32.xlu0 %v1217, 88
        %v3315 = vpop.permute.xlu0 %3314
        %3316 = vrot.lane.b32.xlu0 %v1218, 88
        %v3317 = vpop.permute.xlu0 %3316
        %3318 = vrot.lane.b32.xlu0 %v1219, 88
        %v3319 = vpop.permute.xlu0 %3318
        %3320 = vrot.lane.b32.xlu0 %v1220, 88
        %v3321 = vpop.permute.xlu0 %3320
        %3322 = vrot.lane.b32.xlu0 %v1221, 88
        %v3323 = vpop.permute.xlu0 %3322
        %3324 = vrot.lane.b32.xlu0 %v1222, 88
        %v3325 = vpop.permute.xlu0 %3324
        %3326 = vrot.lane.b32.xlu0 %v1223, 88
        %v3327 = vpop.permute.xlu0 %3326
        %3328 = vrot.lane.b32.xlu0 %v1224, 88
        %v3329 = vpop.permute.xlu0 %3328
        %3330 = vrot.lane.b32.xlu0 %v1225, 88
        %v3331 = vpop.permute.xlu0 %3330
        %3332 = vrot.lane.b32.xlu0 %v1226, 88
        %v3333 = vpop.permute.xlu0 %3332
        %3334 = vrot.lane.b32.xlu0 %v1227, 88
        %v3335 = vpop.permute.xlu0 %3334
        %3336 = vrot.lane.b32.xlu0 %v1228, 88
        %v3337 = vpop.permute.xlu0 %3336
        %3338 = vrot.lane.b32.xlu0 %v1229, 88
        %v3339 = vpop.permute.xlu0 %3338
        %3340 = vrot.lane.b32.xlu0 %v1230, 88
        %v3341 = vpop.permute.xlu0 %3340
        %3342 = vrot.lane.b32.xlu0 %v1231, 88
        %v3343 = vpop.permute.xlu0 %3342
        %3344 = vrot.lane.b32.xlu0 %v1248, 88
        %v3345 = vpop.permute.xlu0 %3344
        %3346 = vrot.lane.b32.xlu0 %v1249, 88
        %v3347 = vpop.permute.xlu0 %3346
        %3348 = vrot.lane.b32.xlu0 %v1250, 88
        %v3349 = vpop.permute.xlu0 %3348
        %3350 = vrot.lane.b32.xlu0 %v1251, 88
        %v3351 = vpop.permute.xlu0 %3350
        %3352 = vrot.lane.b32.xlu0 %v1252, 88
        %v3353 = vpop.permute.xlu0 %3352
        %3354 = vrot.lane.b32.xlu0 %v1253, 88
        %v3355 = vpop.permute.xlu0 %3354
        %3356 = vrot.lane.b32.xlu0 %v1254, 88
        %v3357 = vpop.permute.xlu0 %3356
        %3358 = vrot.lane.b32.xlu0 %v1255, 88
        %v3359 = vpop.permute.xlu0 %3358
        %3360 = vrot.lane.b32.xlu0 %v1256, 88
        %v3361 = vpop.permute.xlu0 %3360
        %3362 = vrot.lane.b32.xlu0 %v1257, 88
        %v3363 = vpop.permute.xlu0 %3362
        %3364 = vrot.lane.b32.xlu0 %v1258, 88
        %v3365 = vpop.permute.xlu0 %3364
        %3366 = vrot.lane.b32.xlu0 %v1259, 88
        %v3367 = vpop.permute.xlu0 %3366
        %3368 = vrot.lane.b32.xlu0 %v1260, 88
        %v3369 = vpop.permute.xlu0 %3368
        %3370 = vrot.lane.b32.xlu0 %v1261, 88
        %v3371 = vpop.permute.xlu0 %3370
        %3372 = vrot.lane.b32.xlu0 %v1262, 88
        %v3373 = vpop.permute.xlu0 %3372
        %3374 = vrot.lane.b32.xlu0 %v1263, 88
        %v3375 = vpop.permute.xlu0 %3374
        %3440 = vrot.lane.b32.xlu0 %v1152, 96
        %v3441 = vpop.permute.xlu0 %3440
        %3442 = vrot.lane.b32.xlu0 %v1153, 96
        %v3443 = vpop.permute.xlu0 %3442
        %3444 = vrot.lane.b32.xlu0 %v1154, 96
        %v3445 = vpop.permute.xlu0 %3444
        %3446 = vrot.lane.b32.xlu0 %v1155, 96
        %v3447 = vpop.permute.xlu0 %3446
        %3448 = vrot.lane.b32.xlu0 %v1156, 96
        %v3449 = vpop.permute.xlu0 %3448
        %3450 = vrot.lane.b32.xlu0 %v1157, 96
        %v3451 = vpop.permute.xlu0 %3450
        %3452 = vrot.lane.b32.xlu0 %v1158, 96
        %v3453 = vpop.permute.xlu0 %3452
        %3454 = vrot.lane.b32.xlu0 %v1159, 96
        %v3455 = vpop.permute.xlu0 %3454
        %3456 = vrot.lane.b32.xlu0 %v1160, 96
        %v3457 = vpop.permute.xlu0 %3456
        %3458 = vrot.lane.b32.xlu0 %v1161, 96
        %v3459 = vpop.permute.xlu0 %3458
        %3460 = vrot.lane.b32.xlu0 %v1162, 96
        %v3461 = vpop.permute.xlu0 %3460
        %3462 = vrot.lane.b32.xlu0 %v1163, 96
        %v3463 = vpop.permute.xlu0 %3462
        %3464 = vrot.lane.b32.xlu0 %v1164, 96
        %v3465 = vpop.permute.xlu0 %3464
        %3466 = vrot.lane.b32.xlu0 %v1165, 96
        %v3467 = vpop.permute.xlu0 %3466
        %3468 = vrot.lane.b32.xlu0 %v1166, 96
        %v3469 = vpop.permute.xlu0 %3468
        %3470 = vrot.lane.b32.xlu0 %v1167, 96
        %v3471 = vpop.permute.xlu0 %3470
        %3472 = vrot.lane.b32.xlu0 %v1184, 96
        %v3473 = vpop.permute.xlu0 %3472
        %3474 = vrot.lane.b32.xlu0 %v1185, 96
        %v3475 = vpop.permute.xlu0 %3474
        %3476 = vrot.lane.b32.xlu0 %v1186, 96
        %v3477 = vpop.permute.xlu0 %3476
        %3478 = vrot.lane.b32.xlu0 %v1187, 96
        %v3479 = vpop.permute.xlu0 %3478
        %3480 = vrot.lane.b32.xlu0 %v1188, 96
        %v3481 = vpop.permute.xlu0 %3480
        %3482 = vrot.lane.b32.xlu0 %v1189, 96
        %v3483 = vpop.permute.xlu0 %3482
        %3484 = vrot.lane.b32.xlu0 %v1190, 96
        %v3485 = vpop.permute.xlu0 %3484
        %3486 = vrot.lane.b32.xlu0 %v1191, 96
        %v3487 = vpop.permute.xlu0 %3486
        %3488 = vrot.lane.b32.xlu0 %v1192, 96
        %v3489 = vpop.permute.xlu0 %3488
        %3490 = vrot.lane.b32.xlu0 %v1193, 96
        %v3491 = vpop.permute.xlu0 %3490
        %3492 = vrot.lane.b32.xlu0 %v1194, 96
        %v3493 = vpop.permute.xlu0 %3492
        %3494 = vrot.lane.b32.xlu0 %v1195, 96
        %v3495 = vpop.permute.xlu0 %3494
        %3496 = vrot.lane.b32.xlu0 %v1196, 96
        %v3497 = vpop.permute.xlu0 %3496
        %3498 = vrot.lane.b32.xlu0 %v1197, 96
        %v3499 = vpop.permute.xlu0 %3498
        %3500 = vrot.lane.b32.xlu0 %v1198, 96
        %v3501 = vpop.permute.xlu0 %3500
        %3502 = vrot.lane.b32.xlu0 %v1199, 96
        %v3503 = vpop.permute.xlu0 %3502
        %3504 = vrot.lane.b32.xlu0 %v1216, 96
        %v3505 = vpop.permute.xlu0 %3504
        %3506 = vrot.lane.b32.xlu0 %v1217, 96
        %v3507 = vpop.permute.xlu0 %3506
        %3508 = vrot.lane.b32.xlu0 %v1218, 96
        %v3509 = vpop.permute.xlu0 %3508
        %3510 = vrot.lane.b32.xlu0 %v1219, 96
        %v3511 = vpop.permute.xlu0 %3510
        %3512 = vrot.lane.b32.xlu0 %v1220, 96
        %v3513 = vpop.permute.xlu0 %3512
        %3514 = vrot.lane.b32.xlu0 %v1221, 96
        %v3515 = vpop.permute.xlu0 %3514
        %3516 = vrot.lane.b32.xlu0 %v1222, 96
        %v3517 = vpop.permute.xlu0 %3516
        %3518 = vrot.lane.b32.xlu0 %v1223, 96
        %v3519 = vpop.permute.xlu0 %3518
        %3520 = vrot.lane.b32.xlu0 %v1224, 96
        %v3521 = vpop.permute.xlu0 %3520
        %3522 = vrot.lane.b32.xlu0 %v1225, 96
        %v3523 = vpop.permute.xlu0 %3522
        %3524 = vrot.lane.b32.xlu0 %v1226, 96
        %v3525 = vpop.permute.xlu0 %3524
        %3526 = vrot.lane.b32.xlu0 %v1227, 96
        %v3527 = vpop.permute.xlu0 %3526
        %3528 = vrot.lane.b32.xlu0 %v1228, 96
        %v3529 = vpop.permute.xlu0 %3528
        %3530 = vrot.lane.b32.xlu0 %v1229, 96
        %v3531 = vpop.permute.xlu0 %3530
        %3532 = vrot.lane.b32.xlu0 %v1230, 96
        %v3533 = vpop.permute.xlu0 %3532
        %3534 = vrot.lane.b32.xlu0 %v1231, 96
        %v3535 = vpop.permute.xlu0 %3534
        %3536 = vrot.lane.b32.xlu0 %v1248, 96
        %v3537 = vpop.permute.xlu0 %3536
        %3538 = vrot.lane.b32.xlu0 %v1249, 96
        %v3539 = vpop.permute.xlu0 %3538
        %3540 = vrot.lane.b32.xlu0 %v1250, 96
        %v3541 = vpop.permute.xlu0 %3540
        %3542 = vrot.lane.b32.xlu0 %v1251, 96
        %v3543 = vpop.permute.xlu0 %3542
        %3544 = vrot.lane.b32.xlu0 %v1252, 96
        %v3545 = vpop.permute.xlu0 %3544
        %3546 = vrot.lane.b32.xlu0 %v1253, 96
        %v3547 = vpop.permute.xlu0 %3546
        %3548 = vrot.lane.b32.xlu0 %v1254, 96
        %v3549 = vpop.permute.xlu0 %3548
        %3550 = vrot.lane.b32.xlu0 %v1255, 96
        %v3551 = vpop.permute.xlu0 %3550
        %3552 = vrot.lane.b32.xlu0 %v1256, 96
        %v3553 = vpop.permute.xlu0 %3552
        %3554 = vrot.lane.b32.xlu0 %v1257, 96
        %v3555 = vpop.permute.xlu0 %3554
        %3556 = vrot.lane.b32.xlu0 %v1258, 96
        %v3557 = vpop.permute.xlu0 %3556
        %3558 = vrot.lane.b32.xlu0 %v1259, 96
        %v3559 = vpop.permute.xlu0 %3558
        %3560 = vrot.lane.b32.xlu0 %v1260, 96
        %v3561 = vpop.permute.xlu0 %3560
        %3562 = vrot.lane.b32.xlu0 %v1261, 96
        %v3563 = vpop.permute.xlu0 %3562
        %3564 = vrot.lane.b32.xlu0 %v1262, 96
        %v3565 = vpop.permute.xlu0 %3564
        %3566 = vrot.lane.b32.xlu0 %v1263, 96
        %v3567 = vpop.permute.xlu0 %3566
        %3632 = vrot.lane.b32.xlu0 %v1152, 104
        %v3633 = vpop.permute.xlu0 %3632
        %3634 = vrot.lane.b32.xlu0 %v1153, 104
        %v3635 = vpop.permute.xlu0 %3634
        %3636 = vrot.lane.b32.xlu0 %v1154, 104
        %v3637 = vpop.permute.xlu0 %3636
        %3638 = vrot.lane.b32.xlu0 %v1155, 104
        %v3639 = vpop.permute.xlu0 %3638
        %3640 = vrot.lane.b32.xlu0 %v1156, 104
        %v3641 = vpop.permute.xlu0 %3640
        %3642 = vrot.lane.b32.xlu0 %v1157, 104
        %v3643 = vpop.permute.xlu0 %3642
        %3644 = vrot.lane.b32.xlu0 %v1158, 104
        %v3645 = vpop.permute.xlu0 %3644
        %3646 = vrot.lane.b32.xlu0 %v1159, 104
        %v3647 = vpop.permute.xlu0 %3646
        %3648 = vrot.lane.b32.xlu0 %v1160, 104
        %v3649 = vpop.permute.xlu0 %3648
        %3650 = vrot.lane.b32.xlu0 %v1161, 104
        %v3651 = vpop.permute.xlu0 %3650
        %3652 = vrot.lane.b32.xlu0 %v1162, 104
        %v3653 = vpop.permute.xlu0 %3652
        %3654 = vrot.lane.b32.xlu0 %v1163, 104
        %v3655 = vpop.permute.xlu0 %3654
        %3656 = vrot.lane.b32.xlu0 %v1164, 104
        %v3657 = vpop.permute.xlu0 %3656
        %3658 = vrot.lane.b32.xlu0 %v1165, 104
        %v3659 = vpop.permute.xlu0 %3658
        %3660 = vrot.lane.b32.xlu0 %v1166, 104
        %v3661 = vpop.permute.xlu0 %3660
        %3662 = vrot.lane.b32.xlu0 %v1167, 104
        %v3663 = vpop.permute.xlu0 %3662
        %3664 = vrot.lane.b32.xlu0 %v1184, 104
        %v3665 = vpop.permute.xlu0 %3664
        %3666 = vrot.lane.b32.xlu0 %v1185, 104
        %v3667 = vpop.permute.xlu0 %3666
        %3668 = vrot.lane.b32.xlu0 %v1186, 104
        %v3669 = vpop.permute.xlu0 %3668
        %3670 = vrot.lane.b32.xlu0 %v1187, 104
        %v3671 = vpop.permute.xlu0 %3670
        %3672 = vrot.lane.b32.xlu0 %v1188, 104
        %v3673 = vpop.permute.xlu0 %3672
        %3674 = vrot.lane.b32.xlu0 %v1189, 104
        %v3675 = vpop.permute.xlu0 %3674
        %3676 = vrot.lane.b32.xlu0 %v1190, 104
        %v3677 = vpop.permute.xlu0 %3676
        %3678 = vrot.lane.b32.xlu0 %v1191, 104
        %v3679 = vpop.permute.xlu0 %3678
        %3680 = vrot.lane.b32.xlu0 %v1192, 104
        %v3681 = vpop.permute.xlu0 %3680
        %3682 = vrot.lane.b32.xlu0 %v1193, 104
        %v3683 = vpop.permute.xlu0 %3682
        %3684 = vrot.lane.b32.xlu0 %v1194, 104
        %v3685 = vpop.permute.xlu0 %3684
        %3686 = vrot.lane.b32.xlu0 %v1195, 104
        %v3687 = vpop.permute.xlu0 %3686
        %3688 = vrot.lane.b32.xlu0 %v1196, 104
        %v3689 = vpop.permute.xlu0 %3688
        %3690 = vrot.lane.b32.xlu0 %v1197, 104
        %v3691 = vpop.permute.xlu0 %3690
        %3692 = vrot.lane.b32.xlu0 %v1198, 104
        %v3693 = vpop.permute.xlu0 %3692
        %3694 = vrot.lane.b32.xlu0 %v1199, 104
        %v3695 = vpop.permute.xlu0 %3694
        %3696 = vrot.lane.b32.xlu0 %v1216, 104
        %v3697 = vpop.permute.xlu0 %3696
        %3698 = vrot.lane.b32.xlu0 %v1217, 104
        %v3699 = vpop.permute.xlu0 %3698
        %3700 = vrot.lane.b32.xlu0 %v1218, 104
        %v3701 = vpop.permute.xlu0 %3700
        %3702 = vrot.lane.b32.xlu0 %v1219, 104
        %v3703 = vpop.permute.xlu0 %3702
        %3704 = vrot.lane.b32.xlu0 %v1220, 104
        %v3705 = vpop.permute.xlu0 %3704
        %3706 = vrot.lane.b32.xlu0 %v1221, 104
        %v3707 = vpop.permute.xlu0 %3706
        %3708 = vrot.lane.b32.xlu0 %v1222, 104
        %v3709 = vpop.permute.xlu0 %3708
        %3710 = vrot.lane.b32.xlu0 %v1223, 104
        %v3711 = vpop.permute.xlu0 %3710
        %3712 = vrot.lane.b32.xlu0 %v1224, 104
        %v3713 = vpop.permute.xlu0 %3712
        %3714 = vrot.lane.b32.xlu0 %v1225, 104
        %v3715 = vpop.permute.xlu0 %3714
        %3716 = vrot.lane.b32.xlu0 %v1226, 104
        %v3717 = vpop.permute.xlu0 %3716
        %3718 = vrot.lane.b32.xlu0 %v1227, 104
        %v3719 = vpop.permute.xlu0 %3718
        %3720 = vrot.lane.b32.xlu0 %v1228, 104
        %v3721 = vpop.permute.xlu0 %3720
        %3722 = vrot.lane.b32.xlu0 %v1229, 104
        %v3723 = vpop.permute.xlu0 %3722
        %3724 = vrot.lane.b32.xlu0 %v1230, 104
        %v3725 = vpop.permute.xlu0 %3724
        %3726 = vrot.lane.b32.xlu0 %v1231, 104
        %v3727 = vpop.permute.xlu0 %3726
        %3728 = vrot.lane.b32.xlu0 %v1248, 104
        %v3729 = vpop.permute.xlu0 %3728
        %3730 = vrot.lane.b32.xlu0 %v1249, 104
        %v3731 = vpop.permute.xlu0 %3730
        %3732 = vrot.lane.b32.xlu0 %v1250, 104
        %v3733 = vpop.permute.xlu0 %3732
        %3734 = vrot.lane.b32.xlu0 %v1251, 104
        %v3735 = vpop.permute.xlu0 %3734
        %3736 = vrot.lane.b32.xlu0 %v1252, 104
        %v3737 = vpop.permute.xlu0 %3736
        %3738 = vrot.lane.b32.xlu0 %v1253, 104
        %v3739 = vpop.permute.xlu0 %3738
        %3740 = vrot.lane.b32.xlu0 %v1254, 104
        %v3741 = vpop.permute.xlu0 %3740
        %3742 = vrot.lane.b32.xlu0 %v1255, 104
        %v3743 = vpop.permute.xlu0 %3742
        %3744 = vrot.lane.b32.xlu0 %v1256, 104
        %v3745 = vpop.permute.xlu0 %3744
        %3746 = vrot.lane.b32.xlu0 %v1257, 104
        %v3747 = vpop.permute.xlu0 %3746
        %3748 = vrot.lane.b32.xlu0 %v1258, 104
        %v3749 = vpop.permute.xlu0 %3748
        %3750 = vrot.lane.b32.xlu0 %v1259, 104
        %v3751 = vpop.permute.xlu0 %3750
        %3752 = vrot.lane.b32.xlu0 %v1260, 104
        %v3753 = vpop.permute.xlu0 %3752
        %3754 = vrot.lane.b32.xlu0 %v1261, 104
        %v3755 = vpop.permute.xlu0 %3754
        %3756 = vrot.lane.b32.xlu0 %v1262, 104
        %v3757 = vpop.permute.xlu0 %3756
        %3758 = vrot.lane.b32.xlu0 %v1263, 104
        %v3759 = vpop.permute.xlu0 %3758
        %3824 = vrot.lane.b32.xlu0 %v1152, 112
        %v3825 = vpop.permute.xlu0 %3824
        %3826 = vrot.lane.b32.xlu0 %v1153, 112
        %v3827 = vpop.permute.xlu0 %3826
        %3828 = vrot.lane.b32.xlu0 %v1154, 112
        %v3829 = vpop.permute.xlu0 %3828
        %3830 = vrot.lane.b32.xlu0 %v1155, 112
        %v3831 = vpop.permute.xlu0 %3830
        %3832 = vrot.lane.b32.xlu0 %v1156, 112
        %v3833 = vpop.permute.xlu0 %3832
        %3834 = vrot.lane.b32.xlu0 %v1157, 112
        %v3835 = vpop.permute.xlu0 %3834
        %3836 = vrot.lane.b32.xlu0 %v1158, 112
        %v3837 = vpop.permute.xlu0 %3836
        %3838 = vrot.lane.b32.xlu0 %v1159, 112
        %v3839 = vpop.permute.xlu0 %3838
        %3840 = vrot.lane.b32.xlu0 %v1160, 112
        %v3841 = vpop.permute.xlu0 %3840
        %3842 = vrot.lane.b32.xlu0 %v1161, 112
        %v3843 = vpop.permute.xlu0 %3842
        %3844 = vrot.lane.b32.xlu0 %v1162, 112
        %v3845 = vpop.permute.xlu0 %3844
        %3846 = vrot.lane.b32.xlu0 %v1163, 112
        %v3847 = vpop.permute.xlu0 %3846
        %3848 = vrot.lane.b32.xlu0 %v1164, 112
        %v3849 = vpop.permute.xlu0 %3848
        %3850 = vrot.lane.b32.xlu0 %v1165, 112
        %v3851 = vpop.permute.xlu0 %3850
        %3852 = vrot.lane.b32.xlu0 %v1166, 112
        %v3853 = vpop.permute.xlu0 %3852
        %3854 = vrot.lane.b32.xlu0 %v1167, 112
        %v3855 = vpop.permute.xlu0 %3854
        %3856 = vrot.lane.b32.xlu0 %v1184, 112
        %v3857 = vpop.permute.xlu0 %3856
        %3858 = vrot.lane.b32.xlu0 %v1185, 112
        %v3859 = vpop.permute.xlu0 %3858
        %3860 = vrot.lane.b32.xlu0 %v1186, 112
        %v3861 = vpop.permute.xlu0 %3860
        %3862 = vrot.lane.b32.xlu0 %v1187, 112
        %v3863 = vpop.permute.xlu0 %3862
        %3864 = vrot.lane.b32.xlu0 %v1188, 112
        %v3865 = vpop.permute.xlu0 %3864
        %3866 = vrot.lane.b32.xlu0 %v1189, 112
        %v3867 = vpop.permute.xlu0 %3866
        %3868 = vrot.lane.b32.xlu0 %v1190, 112
        %v3869 = vpop.permute.xlu0 %3868
        %3870 = vrot.lane.b32.xlu0 %v1191, 112
        %v3871 = vpop.permute.xlu0 %3870
        %3872 = vrot.lane.b32.xlu0 %v1192, 112
        %v3873 = vpop.permute.xlu0 %3872
        %3874 = vrot.lane.b32.xlu0 %v1193, 112
        %v3875 = vpop.permute.xlu0 %3874
        %3876 = vrot.lane.b32.xlu0 %v1194, 112
        %v3877 = vpop.permute.xlu0 %3876
        %3878 = vrot.lane.b32.xlu0 %v1195, 112
        %v3879 = vpop.permute.xlu0 %3878
        %3880 = vrot.lane.b32.xlu0 %v1196, 112
        %v3881 = vpop.permute.xlu0 %3880
        %3882 = vrot.lane.b32.xlu0 %v1197, 112
        %v3883 = vpop.permute.xlu0 %3882
        %3884 = vrot.lane.b32.xlu0 %v1198, 112
        %v3885 = vpop.permute.xlu0 %3884
        %3886 = vrot.lane.b32.xlu0 %v1199, 112
        %v3887 = vpop.permute.xlu0 %3886
        %3888 = vrot.lane.b32.xlu0 %v1216, 112
        %v3889 = vpop.permute.xlu0 %3888
        %3890 = vrot.lane.b32.xlu0 %v1217, 112
        %v3891 = vpop.permute.xlu0 %3890
        %3892 = vrot.lane.b32.xlu0 %v1218, 112
        %v3893 = vpop.permute.xlu0 %3892
        %3894 = vrot.lane.b32.xlu0 %v1219, 112
        %v3895 = vpop.permute.xlu0 %3894
        %3896 = vrot.lane.b32.xlu0 %v1220, 112
        %v3897 = vpop.permute.xlu0 %3896
        %3898 = vrot.lane.b32.xlu0 %v1221, 112
        %v3899 = vpop.permute.xlu0 %3898
        %3900 = vrot.lane.b32.xlu0 %v1222, 112
        %v3901 = vpop.permute.xlu0 %3900
        %3902 = vrot.lane.b32.xlu0 %v1223, 112
        %v3903 = vpop.permute.xlu0 %3902
        %3904 = vrot.lane.b32.xlu0 %v1224, 112
        %v3905 = vpop.permute.xlu0 %3904
        %3906 = vrot.lane.b32.xlu0 %v1225, 112
        %v3907 = vpop.permute.xlu0 %3906
        %3908 = vrot.lane.b32.xlu0 %v1226, 112
        %v3909 = vpop.permute.xlu0 %3908
        %3910 = vrot.lane.b32.xlu0 %v1227, 112
        %v3911 = vpop.permute.xlu0 %3910
        %3912 = vrot.lane.b32.xlu0 %v1228, 112
        %v3913 = vpop.permute.xlu0 %3912
        %3914 = vrot.lane.b32.xlu0 %v1229, 112
        %v3915 = vpop.permute.xlu0 %3914
        %3916 = vrot.lane.b32.xlu0 %v1230, 112
        %v3917 = vpop.permute.xlu0 %3916
        %3918 = vrot.lane.b32.xlu0 %v1231, 112
        %v3919 = vpop.permute.xlu0 %3918
        %3920 = vrot.lane.b32.xlu0 %v1248, 112
        %v3921 = vpop.permute.xlu0 %3920
        %3922 = vrot.lane.b32.xlu0 %v1249, 112
        %v3923 = vpop.permute.xlu0 %3922
        %3924 = vrot.lane.b32.xlu0 %v1250, 112
        %v3925 = vpop.permute.xlu0 %3924
        %3926 = vrot.lane.b32.xlu0 %v1251, 112
        %v3927 = vpop.permute.xlu0 %3926
        %3928 = vrot.lane.b32.xlu0 %v1252, 112
        %v3929 = vpop.permute.xlu0 %3928
        %3930 = vrot.lane.b32.xlu0 %v1253, 112
        %v3931 = vpop.permute.xlu0 %3930
        %3932 = vrot.lane.b32.xlu0 %v1254, 112
        %v3933 = vpop.permute.xlu0 %3932
        %3934 = vrot.lane.b32.xlu0 %v1255, 112
        %v3935 = vpop.permute.xlu0 %3934
        %3936 = vrot.lane.b32.xlu0 %v1256, 112
        %v3937 = vpop.permute.xlu0 %3936
        %3938 = vrot.lane.b32.xlu0 %v1257, 112
        %v3939 = vpop.permute.xlu0 %3938
        %3940 = vrot.lane.b32.xlu0 %v1258, 112
        %v3941 = vpop.permute.xlu0 %3940
        %3942 = vrot.lane.b32.xlu0 %v1259, 112
        %v3943 = vpop.permute.xlu0 %3942
        %3944 = vrot.lane.b32.xlu0 %v1260, 112
        %v3945 = vpop.permute.xlu0 %3944
        %3946 = vrot.lane.b32.xlu0 %v1261, 112
        %v3947 = vpop.permute.xlu0 %3946
        %3948 = vrot.lane.b32.xlu0 %v1262, 112
        %v3949 = vpop.permute.xlu0 %3948
        %3950 = vrot.lane.b32.xlu0 %v1263, 112
        %v3951 = vpop.permute.xlu0 %3950
        %4016 = vrot.lane.b32.xlu0 %v1152, 120
        %v4017 = vpop.permute.xlu0 %4016
        %4018 = vrot.lane.b32.xlu0 %v1153, 120
        %v4019 = vpop.permute.xlu0 %4018
        %4020 = vrot.lane.b32.xlu0 %v1154, 120
        %v4021 = vpop.permute.xlu0 %4020
        %4022 = vrot.lane.b32.xlu0 %v1155, 120
        %v4023 = vpop.permute.xlu0 %4022
        %4024 = vrot.lane.b32.xlu0 %v1156, 120
        %v4025 = vpop.permute.xlu0 %4024
        %4026 = vrot.lane.b32.xlu0 %v1157, 120
        %v4027 = vpop.permute.xlu0 %4026
        %4028 = vrot.lane.b32.xlu0 %v1158, 120
        %v4029 = vpop.permute.xlu0 %4028
        %4030 = vrot.lane.b32.xlu0 %v1159, 120
        %v4031 = vpop.permute.xlu0 %4030
        %4032 = vrot.lane.b32.xlu0 %v1160, 120
        %v4033 = vpop.permute.xlu0 %4032
        %4034 = vrot.lane.b32.xlu0 %v1161, 120
        %v4035 = vpop.permute.xlu0 %4034
        %4036 = vrot.lane.b32.xlu0 %v1162, 120
        %v4037 = vpop.permute.xlu0 %4036
        %4038 = vrot.lane.b32.xlu0 %v1163, 120
        %v4039 = vpop.permute.xlu0 %4038
        %4040 = vrot.lane.b32.xlu0 %v1164, 120
        %v4041 = vpop.permute.xlu0 %4040
        %4042 = vrot.lane.b32.xlu0 %v1165, 120
        %v4043 = vpop.permute.xlu0 %4042
        %4044 = vrot.lane.b32.xlu0 %v1166, 120
        %v4045 = vpop.permute.xlu0 %4044
        %4046 = vrot.lane.b32.xlu0 %v1167, 120
        %v4047 = vpop.permute.xlu0 %4046
        %4048 = vrot.lane.b32.xlu0 %v1184, 120
        %v4049 = vpop.permute.xlu0 %4048
        %4050 = vrot.lane.b32.xlu0 %v1185, 120
        %v4051 = vpop.permute.xlu0 %4050
        %4052 = vrot.lane.b32.xlu0 %v1186, 120
        %v4053 = vpop.permute.xlu0 %4052
        %4054 = vrot.lane.b32.xlu0 %v1187, 120
        %v4055 = vpop.permute.xlu0 %4054
        %4056 = vrot.lane.b32.xlu0 %v1188, 120
        %v4057 = vpop.permute.xlu0 %4056
        %4058 = vrot.lane.b32.xlu0 %v1189, 120
        %v4059 = vpop.permute.xlu0 %4058
        %4060 = vrot.lane.b32.xlu0 %v1190, 120
        %v4061 = vpop.permute.xlu0 %4060
        %4062 = vrot.lane.b32.xlu0 %v1191, 120
        %v4063 = vpop.permute.xlu0 %4062
        %4064 = vrot.lane.b32.xlu0 %v1192, 120
        %v4065 = vpop.permute.xlu0 %4064
        %4066 = vrot.lane.b32.xlu0 %v1193, 120
        %v4067 = vpop.permute.xlu0 %4066
        %4068 = vrot.lane.b32.xlu0 %v1194, 120
        %v4069 = vpop.permute.xlu0 %4068
        %4070 = vrot.lane.b32.xlu0 %v1195, 120
        %v4071 = vpop.permute.xlu0 %4070
        %4072 = vrot.lane.b32.xlu0 %v1196, 120
        %v4073 = vpop.permute.xlu0 %4072
        %4074 = vrot.lane.b32.xlu0 %v1197, 120
        %v4075 = vpop.permute.xlu0 %4074
        %4076 = vrot.lane.b32.xlu0 %v1198, 120
        %v4077 = vpop.permute.xlu0 %4076
        %4078 = vrot.lane.b32.xlu0 %v1199, 120
        %v4079 = vpop.permute.xlu0 %4078
        %4080 = vrot.lane.b32.xlu0 %v1216, 120
        %v4081 = vpop.permute.xlu0 %4080
        %4082 = vrot.lane.b32.xlu0 %v1217, 120
        %v4083 = vpop.permute.xlu0 %4082
        %4084 = vrot.lane.b32.xlu0 %v1218, 120
        %v4085 = vpop.permute.xlu0 %4084
        %4086 = vrot.lane.b32.xlu0 %v1219, 120
        %v4087 = vpop.permute.xlu0 %4086
        %4088 = vrot.lane.b32.xlu0 %v1220, 120
        %v4089 = vpop.permute.xlu0 %4088
        %4090 = vrot.lane.b32.xlu0 %v1221, 120
        %v4091 = vpop.permute.xlu0 %4090
        %4092 = vrot.lane.b32.xlu0 %v1222, 120
        %v4093 = vpop.permute.xlu0 %4092
        %4094 = vrot.lane.b32.xlu0 %v1223, 120
        %v4095 = vpop.permute.xlu0 %4094
        %4096 = vrot.lane.b32.xlu0 %v1224, 120
        %v4097 = vpop.permute.xlu0 %4096
        %4098 = vrot.lane.b32.xlu0 %v1225, 120
        %v4099 = vpop.permute.xlu0 %4098
        %4100 = vrot.lane.b32.xlu0 %v1226, 120
        %v4101 = vpop.permute.xlu0 %4100
        %4102 = vrot.lane.b32.xlu0 %v1227, 120
        %v4103 = vpop.permute.xlu0 %4102
        %4104 = vrot.lane.b32.xlu0 %v1228, 120
        %v4105 = vpop.permute.xlu0 %4104
        %4106 = vrot.lane.b32.xlu0 %v1229, 120
        %v4107 = vpop.permute.xlu0 %4106
        %4108 = vrot.lane.b32.xlu0 %v1230, 120
        %v4109 = vpop.permute.xlu0 %4108
        %4110 = vrot.lane.b32.xlu0 %v1231, 120
        %v4111 = vpop.permute.xlu0 %4110
        %4112 = vrot.lane.b32.xlu0 %v1248, 120
        %v4113 = vpop.permute.xlu0 %4112
        %4114 = vrot.lane.b32.xlu0 %v1249, 120
        %v4115 = vpop.permute.xlu0 %4114
        %4116 = vrot.lane.b32.xlu0 %v1250, 120
        %v4117 = vpop.permute.xlu0 %4116
        %4118 = vrot.lane.b32.xlu0 %v1251, 120
        %v4119 = vpop.permute.xlu0 %4118
        %4120 = vrot.lane.b32.xlu0 %v1252, 120
        %v4121 = vpop.permute.xlu0 %4120
        %4122 = vrot.lane.b32.xlu0 %v1253, 120
        %v4123 = vpop.permute.xlu0 %4122
        %4124 = vrot.lane.b32.xlu0 %v1254, 120
        %v4125 = vpop.permute.xlu0 %4124
        %4126 = vrot.lane.b32.xlu0 %v1255, 120
        %v4127 = vpop.permute.xlu0 %4126
        %4128 = vrot.lane.b32.xlu0 %v1256, 120
        %v4129 = vpop.permute.xlu0 %4128
        %4130 = vrot.lane.b32.xlu0 %v1257, 120
        %v4131 = vpop.permute.xlu0 %4130
        %4132 = vrot.lane.b32.xlu0 %v1258, 120
        %v4133 = vpop.permute.xlu0 %4132
        %4134 = vrot.lane.b32.xlu0 %v1259, 120
        %v4135 = vpop.permute.xlu0 %4134
        %4136 = vrot.lane.b32.xlu0 %v1260, 120
        %v4137 = vpop.permute.xlu0 %4136
        %4138 = vrot.lane.b32.xlu0 %v1261, 120
        %v4139 = vpop.permute.xlu0 %4138
        %4140 = vrot.lane.b32.xlu0 %v1262, 120
        %v4141 = vpop.permute.xlu0 %4140
        %4142 = vrot.lane.b32.xlu0 %v1263, 120
        %v4143 = vpop.permute.xlu0 %4142
        %vm4208 = vcmask 64512
        %v4209 = vsel %vm4208, %v1152, %v1329
        %v4210 = vsel %vm4208, %v1153, %v1331
        %v4211 = vsel %vm4208, %v1154, %v1333
        %v4212 = vsel %vm4208, %v1155, %v1335
        %v4213 = vsel %vm4208, %v1156, %v1337
        %v4214 = vsel %vm4208, %v1157, %v1339
        %v4215 = vsel %vm4208, %v1158, %v1341
        %v4216 = vsel %vm4208, %v1159, %v1343
        %v4217 = vsel %vm4208, %v1160, %v1345
        %v4218 = vsel %vm4208, %v1161, %v1347
        %v4219 = vsel %vm4208, %v1162, %v1349
        %v4220 = vsel %vm4208, %v1163, %v1351
        %v4221 = vsel %vm4208, %v1164, %v1353
        %v4222 = vsel %vm4208, %v1165, %v1355
        %v4223 = vsel %vm4208, %v1166, %v1357
        %v4224 = vsel %vm4208, %v1167, %v1359
        %v4225 = vsel %vm4208, %v1184, %v1361
        %v4226 = vsel %vm4208, %v1185, %v1363
        %v4227 = vsel %vm4208, %v1186, %v1365
        %v4228 = vsel %vm4208, %v1187, %v1367
        %v4229 = vsel %vm4208, %v1188, %v1369
        %v4230 = vsel %vm4208, %v1189, %v1371
        %v4231 = vsel %vm4208, %v1190, %v1373
        %v4232 = vsel %vm4208, %v1191, %v1375
        %v4233 = vsel %vm4208, %v1192, %v1377
        %v4234 = vsel %vm4208, %v1193, %v1379
        %v4235 = vsel %vm4208, %v1194, %v1381
        %v4236 = vsel %vm4208, %v1195, %v1383
        %v4237 = vsel %vm4208, %v1196, %v1385
        %v4238 = vsel %vm4208, %v1197, %v1387
        %v4239 = vsel %vm4208, %v1198, %v1389
        %v4240 = vsel %vm4208, %v1199, %v1391
        %v4241 = vsel %vm4208, %v1216, %v1393
        %v4242 = vsel %vm4208, %v1217, %v1395
        %v4243 = vsel %vm4208, %v1218, %v1397
        %v4244 = vsel %vm4208, %v1219, %v1399
        %v4245 = vsel %vm4208, %v1220, %v1401
        %v4246 = vsel %vm4208, %v1221, %v1403
        %v4247 = vsel %vm4208, %v1222, %v1405
        %v4248 = vsel %vm4208, %v1223, %v1407
        %v4249 = vsel %vm4208, %v1224, %v1409
        %v4250 = vsel %vm4208, %v1225, %v1411
        %v4251 = vsel %vm4208, %v1226, %v1413
        %v4252 = vsel %vm4208, %v1227, %v1415
        %v4253 = vsel %vm4208, %v1228, %v1417
        %v4254 = vsel %vm4208, %v1229, %v1419
        %v4255 = vsel %vm4208, %v1230, %v1421
        %v4256 = vsel %vm4208, %v1231, %v1423
        %v4257 = vsel %vm4208, %v1248, %v1425
        %v4258 = vsel %vm4208, %v1249, %v1427
        %v4259 = vsel %vm4208, %v1250, %v1429
        %v4260 = vsel %vm4208, %v1251, %v1431
        %v4261 = vsel %vm4208, %v1252, %v1433
        %v4262 = vsel %vm4208, %v1253, %v1435
        %v4263 = vsel %vm4208, %v1254, %v1437
        %v4264 = vsel %vm4208, %v1255, %v1439
        %v4265 = vsel %vm4208, %v1256, %v1441
        %v4266 = vsel %vm4208, %v1257, %v1443
        %v4267 = vsel %vm4208, %v1258, %v1445
        %v4268 = vsel %vm4208, %v1259, %v1447
        %v4269 = vsel %vm4208, %v1260, %v1449
        %v4270 = vsel %vm4208, %v1261, %v1451
        %v4271 = vsel %vm4208, %v1262, %v1453
        %v4272 = vsel %vm4208, %v1263, %v1455
        %v4273 = vsel %vm470, %v4209, %v1521
        %v4274 = vsel %vm470, %v4210, %v1523
        %v4275 = vsel %vm470, %v4211, %v1525
        %v4276 = vsel %vm470, %v4212, %v1527
        %v4277 = vsel %vm470, %v4213, %v1529
        %v4278 = vsel %vm470, %v4214, %v1531
        %v4279 = vsel %vm470, %v4215, %v1533
        %v4280 = vsel %vm470, %v4216, %v1535
        %v4281 = vsel %vm470, %v4217, %v1537
        %v4282 = vsel %vm470, %v4218, %v1539
        %v4283 = vsel %vm470, %v4219, %v1541
        %v4284 = vsel %vm470, %v4220, %v1543
        %v4285 = vsel %vm470, %v4221, %v1545
        %v4286 = vsel %vm470, %v4222, %v1547
        %v4287 = vsel %vm470, %v4223, %v1549
        %v4288 = vsel %vm470, %v4224, %v1551
        %v4289 = vsel %vm470, %v4225, %v1553
        %v4290 = vsel %vm470, %v4226, %v1555
        %v4291 = vsel %vm470, %v4227, %v1557
        %v4292 = vsel %vm470, %v4228, %v1559
        %v4293 = vsel %vm470, %v4229, %v1561
        %v4294 = vsel %vm470, %v4230, %v1563
        %v4295 = vsel %vm470, %v4231, %v1565
        %v4296 = vsel %vm470, %v4232, %v1567
        %v4297 = vsel %vm470, %v4233, %v1569
        %v4298 = vsel %vm470, %v4234, %v1571
        %v4299 = vsel %vm470, %v4235, %v1573
        %v4300 = vsel %vm470, %v4236, %v1575
        %v4301 = vsel %vm470, %v4237, %v1577
        %v4302 = vsel %vm470, %v4238, %v1579
        %v4303 = vsel %vm470, %v4239, %v1581
        %v4304 = vsel %vm470, %v4240, %v1583
        %v4305 = vsel %vm470, %v4241, %v1585
        %v4306 = vsel %vm470, %v4242, %v1587
        %v4307 = vsel %vm470, %v4243, %v1589
        %v4308 = vsel %vm470, %v4244, %v1591
        %v4309 = vsel %vm470, %v4245, %v1593
        %v4310 = vsel %vm470, %v4246, %v1595
        %v4311 = vsel %vm470, %v4247, %v1597
        %v4312 = vsel %vm470, %v4248, %v1599
        %v4313 = vsel %vm470, %v4249, %v1601
        %v4314 = vsel %vm470, %v4250, %v1603
        %v4315 = vsel %vm470, %v4251, %v1605
        %v4316 = vsel %vm470, %v4252, %v1607
        %v4317 = vsel %vm470, %v4253, %v1609
        %v4318 = vsel %vm470, %v4254, %v1611
        %v4319 = vsel %vm470, %v4255, %v1613
        %v4320 = vsel %vm470, %v4256, %v1615
        %v4321 = vsel %vm470, %v4257, %v1617
        %v4322 = vsel %vm470, %v4258, %v1619
        %v4323 = vsel %vm470, %v4259, %v1621
        %v4324 = vsel %vm470, %v4260, %v1623
        %v4325 = vsel %vm470, %v4261, %v1625
        %v4326 = vsel %vm470, %v4262, %v1627
        %v4327 = vsel %vm470, %v4263, %v1629
        %v4328 = vsel %vm470, %v4264, %v1631
        %v4329 = vsel %vm470, %v4265, %v1633
        %v4330 = vsel %vm470, %v4266, %v1635
        %v4331 = vsel %vm470, %v4267, %v1637
        %v4332 = vsel %vm470, %v4268, %v1639
        %v4333 = vsel %vm470, %v4269, %v1641
        %v4334 = vsel %vm470, %v4270, %v1643
        %v4335 = vsel %vm470, %v4271, %v1645
        %v4336 = vsel %vm470, %v4272, %v1647
        %vm4337 = vcmask 195584
        %v4338 = vsel %vm4337, %v4273, %v1713
        %v4339 = vsel %vm4337, %v4274, %v1715
        %v4340 = vsel %vm4337, %v4275, %v1717
        %v4341 = vsel %vm4337, %v4276, %v1719
        %v4342 = vsel %vm4337, %v4277, %v1721
        %v4343 = vsel %vm4337, %v4278, %v1723
        %v4344 = vsel %vm4337, %v4279, %v1725
        %v4345 = vsel %vm4337, %v4280, %v1727
        %v4346 = vsel %vm4337, %v4281, %v1729
        %v4347 = vsel %vm4337, %v4282, %v1731
        %v4348 = vsel %vm4337, %v4283, %v1733
        %v4349 = vsel %vm4337, %v4284, %v1735
        %v4350 = vsel %vm4337, %v4285, %v1737
        %v4351 = vsel %vm4337, %v4286, %v1739
        %v4352 = vsel %vm4337, %v4287, %v1741
        %v4353 = vsel %vm4337, %v4288, %v1743
        %v4354 = vsel %vm4337, %v4289, %v1745
        %v4355 = vsel %vm4337, %v4290, %v1747
        %v4356 = vsel %vm4337, %v4291, %v1749
        %v4357 = vsel %vm4337, %v4292, %v1751
        %v4358 = vsel %vm4337, %v4293, %v1753
        %v4359 = vsel %vm4337, %v4294, %v1755
        %v4360 = vsel %vm4337, %v4295, %v1757
        %v4361 = vsel %vm4337, %v4296, %v1759
        %v4362 = vsel %vm4337, %v4297, %v1761
        %v4363 = vsel %vm4337, %v4298, %v1763
        %v4364 = vsel %vm4337, %v4299, %v1765
        %v4365 = vsel %vm4337, %v4300, %v1767
        %v4366 = vsel %vm4337, %v4301, %v1769
        %v4367 = vsel %vm4337, %v4302, %v1771
        %v4368 = vsel %vm4337, %v4303, %v1773
        %v4369 = vsel %vm4337, %v4304, %v1775
        %v4370 = vsel %vm4337, %v4305, %v1777
        %v4371 = vsel %vm4337, %v4306, %v1779
        %v4372 = vsel %vm4337, %v4307, %v1781
        %v4373 = vsel %vm4337, %v4308, %v1783
        %v4374 = vsel %vm4337, %v4309, %v1785
        %v4375 = vsel %vm4337, %v4310, %v1787
        %v4376 = vsel %vm4337, %v4311, %v1789
        %v4377 = vsel %vm4337, %v4312, %v1791
        %v4378 = vsel %vm4337, %v4313, %v1793
        %v4379 = vsel %vm4337, %v4314, %v1795
        %v4380 = vsel %vm4337, %v4315, %v1797
        %v4381 = vsel %vm4337, %v4316, %v1799
        %v4382 = vsel %vm4337, %v4317, %v1801
        %v4383 = vsel %vm4337, %v4318, %v1803
        %v4384 = vsel %vm4337, %v4319, %v1805
        %v4385 = vsel %vm4337, %v4320, %v1807
        %v4386 = vsel %vm4337, %v4321, %v1809
        %v4387 = vsel %vm4337, %v4322, %v1811
        %v4388 = vsel %vm4337, %v4323, %v1813
        %v4389 = vsel %vm4337, %v4324, %v1815
        %v4390 = vsel %vm4337, %v4325, %v1817
        %v4391 = vsel %vm4337, %v4326, %v1819
        %v4392 = vsel %vm4337, %v4327, %v1821
        %v4393 = vsel %vm4337, %v4328, %v1823
        %v4394 = vsel %vm4337, %v4329, %v1825
        %v4395 = vsel %vm4337, %v4330, %v1827
        %v4396 = vsel %vm4337, %v4331, %v1829
        %v4397 = vsel %vm4337, %v4332, %v1831
        %v4398 = vsel %vm4337, %v4333, %v1833
        %v4399 = vsel %vm4337, %v4334, %v1835
        %v4400 = vsel %vm4337, %v4335, %v1837
        %v4401 = vsel %vm4337, %v4336, %v1839
        %v4402 = vsel %vm737, %v4338, %v1905
        %v4403 = vsel %vm737, %v4339, %v1907
        %v4404 = vsel %vm737, %v4340, %v1909
        %v4405 = vsel %vm737, %v4341, %v1911
        %v4406 = vsel %vm737, %v4342, %v1913
        %v4407 = vsel %vm737, %v4343, %v1915
        %v4408 = vsel %vm737, %v4344, %v1917
        %v4409 = vsel %vm737, %v4345, %v1919
        %v4410 = vsel %vm737, %v4346, %v1921
        %v4411 = vsel %vm737, %v4347, %v1923
        %v4412 = vsel %vm737, %v4348, %v1925
        %v4413 = vsel %vm737, %v4349, %v1927
        %v4414 = vsel %vm737, %v4350, %v1929
        %v4415 = vsel %vm737, %v4351, %v1931
        %v4416 = vsel %vm737, %v4352, %v1933
        %v4417 = vsel %vm737, %v4353, %v1935
        %v4418 = vsel %vm737, %v4354, %v1937
        %v4419 = vsel %vm737, %v4355, %v1939
        %v4420 = vsel %vm737, %v4356, %v1941
        %v4421 = vsel %vm737, %v4357, %v1943
        %v4422 = vsel %vm737, %v4358, %v1945
        %v4423 = vsel %vm737, %v4359, %v1947
        %v4424 = vsel %vm737, %v4360, %v1949
        %v4425 = vsel %vm737, %v4361, %v1951
        %v4426 = vsel %vm737, %v4362, %v1953
        %v4427 = vsel %vm737, %v4363, %v1955
        %v4428 = vsel %vm737, %v4364, %v1957
        %v4429 = vsel %vm737, %v4365, %v1959
        %v4430 = vsel %vm737, %v4366, %v1961
        %v4431 = vsel %vm737, %v4367, %v1963
        %v4432 = vsel %vm737, %v4368, %v1965
        %v4433 = vsel %vm737, %v4369, %v1967
        %v4434 = vsel %vm737, %v4370, %v1969
        %v4435 = vsel %vm737, %v4371, %v1971
        %v4436 = vsel %vm737, %v4372, %v1973
        %v4437 = vsel %vm737, %v4373, %v1975
        %v4438 = vsel %vm737, %v4374, %v1977
        %v4439 = vsel %vm737, %v4375, %v1979
        %v4440 = vsel %vm737, %v4376, %v1981
        %v4441 = vsel %vm737, %v4377, %v1983
        %v4442 = vsel %vm737, %v4378, %v1985
        %v4443 = vsel %vm737, %v4379, %v1987
        %v4444 = vsel %vm737, %v4380, %v1989
        %v4445 = vsel %vm737, %v4381, %v1991
        %v4446 = vsel %vm737, %v4382, %v1993
        %v4447 = vsel %vm737, %v4383, %v1995
        %v4448 = vsel %vm737, %v4384, %v1997
        %v4449 = vsel %vm737, %v4385, %v1999
        %v4450 = vsel %vm737, %v4386, %v2001
        %v4451 = vsel %vm737, %v4387, %v2003
        %v4452 = vsel %vm737, %v4388, %v2005
        %v4453 = vsel %vm737, %v4389, %v2007
        %v4454 = vsel %vm737, %v4390, %v2009
        %v4455 = vsel %vm737, %v4391, %v2011
        %v4456 = vsel %vm737, %v4392, %v2013
        %v4457 = vsel %vm737, %v4393, %v2015
        %v4458 = vsel %vm737, %v4394, %v2017
        %v4459 = vsel %vm737, %v4395, %v2019
        %v4460 = vsel %vm737, %v4396, %v2021
        %v4461 = vsel %vm737, %v4397, %v2023
        %v4462 = vsel %vm737, %v4398, %v2025
        %v4463 = vsel %vm737, %v4399, %v2027
        %v4464 = vsel %vm737, %v4400, %v2029
        %v4465 = vsel %vm737, %v4401, %v2031
        %vm4466 = vcmask 326656
        %v4467 = vsel %vm4466, %v4402, %v2097
        %v4468 = vsel %vm4466, %v4403, %v2099
        %v4469 = vsel %vm4466, %v4404, %v2101
        %v4470 = vsel %vm4466, %v4405, %v2103
        %v4471 = vsel %vm4466, %v4406, %v2105
        %v4472 = vsel %vm4466, %v4407, %v2107
        %v4473 = vsel %vm4466, %v4408, %v2109
        %v4474 = vsel %vm4466, %v4409, %v2111
        %v4475 = vsel %vm4466, %v4410, %v2113
        %v4476 = vsel %vm4466, %v4411, %v2115
        %v4477 = vsel %vm4466, %v4412, %v2117
        %v4478 = vsel %vm4466, %v4413, %v2119
        %v4479 = vsel %vm4466, %v4414, %v2121
        %v4480 = vsel %vm4466, %v4415, %v2123
        %v4481 = vsel %vm4466, %v4416, %v2125
        %v4482 = vsel %vm4466, %v4417, %v2127
        %v4483 = vsel %vm4466, %v4418, %v2129
        %v4484 = vsel %vm4466, %v4419, %v2131
        %v4485 = vsel %vm4466, %v4420, %v2133
        %v4486 = vsel %vm4466, %v4421, %v2135
        %v4487 = vsel %vm4466, %v4422, %v2137
        %v4488 = vsel %vm4466, %v4423, %v2139
        %v4489 = vsel %vm4466, %v4424, %v2141
        %v4490 = vsel %vm4466, %v4425, %v2143
        %v4491 = vsel %vm4466, %v4426, %v2145
        %v4492 = vsel %vm4466, %v4427, %v2147
        %v4493 = vsel %vm4466, %v4428, %v2149
        %v4494 = vsel %vm4466, %v4429, %v2151
        %v4495 = vsel %vm4466, %v4430, %v2153
        %v4496 = vsel %vm4466, %v4431, %v2155
        %v4497 = vsel %vm4466, %v4432, %v2157
        %v4498 = vsel %vm4466, %v4433, %v2159
        %v4499 = vsel %vm4466, %v4434, %v2161
        %v4500 = vsel %vm4466, %v4435, %v2163
        %v4501 = vsel %vm4466, %v4436, %v2165
        %v4502 = vsel %vm4466, %v4437, %v2167
        %v4503 = vsel %vm4466, %v4438, %v2169
        %v4504 = vsel %vm4466, %v4439, %v2171
        %v4505 = vsel %vm4466, %v4440, %v2173
        %v4506 = vsel %vm4466, %v4441, %v2175
        %v4507 = vsel %vm4466, %v4442, %v2177
        %v4508 = vsel %vm4466, %v4443, %v2179
        %v4509 = vsel %vm4466, %v4444, %v2181
        %v4510 = vsel %vm4466, %v4445, %v2183
        %v4511 = vsel %vm4466, %v4446, %v2185
        %v4512 = vsel %vm4466, %v4447, %v2187
        %v4513 = vsel %vm4466, %v4448, %v2189
        %v4514 = vsel %vm4466, %v4449, %v2191
        %v4515 = vsel %vm4466, %v4450, %v2193
        %v4516 = vsel %vm4466, %v4451, %v2195
        %v4517 = vsel %vm4466, %v4452, %v2197
        %v4518 = vsel %vm4466, %v4453, %v2199
        %v4519 = vsel %vm4466, %v4454, %v2201
        %v4520 = vsel %vm4466, %v4455, %v2203
        %v4521 = vsel %vm4466, %v4456, %v2205
        %v4522 = vsel %vm4466, %v4457, %v2207
        %v4523 = vsel %vm4466, %v4458, %v2209
        %v4524 = vsel %vm4466, %v4459, %v2211
        %v4525 = vsel %vm4466, %v4460, %v2213
        %v4526 = vsel %vm4466, %v4461, %v2215
        %v4527 = vsel %vm4466, %v4462, %v2217
        %v4528 = vsel %vm4466, %v4463, %v2219
        %v4529 = vsel %vm4466, %v4464, %v2221
        %v4530 = vsel %vm4466, %v4465, %v2223
        %v4531 = vsel %vm739, %v4467, %v2289
        %v4532 = vsel %vm739, %v4468, %v2291
        %v4533 = vsel %vm739, %v4469, %v2293
        %v4534 = vsel %vm739, %v4470, %v2295
        %v4535 = vsel %vm739, %v4471, %v2297
        %v4536 = vsel %vm739, %v4472, %v2299
        %v4537 = vsel %vm739, %v4473, %v2301
        %v4538 = vsel %vm739, %v4474, %v2303
        %v4539 = vsel %vm739, %v4475, %v2305
        %v4540 = vsel %vm739, %v4476, %v2307
        %v4541 = vsel %vm739, %v4477, %v2309
        %v4542 = vsel %vm739, %v4478, %v2311
        %v4543 = vsel %vm739, %v4479, %v2313
        %v4544 = vsel %vm739, %v4480, %v2315
        %v4545 = vsel %vm739, %v4481, %v2317
        %v4546 = vsel %vm739, %v4482, %v2319
        %v4547 = vsel %vm739, %v4483, %v2321
        %v4548 = vsel %vm739, %v4484, %v2323
        %v4549 = vsel %vm739, %v4485, %v2325
        %v4550 = vsel %vm739, %v4486, %v2327
        %v4551 = vsel %vm739, %v4487, %v2329
        %v4552 = vsel %vm739, %v4488, %v2331
        %v4553 = vsel %vm739, %v4489, %v2333
        %v4554 = vsel %vm739, %v4490, %v2335
        %v4555 = vsel %vm739, %v4491, %v2337
        %v4556 = vsel %vm739, %v4492, %v2339
        %v4557 = vsel %vm739, %v4493, %v2341
        %v4558 = vsel %vm739, %v4494, %v2343
        %v4559 = vsel %vm739, %v4495, %v2345
        %v4560 = vsel %vm739, %v4496, %v2347
        %v4561 = vsel %vm739, %v4497, %v2349
        %v4562 = vsel %vm739, %v4498, %v2351
        %v4563 = vsel %vm739, %v4499, %v2353
        %v4564 = vsel %vm739, %v4500, %v2355
        %v4565 = vsel %vm739, %v4501, %v2357
        %v4566 = vsel %vm739, %v4502, %v2359
        %v4567 = vsel %vm739, %v4503, %v2361
        %v4568 = vsel %vm739, %v4504, %v2363
        %v4569 = vsel %vm739, %v4505, %v2365
        %v4570 = vsel %vm739, %v4506, %v2367
        %v4571 = vsel %vm739, %v4507, %v2369
        %v4572 = vsel %vm739, %v4508, %v2371
        %v4573 = vsel %vm739, %v4509, %v2373
        %v4574 = vsel %vm739, %v4510, %v2375
        %v4575 = vsel %vm739, %v4511, %v2377
        %v4576 = vsel %vm739, %v4512, %v2379
        %v4577 = vsel %vm739, %v4513, %v2381
        %v4578 = vsel %vm739, %v4514, %v2383
        %v4579 = vsel %vm739, %v4515, %v2385
        %v4580 = vsel %vm739, %v4516, %v2387
        %v4581 = vsel %vm739, %v4517, %v2389
        %v4582 = vsel %vm739, %v4518, %v2391
        %v4583 = vsel %vm739, %v4519, %v2393
        %v4584 = vsel %vm739, %v4520, %v2395
        %v4585 = vsel %vm739, %v4521, %v2397
        %v4586 = vsel %vm739, %v4522, %v2399
        %v4587 = vsel %vm739, %v4523, %v2401
        %v4588 = vsel %vm739, %v4524, %v2403
        %v4589 = vsel %vm739, %v4525, %v2405
        %v4590 = vsel %vm739, %v4526, %v2407
        %v4591 = vsel %vm739, %v4527, %v2409
        %v4592 = vsel %vm739, %v4528, %v2411
        %v4593 = vsel %vm739, %v4529, %v2413
        %v4594 = vsel %vm739, %v4530, %v2415
        %vm4595 = vcmask 457728
        %v4596 = vsel %vm4595, %v4531, %v2481
        %v4597 = vsel %vm4595, %v4532, %v2483
        %v4598 = vsel %vm4595, %v4533, %v2485
        %v4599 = vsel %vm4595, %v4534, %v2487
        %v4600 = vsel %vm4595, %v4535, %v2489
        %v4601 = vsel %vm4595, %v4536, %v2491
        %v4602 = vsel %vm4595, %v4537, %v2493
        %v4603 = vsel %vm4595, %v4538, %v2495
        %v4604 = vsel %vm4595, %v4539, %v2497
        %v4605 = vsel %vm4595, %v4540, %v2499
        %v4606 = vsel %vm4595, %v4541, %v2501
        %v4607 = vsel %vm4595, %v4542, %v2503
        %v4608 = vsel %vm4595, %v4543, %v2505
        %v4609 = vsel %vm4595, %v4544, %v2507
        %v4610 = vsel %vm4595, %v4545, %v2509
        %v4611 = vsel %vm4595, %v4546, %v2511
        %v4612 = vsel %vm4595, %v4547, %v2513
        %v4613 = vsel %vm4595, %v4548, %v2515
        %v4614 = vsel %vm4595, %v4549, %v2517
        %v4615 = vsel %vm4595, %v4550, %v2519
        %v4616 = vsel %vm4595, %v4551, %v2521
        %v4617 = vsel %vm4595, %v4552, %v2523
        %v4618 = vsel %vm4595, %v4553, %v2525
        %v4619 = vsel %vm4595, %v4554, %v2527
        %v4620 = vsel %vm4595, %v4555, %v2529
        %v4621 = vsel %vm4595, %v4556, %v2531
        %v4622 = vsel %vm4595, %v4557, %v2533
        %v4623 = vsel %vm4595, %v4558, %v2535
        %v4624 = vsel %vm4595, %v4559, %v2537
        %v4625 = vsel %vm4595, %v4560, %v2539
        %v4626 = vsel %vm4595, %v4561, %v2541
        %v4627 = vsel %vm4595, %v4562, %v2543
        %v4628 = vsel %vm4595, %v4563, %v2545
        %v4629 = vsel %vm4595, %v4564, %v2547
        %v4630 = vsel %vm4595, %v4565, %v2549
        %v4631 = vsel %vm4595, %v4566, %v2551
        %v4632 = vsel %vm4595, %v4567, %v2553
        %v4633 = vsel %vm4595, %v4568, %v2555
        %v4634 = vsel %vm4595, %v4569, %v2557
        %v4635 = vsel %vm4595, %v4570, %v2559
        %v4636 = vsel %vm4595, %v4571, %v2561
        %v4637 = vsel %vm4595, %v4572, %v2563
        %v4638 = vsel %vm4595, %v4573, %v2565
        %v4639 = vsel %vm4595, %v4574, %v2567
        %v4640 = vsel %vm4595, %v4575, %v2569
        %v4641 = vsel %vm4595, %v4576, %v2571
        %v4642 = vsel %vm4595, %v4577, %v2573
        %v4643 = vsel %vm4595, %v4578, %v2575
        %v4644 = vsel %vm4595, %v4579, %v2577
        %v4645 = vsel %vm4595, %v4580, %v2579
        %v4646 = vsel %vm4595, %v4581, %v2581
        %v4647 = vsel %vm4595, %v4582, %v2583
        %v4648 = vsel %vm4595, %v4583, %v2585
        %v4649 = vsel %vm4595, %v4584, %v2587
        %v4650 = vsel %vm4595, %v4585, %v2589
        %v4651 = vsel %vm4595, %v4586, %v2591
        %v4652 = vsel %vm4595, %v4587, %v2593
        %v4653 = vsel %vm4595, %v4588, %v2595
        %v4654 = vsel %vm4595, %v4589, %v2597
        %v4655 = vsel %vm4595, %v4590, %v2599
        %v4656 = vsel %vm4595, %v4591, %v2601
        %v4657 = vsel %vm4595, %v4592, %v2603
        %v4658 = vsel %vm4595, %v4593, %v2605
        %v4659 = vsel %vm4595, %v4594, %v2607
        %v4660 = vsel %vm741, %v4596, %v2673
        %v4661 = vsel %vm741, %v4597, %v2675
        %v4662 = vsel %vm741, %v4598, %v2677
        %v4663 = vsel %vm741, %v4599, %v2679
        %v4664 = vsel %vm741, %v4600, %v2681
        %v4665 = vsel %vm741, %v4601, %v2683
        %v4666 = vsel %vm741, %v4602, %v2685
        %v4667 = vsel %vm741, %v4603, %v2687
        %v4668 = vsel %vm741, %v4604, %v2689
        %v4669 = vsel %vm741, %v4605, %v2691
        %v4670 = vsel %vm741, %v4606, %v2693
        %v4671 = vsel %vm741, %v4607, %v2695
        %v4672 = vsel %vm741, %v4608, %v2697
        %v4673 = vsel %vm741, %v4609, %v2699
        %v4674 = vsel %vm741, %v4610, %v2701
        %v4675 = vsel %vm741, %v4611, %v2703
        %v4676 = vsel %vm741, %v4612, %v2705
        %v4677 = vsel %vm741, %v4613, %v2707
        %v4678 = vsel %vm741, %v4614, %v2709
        %v4679 = vsel %vm741, %v4615, %v2711
        %v4680 = vsel %vm741, %v4616, %v2713
        %v4681 = vsel %vm741, %v4617, %v2715
        %v4682 = vsel %vm741, %v4618, %v2717
        %v4683 = vsel %vm741, %v4619, %v2719
        %v4684 = vsel %vm741, %v4620, %v2721
        %v4685 = vsel %vm741, %v4621, %v2723
        %v4686 = vsel %vm741, %v4622, %v2725
        %v4687 = vsel %vm741, %v4623, %v2727
        %v4688 = vsel %vm741, %v4624, %v2729
        %v4689 = vsel %vm741, %v4625, %v2731
        %v4690 = vsel %vm741, %v4626, %v2733
        %v4691 = vsel %vm741, %v4627, %v2735
        %v4692 = vsel %vm741, %v4628, %v2737
        %v4693 = vsel %vm741, %v4629, %v2739
        %v4694 = vsel %vm741, %v4630, %v2741
        %v4695 = vsel %vm741, %v4631, %v2743
        %v4696 = vsel %vm741, %v4632, %v2745
        %v4697 = vsel %vm741, %v4633, %v2747
        %v4698 = vsel %vm741, %v4634, %v2749
        %v4699 = vsel %vm741, %v4635, %v2751
        %v4700 = vsel %vm741, %v4636, %v2753
        %v4701 = vsel %vm741, %v4637, %v2755
        %v4702 = vsel %vm741, %v4638, %v2757
        %v4703 = vsel %vm741, %v4639, %v2759
        %v4704 = vsel %vm741, %v4640, %v2761
        %v4705 = vsel %vm741, %v4641, %v2763
        %v4706 = vsel %vm741, %v4642, %v2765
        %v4707 = vsel %vm741, %v4643, %v2767
        %v4708 = vsel %vm741, %v4644, %v2769
        %v4709 = vsel %vm741, %v4645, %v2771
        %v4710 = vsel %vm741, %v4646, %v2773
        %v4711 = vsel %vm741, %v4647, %v2775
        %v4712 = vsel %vm741, %v4648, %v2777
        %v4713 = vsel %vm741, %v4649, %v2779
        %v4714 = vsel %vm741, %v4650, %v2781
        %v4715 = vsel %vm741, %v4651, %v2783
        %v4716 = vsel %vm741, %v4652, %v2785
        %v4717 = vsel %vm741, %v4653, %v2787
        %v4718 = vsel %vm741, %v4654, %v2789
        %v4719 = vsel %vm741, %v4655, %v2791
        %v4720 = vsel %vm741, %v4656, %v2793
        %v4721 = vsel %vm741, %v4657, %v2795
        %v4722 = vsel %vm741, %v4658, %v2797
        %v4723 = vsel %vm741, %v4659, %v2799
        %vm4724 = vcmask 588800
        %v4725 = vsel %vm4724, %v4660, %v2865
        %v4726 = vsel %vm4724, %v4661, %v2867
        %v4727 = vsel %vm4724, %v4662, %v2869
        %v4728 = vsel %vm4724, %v4663, %v2871
        %v4729 = vsel %vm4724, %v4664, %v2873
        %v4730 = vsel %vm4724, %v4665, %v2875
        %v4731 = vsel %vm4724, %v4666, %v2877
        %v4732 = vsel %vm4724, %v4667, %v2879
        %v4733 = vsel %vm4724, %v4668, %v2881
        %v4734 = vsel %vm4724, %v4669, %v2883
        %v4735 = vsel %vm4724, %v4670, %v2885
        %v4736 = vsel %vm4724, %v4671, %v2887
        %v4737 = vsel %vm4724, %v4672, %v2889
        %v4738 = vsel %vm4724, %v4673, %v2891
        %v4739 = vsel %vm4724, %v4674, %v2893
        %v4740 = vsel %vm4724, %v4675, %v2895
        %v4741 = vsel %vm4724, %v4676, %v2897
        %v4742 = vsel %vm4724, %v4677, %v2899
        %v4743 = vsel %vm4724, %v4678, %v2901
        %v4744 = vsel %vm4724, %v4679, %v2903
        %v4745 = vsel %vm4724, %v4680, %v2905
        %v4746 = vsel %vm4724, %v4681, %v2907
        %v4747 = vsel %vm4724, %v4682, %v2909
        %v4748 = vsel %vm4724, %v4683, %v2911
        %v4749 = vsel %vm4724, %v4684, %v2913
        %v4750 = vsel %vm4724, %v4685, %v2915
        %v4751 = vsel %vm4724, %v4686, %v2917
        %v4752 = vsel %vm4724, %v4687, %v2919
        %v4753 = vsel %vm4724, %v4688, %v2921
        %v4754 = vsel %vm4724, %v4689, %v2923
        %v4755 = vsel %vm4724, %v4690, %v2925
        %v4756 = vsel %vm4724, %v4691, %v2927
        %v4757 = vsel %vm4724, %v4692, %v2929
        %v4758 = vsel %vm4724, %v4693, %v2931
        %v4759 = vsel %vm4724, %v4694, %v2933
        %v4760 = vsel %vm4724, %v4695, %v2935
        %v4761 = vsel %vm4724, %v4696, %v2937
        %v4762 = vsel %vm4724, %v4697, %v2939
        %v4763 = vsel %vm4724, %v4698, %v2941
        %v4764 = vsel %vm4724, %v4699, %v2943
        %v4765 = vsel %vm4724, %v4700, %v2945
        %v4766 = vsel %vm4724, %v4701, %v2947
        %v4767 = vsel %vm4724, %v4702, %v2949
        %v4768 = vsel %vm4724, %v4703, %v2951
        %v4769 = vsel %vm4724, %v4704, %v2953
        %v4770 = vsel %vm4724, %v4705, %v2955
        %v4771 = vsel %vm4724, %v4706, %v2957
        %v4772 = vsel %vm4724, %v4707, %v2959
        %v4773 = vsel %vm4724, %v4708, %v2961
        %v4774 = vsel %vm4724, %v4709, %v2963
        %v4775 = vsel %vm4724, %v4710, %v2965
        %v4776 = vsel %vm4724, %v4711, %v2967
        %v4777 = vsel %vm4724, %v4712, %v2969
        %v4778 = vsel %vm4724, %v4713, %v2971
        %v4779 = vsel %vm4724, %v4714, %v2973
        %v4780 = vsel %vm4724, %v4715, %v2975
        %v4781 = vsel %vm4724, %v4716, %v2977
        %v4782 = vsel %vm4724, %v4717, %v2979
        %v4783 = vsel %vm4724, %v4718, %v2981
        %v4784 = vsel %vm4724, %v4719, %v2983
        %v4785 = vsel %vm4724, %v4720, %v2985
        %v4786 = vsel %vm4724, %v4721, %v2987
        %v4787 = vsel %vm4724, %v4722, %v2989
        %v4788 = vsel %vm4724, %v4723, %v2991
        %v4789 = vsel %vm743, %v4725, %v3057
        %v4790 = vsel %vm743, %v4726, %v3059
        %v4791 = vsel %vm743, %v4727, %v3061
        %v4792 = vsel %vm743, %v4728, %v3063
        %v4793 = vsel %vm743, %v4729, %v3065
        %v4794 = vsel %vm743, %v4730, %v3067
        %v4795 = vsel %vm743, %v4731, %v3069
        %v4796 = vsel %vm743, %v4732, %v3071
        %v4797 = vsel %vm743, %v4733, %v3073
        %v4798 = vsel %vm743, %v4734, %v3075
        %v4799 = vsel %vm743, %v4735, %v3077
        %v4800 = vsel %vm743, %v4736, %v3079
        %v4801 = vsel %vm743, %v4737, %v3081
        %v4802 = vsel %vm743, %v4738, %v3083
        %v4803 = vsel %vm743, %v4739, %v3085
        %v4804 = vsel %vm743, %v4740, %v3087
        %v4805 = vsel %vm743, %v4741, %v3089
        %v4806 = vsel %vm743, %v4742, %v3091
        %v4807 = vsel %vm743, %v4743, %v3093
        %v4808 = vsel %vm743, %v4744, %v3095
        %v4809 = vsel %vm743, %v4745, %v3097
        %v4810 = vsel %vm743, %v4746, %v3099
        %v4811 = vsel %vm743, %v4747, %v3101
        %v4812 = vsel %vm743, %v4748, %v3103
        %v4813 = vsel %vm743, %v4749, %v3105
        %v4814 = vsel %vm743, %v4750, %v3107
        %v4815 = vsel %vm743, %v4751, %v3109
        %v4816 = vsel %vm743, %v4752, %v3111
        %v4817 = vsel %vm743, %v4753, %v3113
        %v4818 = vsel %vm743, %v4754, %v3115
        %v4819 = vsel %vm743, %v4755, %v3117
        %v4820 = vsel %vm743, %v4756, %v3119
        %v4821 = vsel %vm743, %v4757, %v3121
        %v4822 = vsel %vm743, %v4758, %v3123
        %v4823 = vsel %vm743, %v4759, %v3125
        %v4824 = vsel %vm743, %v4760, %v3127
        %v4825 = vsel %vm743, %v4761, %v3129
        %v4826 = vsel %vm743, %v4762, %v3131
        %v4827 = vsel %vm743, %v4763, %v3133
        %v4828 = vsel %vm743, %v4764, %v3135
        %v4829 = vsel %vm743, %v4765, %v3137
        %v4830 = vsel %vm743, %v4766, %v3139
        %v4831 = vsel %vm743, %v4767, %v3141
        %v4832 = vsel %vm743, %v4768, %v3143
        %v4833 = vsel %vm743, %v4769, %v3145
        %v4834 = vsel %vm743, %v4770, %v3147
        %v4835 = vsel %vm743, %v4771, %v3149
        %v4836 = vsel %vm743, %v4772, %v3151
        %v4837 = vsel %vm743, %v4773, %v3153
        %v4838 = vsel %vm743, %v4774, %v3155
        %v4839 = vsel %vm743, %v4775, %v3157
        %v4840 = vsel %vm743, %v4776, %v3159
        %v4841 = vsel %vm743, %v4777, %v3161
        %v4842 = vsel %vm743, %v4778, %v3163
        %v4843 = vsel %vm743, %v4779, %v3165
        %v4844 = vsel %vm743, %v4780, %v3167
        %v4845 = vsel %vm743, %v4781, %v3169
        %v4846 = vsel %vm743, %v4782, %v3171
        %v4847 = vsel %vm743, %v4783, %v3173
        %v4848 = vsel %vm743, %v4784, %v3175
        %v4849 = vsel %vm743, %v4785, %v3177
        %v4850 = vsel %vm743, %v4786, %v3179
        %v4851 = vsel %vm743, %v4787, %v3181
        %v4852 = vsel %vm743, %v4788, %v3183
        %vm4853 = vcmask 719872
        %v4854 = vsel %vm4853, %v4789, %v3249
        %v4855 = vsel %vm4853, %v4790, %v3251
        %v4856 = vsel %vm4853, %v4791, %v3253
        %v4857 = vsel %vm4853, %v4792, %v3255
        %v4858 = vsel %vm4853, %v4793, %v3257
        %v4859 = vsel %vm4853, %v4794, %v3259
        %v4860 = vsel %vm4853, %v4795, %v3261
        %v4861 = vsel %vm4853, %v4796, %v3263
        %v4862 = vsel %vm4853, %v4797, %v3265
        %v4863 = vsel %vm4853, %v4798, %v3267
        %v4864 = vsel %vm4853, %v4799, %v3269
        %v4865 = vsel %vm4853, %v4800, %v3271
        %v4866 = vsel %vm4853, %v4801, %v3273
        %v4867 = vsel %vm4853, %v4802, %v3275
        %v4868 = vsel %vm4853, %v4803, %v3277
        %v4869 = vsel %vm4853, %v4804, %v3279
        %v4870 = vsel %vm4853, %v4805, %v3281
        %v4871 = vsel %vm4853, %v4806, %v3283
        %v4872 = vsel %vm4853, %v4807, %v3285
        %v4873 = vsel %vm4853, %v4808, %v3287
        %v4874 = vsel %vm4853, %v4809, %v3289
        %v4875 = vsel %vm4853, %v4810, %v3291
        %v4876 = vsel %vm4853, %v4811, %v3293
        %v4877 = vsel %vm4853, %v4812, %v3295
        %v4878 = vsel %vm4853, %v4813, %v3297
        %v4879 = vsel %vm4853, %v4814, %v3299
        %v4880 = vsel %vm4853, %v4815, %v3301
        %v4881 = vsel %vm4853, %v4816, %v3303
        %v4882 = vsel %vm4853, %v4817, %v3305
        %v4883 = vsel %vm4853, %v4818, %v3307
        %v4884 = vsel %vm4853, %v4819, %v3309
        %v4885 = vsel %vm4853, %v4820, %v3311
        %v4886 = vsel %vm4853, %v4821, %v3313
        %v4887 = vsel %vm4853, %v4822, %v3315
        %v4888 = vsel %vm4853, %v4823, %v3317
        %v4889 = vsel %vm4853, %v4824, %v3319
        %v4890 = vsel %vm4853, %v4825, %v3321
        %v4891 = vsel %vm4853, %v4826, %v3323
        %v4892 = vsel %vm4853, %v4827, %v3325
        %v4893 = vsel %vm4853, %v4828, %v3327
        %v4894 = vsel %vm4853, %v4829, %v3329
        %v4895 = vsel %vm4853, %v4830, %v3331
        %v4896 = vsel %vm4853, %v4831, %v3333
        %v4897 = vsel %vm4853, %v4832, %v3335
        %v4898 = vsel %vm4853, %v4833, %v3337
        %v4899 = vsel %vm4853, %v4834, %v3339
        %v4900 = vsel %vm4853, %v4835, %v3341
        %v4901 = vsel %vm4853, %v4836, %v3343
        %v4902 = vsel %vm4853, %v4837, %v3345
        %v4903 = vsel %vm4853, %v4838, %v3347
        %v4904 = vsel %vm4853, %v4839, %v3349
        %v4905 = vsel %vm4853, %v4840, %v3351
        %v4906 = vsel %vm4853, %v4841, %v3353
        %v4907 = vsel %vm4853, %v4842, %v3355
        %v4908 = vsel %vm4853, %v4843, %v3357
        %v4909 = vsel %vm4853, %v4844, %v3359
        %v4910 = vsel %vm4853, %v4845, %v3361
        %v4911 = vsel %vm4853, %v4846, %v3363
        %v4912 = vsel %vm4853, %v4847, %v3365
        %v4913 = vsel %vm4853, %v4848, %v3367
        %v4914 = vsel %vm4853, %v4849, %v3369
        %v4915 = vsel %vm4853, %v4850, %v3371
        %v4916 = vsel %vm4853, %v4851, %v3373
        %v4917 = vsel %vm4853, %v4852, %v3375
        %v4918 = vsel %vm745, %v4854, %v3441
        %v4919 = vsel %vm745, %v4855, %v3443
        %v4920 = vsel %vm745, %v4856, %v3445
        %v4921 = vsel %vm745, %v4857, %v3447
        %v4922 = vsel %vm745, %v4858, %v3449
        %v4923 = vsel %vm745, %v4859, %v3451
        %v4924 = vsel %vm745, %v4860, %v3453
        %v4925 = vsel %vm745, %v4861, %v3455
        %v4926 = vsel %vm745, %v4862, %v3457
        %v4927 = vsel %vm745, %v4863, %v3459
        %v4928 = vsel %vm745, %v4864, %v3461
        %v4929 = vsel %vm745, %v4865, %v3463
        %v4930 = vsel %vm745, %v4866, %v3465
        %v4931 = vsel %vm745, %v4867, %v3467
        %v4932 = vsel %vm745, %v4868, %v3469
        %v4933 = vsel %vm745, %v4869, %v3471
        %v4934 = vsel %vm745, %v4870, %v3473
        %v4935 = vsel %vm745, %v4871, %v3475
        %v4936 = vsel %vm745, %v4872, %v3477
        %v4937 = vsel %vm745, %v4873, %v3479
        %v4938 = vsel %vm745, %v4874, %v3481
        %v4939 = vsel %vm745, %v4875, %v3483
        %v4940 = vsel %vm745, %v4876, %v3485
        %v4941 = vsel %vm745, %v4877, %v3487
        %v4942 = vsel %vm745, %v4878, %v3489
        %v4943 = vsel %vm745, %v4879, %v3491
        %v4944 = vsel %vm745, %v4880, %v3493
        %v4945 = vsel %vm745, %v4881, %v3495
        %v4946 = vsel %vm745, %v4882, %v3497
        %v4947 = vsel %vm745, %v4883, %v3499
        %v4948 = vsel %vm745, %v4884, %v3501
        %v4949 = vsel %vm745, %v4885, %v3503
        %v4950 = vsel %vm745, %v4886, %v3505
        %v4951 = vsel %vm745, %v4887, %v3507
        %v4952 = vsel %vm745, %v4888, %v3509
        %v4953 = vsel %vm745, %v4889, %v3511
        %v4954 = vsel %vm745, %v4890, %v3513
        %v4955 = vsel %vm745, %v4891, %v3515
        %v4956 = vsel %vm745, %v4892, %v3517
        %v4957 = vsel %vm745, %v4893, %v3519
        %v4958 = vsel %vm745, %v4894, %v3521
        %v4959 = vsel %vm745, %v4895, %v3523
        %v4960 = vsel %vm745, %v4896, %v3525
        %v4961 = vsel %vm745, %v4897, %v3527
        %v4962 = vsel %vm745, %v4898, %v3529
        %v4963 = vsel %vm745, %v4899, %v3531
        %v4964 = vsel %vm745, %v4900, %v3533
        %v4965 = vsel %vm745, %v4901, %v3535
        %v4966 = vsel %vm745, %v4902, %v3537
        %v4967 = vsel %vm745, %v4903, %v3539
        %v4968 = vsel %vm745, %v4904, %v3541
        %v4969 = vsel %vm745, %v4905, %v3543
        %v4970 = vsel %vm745, %v4906, %v3545
        %v4971 = vsel %vm745, %v4907, %v3547
        %v4972 = vsel %vm745, %v4908, %v3549
        %v4973 = vsel %vm745, %v4909, %v3551
        %v4974 = vsel %vm745, %v4910, %v3553
        %v4975 = vsel %vm745, %v4911, %v3555
        %v4976 = vsel %vm745, %v4912, %v3557
        %v4977 = vsel %vm745, %v4913, %v3559
        %v4978 = vsel %vm745, %v4914, %v3561
        %v4979 = vsel %vm745, %v4915, %v3563
        %v4980 = vsel %vm745, %v4916, %v3565
        %v4981 = vsel %vm745, %v4917, %v3567
        %vm4982 = vcmask 850944
        %v4983 = vsel %vm4982, %v4918, %v3633
        %v4984 = vsel %vm4982, %v4919, %v3635
        %v4985 = vsel %vm4982, %v4920, %v3637
        %v4986 = vsel %vm4982, %v4921, %v3639
        %v4987 = vsel %vm4982, %v4922, %v3641
        %v4988 = vsel %vm4982, %v4923, %v3643
        %v4989 = vsel %vm4982, %v4924, %v3645
        %v4990 = vsel %vm4982, %v4925, %v3647
        %v4991 = vsel %vm4982, %v4926, %v3649
        %v4992 = vsel %vm4982, %v4927, %v3651
        %v4993 = vsel %vm4982, %v4928, %v3653
        %v4994 = vsel %vm4982, %v4929, %v3655
        %v4995 = vsel %vm4982, %v4930, %v3657
        %v4996 = vsel %vm4982, %v4931, %v3659
        %v4997 = vsel %vm4982, %v4932, %v3661
        %v4998 = vsel %vm4982, %v4933, %v3663
        %v4999 = vsel %vm4982, %v4934, %v3665
        %v5000 = vsel %vm4982, %v4935, %v3667
        %v5001 = vsel %vm4982, %v4936, %v3669
        %v5002 = vsel %vm4982, %v4937, %v3671
        %v5003 = vsel %vm4982, %v4938, %v3673
        %v5004 = vsel %vm4982, %v4939, %v3675
        %v5005 = vsel %vm4982, %v4940, %v3677
        %v5006 = vsel %vm4982, %v4941, %v3679
        %v5007 = vsel %vm4982, %v4942, %v3681
        %v5008 = vsel %vm4982, %v4943, %v3683
        %v5009 = vsel %vm4982, %v4944, %v3685
        %v5010 = vsel %vm4982, %v4945, %v3687
        %v5011 = vsel %vm4982, %v4946, %v3689
        %v5012 = vsel %vm4982, %v4947, %v3691
        %v5013 = vsel %vm4982, %v4948, %v3693
        %v5014 = vsel %vm4982, %v4949, %v3695
        %v5015 = vsel %vm4982, %v4950, %v3697
        %v5016 = vsel %vm4982, %v4951, %v3699
        %v5017 = vsel %vm4982, %v4952, %v3701
        %v5018 = vsel %vm4982, %v4953, %v3703
        %v5019 = vsel %vm4982, %v4954, %v3705
        %v5020 = vsel %vm4982, %v4955, %v3707
        %v5021 = vsel %vm4982, %v4956, %v3709
        %v5022 = vsel %vm4982, %v4957, %v3711
        %v5023 = vsel %vm4982, %v4958, %v3713
        %v5024 = vsel %vm4982, %v4959, %v3715
        %v5025 = vsel %vm4982, %v4960, %v3717
        %v5026 = vsel %vm4982, %v4961, %v3719
        %v5027 = vsel %vm4982, %v4962, %v3721
        %v5028 = vsel %vm4982, %v4963, %v3723
        %v5029 = vsel %vm4982, %v4964, %v3725
        %v5030 = vsel %vm4982, %v4965, %v3727
        %v5031 = vsel %vm4982, %v4966, %v3729
        %v5032 = vsel %vm4982, %v4967, %v3731
        %v5033 = vsel %vm4982, %v4968, %v3733
        %v5034 = vsel %vm4982, %v4969, %v3735
        %v5035 = vsel %vm4982, %v4970, %v3737
        %v5036 = vsel %vm4982, %v4971, %v3739
        %v5037 = vsel %vm4982, %v4972, %v3741
        %v5038 = vsel %vm4982, %v4973, %v3743
        %v5039 = vsel %vm4982, %v4974, %v3745
        %v5040 = vsel %vm4982, %v4975, %v3747
        %v5041 = vsel %vm4982, %v4976, %v3749
        %v5042 = vsel %vm4982, %v4977, %v3751
        %v5043 = vsel %vm4982, %v4978, %v3753
        %v5044 = vsel %vm4982, %v4979, %v3755
        %v5045 = vsel %vm4982, %v4980, %v3757
        %v5046 = vsel %vm4982, %v4981, %v3759
        %v5047 = vsel %vm747, %v4983, %v3825
        %v5048 = vsel %vm747, %v4984, %v3827
        %v5049 = vsel %vm747, %v4985, %v3829
        %v5050 = vsel %vm747, %v4986, %v3831
        %v5051 = vsel %vm747, %v4987, %v3833
        %v5052 = vsel %vm747, %v4988, %v3835
        %v5053 = vsel %vm747, %v4989, %v3837
        %v5054 = vsel %vm747, %v4990, %v3839
        %v5055 = vsel %vm747, %v4991, %v3841
        %v5056 = vsel %vm747, %v4992, %v3843
        %v5057 = vsel %vm747, %v4993, %v3845
        %v5058 = vsel %vm747, %v4994, %v3847
        %v5059 = vsel %vm747, %v4995, %v3849
        %v5060 = vsel %vm747, %v4996, %v3851
        %v5061 = vsel %vm747, %v4997, %v3853
        %v5062 = vsel %vm747, %v4998, %v3855
        %v5063 = vsel %vm747, %v4999, %v3857
        %v5064 = vsel %vm747, %v5000, %v3859
        %v5065 = vsel %vm747, %v5001, %v3861
        %v5066 = vsel %vm747, %v5002, %v3863
        %v5067 = vsel %vm747, %v5003, %v3865
        %v5068 = vsel %vm747, %v5004, %v3867
        %v5069 = vsel %vm747, %v5005, %v3869
        %v5070 = vsel %vm747, %v5006, %v3871
        %v5071 = vsel %vm747, %v5007, %v3873
        %v5072 = vsel %vm747, %v5008, %v3875
        %v5073 = vsel %vm747, %v5009, %v3877
        %v5074 = vsel %vm747, %v5010, %v3879
        %v5075 = vsel %vm747, %v5011, %v3881
        %v5076 = vsel %vm747, %v5012, %v3883
        %v5077 = vsel %vm747, %v5013, %v3885
        %v5078 = vsel %vm747, %v5014, %v3887
        %v5079 = vsel %vm747, %v5015, %v3889
        %v5080 = vsel %vm747, %v5016, %v3891
        %v5081 = vsel %vm747, %v5017, %v3893
        %v5082 = vsel %vm747, %v5018, %v3895
        %v5083 = vsel %vm747, %v5019, %v3897
        %v5084 = vsel %vm747, %v5020, %v3899
        %v5085 = vsel %vm747, %v5021, %v3901
        %v5086 = vsel %vm747, %v5022, %v3903
        %v5087 = vsel %vm747, %v5023, %v3905
        %v5088 = vsel %vm747, %v5024, %v3907
        %v5089 = vsel %vm747, %v5025, %v3909
        %v5090 = vsel %vm747, %v5026, %v3911
        %v5091 = vsel %vm747, %v5027, %v3913
        %v5092 = vsel %vm747, %v5028, %v3915
        %v5093 = vsel %vm747, %v5029, %v3917
        %v5094 = vsel %vm747, %v5030, %v3919
        %v5095 = vsel %vm747, %v5031, %v3921
        %v5096 = vsel %vm747, %v5032, %v3923
        %v5097 = vsel %vm747, %v5033, %v3925
        %v5098 = vsel %vm747, %v5034, %v3927
        %v5099 = vsel %vm747, %v5035, %v3929
        %v5100 = vsel %vm747, %v5036, %v3931
        %v5101 = vsel %vm747, %v5037, %v3933
        %v5102 = vsel %vm747, %v5038, %v3935
        %v5103 = vsel %vm747, %v5039, %v3937
        %v5104 = vsel %vm747, %v5040, %v3939
        %v5105 = vsel %vm747, %v5041, %v3941
        %v5106 = vsel %vm747, %v5042, %v3943
        %v5107 = vsel %vm747, %v5043, %v3945
        %v5108 = vsel %vm747, %v5044, %v3947
        %v5109 = vsel %vm747, %v5045, %v3949
        %v5110 = vsel %vm747, %v5046, %v3951
        %vm5111 = vcmask 982016
        %v5112 = vsel %vm5111, %v5047, %v4017
        %v5113 = vsel %vm5111, %v5048, %v4019
        %v5114 = vsel %vm5111, %v5049, %v4021
        %v5115 = vsel %vm5111, %v5050, %v4023
        %v5116 = vsel %vm5111, %v5051, %v4025
        %v5117 = vsel %vm5111, %v5052, %v4027
        %v5118 = vsel %vm5111, %v5053, %v4029
        %v5119 = vsel %vm5111, %v5054, %v4031
        %v5120 = vsel %vm5111, %v5055, %v4033
        %v5121 = vsel %vm5111, %v5056, %v4035
        %v5122 = vsel %vm5111, %v5057, %v4037
        %v5123 = vsel %vm5111, %v5058, %v4039
        %v5124 = vsel %vm5111, %v5059, %v4041
        %v5125 = vsel %vm5111, %v5060, %v4043
        %v5126 = vsel %vm5111, %v5061, %v4045
        %v5127 = vsel %vm5111, %v5062, %v4047
        %v5128 = vsel %vm5111, %v5063, %v4049
        %v5129 = vsel %vm5111, %v5064, %v4051
        %v5130 = vsel %vm5111, %v5065, %v4053
        %v5131 = vsel %vm5111, %v5066, %v4055
        %v5132 = vsel %vm5111, %v5067, %v4057
        %v5133 = vsel %vm5111, %v5068, %v4059
        %v5134 = vsel %vm5111, %v5069, %v4061
        %v5135 = vsel %vm5111, %v5070, %v4063
        %v5136 = vsel %vm5111, %v5071, %v4065
        %v5137 = vsel %vm5111, %v5072, %v4067
        %v5138 = vsel %vm5111, %v5073, %v4069
        %v5139 = vsel %vm5111, %v5074, %v4071
        %v5140 = vsel %vm5111, %v5075, %v4073
        %v5141 = vsel %vm5111, %v5076, %v4075
        %v5142 = vsel %vm5111, %v5077, %v4077
        %v5143 = vsel %vm5111, %v5078, %v4079
        %v5144 = vsel %vm5111, %v5079, %v4081
        %v5145 = vsel %vm5111, %v5080, %v4083
        %v5146 = vsel %vm5111, %v5081, %v4085
        %v5147 = vsel %vm5111, %v5082, %v4087
        %v5148 = vsel %vm5111, %v5083, %v4089
        %v5149 = vsel %vm5111, %v5084, %v4091
        %v5150 = vsel %vm5111, %v5085, %v4093
        %v5151 = vsel %vm5111, %v5086, %v4095
        %v5152 = vsel %vm5111, %v5087, %v4097
        %v5153 = vsel %vm5111, %v5088, %v4099
        %v5154 = vsel %vm5111, %v5089, %v4101
        %v5155 = vsel %vm5111, %v5090, %v4103
        %v5156 = vsel %vm5111, %v5091, %v4105
        %v5157 = vsel %vm5111, %v5092, %v4107
        %v5158 = vsel %vm5111, %v5093, %v4109
        %v5159 = vsel %vm5111, %v5094, %v4111
        %v5160 = vsel %vm5111, %v5095, %v4113
        %v5161 = vsel %vm5111, %v5096, %v4115
        %v5162 = vsel %vm5111, %v5097, %v4117
        %v5163 = vsel %vm5111, %v5098, %v4119
        %v5164 = vsel %vm5111, %v5099, %v4121
        %v5165 = vsel %vm5111, %v5100, %v4123
        %v5166 = vsel %vm5111, %v5101, %v4125
        %v5167 = vsel %vm5111, %v5102, %v4127
        %v5168 = vsel %vm5111, %v5103, %v4129
        %v5169 = vsel %vm5111, %v5104, %v4131
        %v5170 = vsel %vm5111, %v5105, %v4133
        %v5171 = vsel %vm5111, %v5106, %v4135
        %v5172 = vsel %vm5111, %v5107, %v4137
        %v5173 = vsel %vm5111, %v5108, %v4139
        %v5174 = vsel %vm5111, %v5109, %v4141
        %v5175 = vsel %vm5111, %v5110, %v4143
        %v5176 = vld [vmem:[#allocation2] sm:$0xff]
        %v5177 = vld [vmem:[#allocation2 + $0x8] sm:$0xff]
        %v5178 = vld [vmem:[#allocation2 + $0x10] sm:$0xff]
        %v5179 = vld [vmem:[#allocation2 + $0x18] sm:$0xff]
        %v5180 = vld [vmem:[#allocation2 + $0x20] sm:$0xff]
        %v5181 = vld [vmem:[#allocation2 + $0x28] sm:$0xff]
        %v5182 = vld [vmem:[#allocation2 + $0x30] sm:$0xff]
        %v5183 = vld [vmem:[#allocation2 + $0x38] sm:$0xff]
        %v5184 = vld [vmem:[#allocation2 + $0x40] sm:$0xff]
        %v5185 = vld [vmem:[#allocation2 + $0x48] sm:$0xff]
        %v5186 = vld [vmem:[#allocation2 + $0x50] sm:$0xff]
        %v5187 = vld [vmem:[#allocation2 + $0x58] sm:$0xff]
        %v5188 = vld [vmem:[#allocation2 + $0x60] sm:$0xff]
        %v5189 = vld [vmem:[#allocation2 + $0x68] sm:$0xff]
        %v5190 = vld [vmem:[#allocation2 + $0x70] sm:$0xff]
        %v5191 = vld [vmem:[#allocation2 + $0x78] sm:$0xff]
        %v5192 = vld [vmem:[#allocation2 + $0x80] sm:$0xff]
        %v5193 = vld [vmem:[#allocation2 + $0x88] sm:$0xff]
        %v5194 = vld [vmem:[#allocation2 + $0x90] sm:$0xff]
        %v5195 = vld [vmem:[#allocation2 + $0x98] sm:$0xff]
        %v5196 = vld [vmem:[#allocation2 + $0xa0] sm:$0xff]
        %v5197 = vld [vmem:[#allocation2 + $0xa8] sm:$0xff]
        %v5198 = vld [vmem:[#allocation2 + $0xb0] sm:$0xff]
        %v5199 = vld [vmem:[#allocation2 + $0xb8] sm:$0xff]
        %v5200 = vld [vmem:[#allocation2 + $0xc0] sm:$0xff]
        %v5201 = vld [vmem:[#allocation2 + $0xc8] sm:$0xff]
        %v5202 = vld [vmem:[#allocation2 + $0xd0] sm:$0xff]
        %v5203 = vld [vmem:[#allocation2 + $0xd8] sm:$0xff]
        %v5204 = vld [vmem:[#allocation2 + $0xe0] sm:$0xff]
        %v5205 = vld [vmem:[#allocation2 + $0xe8] sm:$0xff]
        %v5206 = vld [vmem:[#allocation2 + $0xf0] sm:$0xff]
        %v5207 = vld [vmem:[#allocation2 + $0xf8] sm:$0xff]
        %v5208 = vld [vmem:[#allocation2 + $0x100] sm:$0xff]
        %v5209 = vld [vmem:[#allocation2 + $0x108] sm:$0xff]
        %v5210 = vld [vmem:[#allocation2 + $0x110] sm:$0xff]
        %v5211 = vld [vmem:[#allocation2 + $0x118] sm:$0xff]
        %v5212 = vld [vmem:[#allocation2 + $0x120] sm:$0xff]
        %v5213 = vld [vmem:[#allocation2 + $0x128] sm:$0xff]
        %v5214 = vld [vmem:[#allocation2 + $0x130] sm:$0xff]
        %v5215 = vld [vmem:[#allocation2 + $0x138] sm:$0xff]
        %v5216 = vld [vmem:[#allocation2 + $0x140] sm:$0xff]
        %v5217 = vld [vmem:[#allocation2 + $0x148] sm:$0xff]
        %v5218 = vld [vmem:[#allocation2 + $0x150] sm:$0xff]
        %v5219 = vld [vmem:[#allocation2 + $0x158] sm:$0xff]
        %v5220 = vld [vmem:[#allocation2 + $0x160] sm:$0xff]
        %v5221 = vld [vmem:[#allocation2 + $0x168] sm:$0xff]
        %v5222 = vld [vmem:[#allocation2 + $0x170] sm:$0xff]
        %v5223 = vld [vmem:[#allocation2 + $0x178] sm:$0xff]
        %v5224 = vld [vmem:[#allocation2 + $0x180] sm:$0xff]
        %v5225 = vld [vmem:[#allocation2 + $0x188] sm:$0xff]
        %v5226 = vld [vmem:[#allocation2 + $0x190] sm:$0xff]
        %v5227 = vld [vmem:[#allocation2 + $0x198] sm:$0xff]
        %v5228 = vld [vmem:[#allocation2 + $0x1a0] sm:$0xff]
        %v5229 = vld [vmem:[#allocation2 + $0x1a8] sm:$0xff]
        %v5230 = vld [vmem:[#allocation2 + $0x1b0] sm:$0xff]
        %v5231 = vld [vmem:[#allocation2 + $0x1b8] sm:$0xff]
        %v5232 = vld [vmem:[#allocation2 + $0x1c0] sm:$0xff]
        %v5233 = vld [vmem:[#allocation2 + $0x1c8] sm:$0xff]
        %v5234 = vld [vmem:[#allocation2 + $0x1d0] sm:$0xff]
        %v5235 = vld [vmem:[#allocation2 + $0x1d8] sm:$0xff]
        %v5236 = vld [vmem:[#allocation2 + $0x1e0] sm:$0xff]
        %v5237 = vld [vmem:[#allocation2 + $0x1e8] sm:$0xff]
        %v5238 = vld [vmem:[#allocation2 + $0x1f0] sm:$0xff]
        %v5239 = vld [vmem:[#allocation2 + $0x1f8] sm:$0xff]
        %v5240 = vld [vmem:[#allocation2 + $0x200] sm:$0xff]
        %v5241 = vld [vmem:[#allocation2 + $0x208] sm:$0xff]
        %v5242 = vld [vmem:[#allocation2 + $0x210] sm:$0xff]
        %v5243 = vld [vmem:[#allocation2 + $0x218] sm:$0xff]
        %v5244 = vld [vmem:[#allocation2 + $0x220] sm:$0xff]
        %v5245 = vld [vmem:[#allocation2 + $0x228] sm:$0xff]
        %v5246 = vld [vmem:[#allocation2 + $0x230] sm:$0xff]
        %v5247 = vld [vmem:[#allocation2 + $0x238] sm:$0xff]
        %v5248 = vld [vmem:[#allocation2 + $0x240] sm:$0xff]
        %v5249 = vld [vmem:[#allocation2 + $0x248] sm:$0xff]
        %v5250 = vld [vmem:[#allocation2 + $0x250] sm:$0xff]
        %v5251 = vld [vmem:[#allocation2 + $0x258] sm:$0xff]
        %v5252 = vld [vmem:[#allocation2 + $0x260] sm:$0xff]
        %v5253 = vld [vmem:[#allocation2 + $0x268] sm:$0xff]
        %v5254 = vld [vmem:[#allocation2 + $0x270] sm:$0xff]
        %v5255 = vld [vmem:[#allocation2 + $0x278] sm:$0xff]
        %v5256 = vld [vmem:[#allocation2 + $0x280] sm:$0xff]
        %v5257 = vld [vmem:[#allocation2 + $0x288] sm:$0xff]
        %v5258 = vld [vmem:[#allocation2 + $0x290] sm:$0xff]
        %v5259 = vld [vmem:[#allocation2 + $0x298] sm:$0xff]
        %v5260 = vld [vmem:[#allocation2 + $0x2a0] sm:$0xff]
        %v5261 = vld [vmem:[#allocation2 + $0x2a8] sm:$0xff]
        %v5262 = vld [vmem:[#allocation2 + $0x2b0] sm:$0xff]
        %v5263 = vld [vmem:[#allocation2 + $0x2b8] sm:$0xff]
        %v5264 = vld [vmem:[#allocation2 + $0x2c0] sm:$0xff]
        %v5265 = vld [vmem:[#allocation2 + $0x2c8] sm:$0xff]
        %v5266 = vld [vmem:[#allocation2 + $0x2d0] sm:$0xff]
        %v5267 = vld [vmem:[#allocation2 + $0x2d8] sm:$0xff]
        %v5268 = vld [vmem:[#allocation2 + $0x2e0] sm:$0xff]
        %v5269 = vld [vmem:[#allocation2 + $0x2e8] sm:$0xff]
        %v5270 = vld [vmem:[#allocation2 + $0x2f0] sm:$0xff]
        %v5271 = vld [vmem:[#allocation2 + $0x2f8] sm:$0xff]
        %v5272 = vld [vmem:[#allocation2 + $0x300] sm:$0xff]
        %v5273 = vld [vmem:[#allocation2 + $0x308] sm:$0xff]
        %v5274 = vld [vmem:[#allocation2 + $0x310] sm:$0xff]
        %v5275 = vld [vmem:[#allocation2 + $0x318] sm:$0xff]
        %v5276 = vld [vmem:[#allocation2 + $0x320] sm:$0xff]
        %v5277 = vld [vmem:[#allocation2 + $0x328] sm:$0xff]
        %v5278 = vld [vmem:[#allocation2 + $0x330] sm:$0xff]
        %v5279 = vld [vmem:[#allocation2 + $0x338] sm:$0xff]
        %v5280 = vld [vmem:[#allocation2 + $0x340] sm:$0xff]
        %v5281 = vld [vmem:[#allocation2 + $0x348] sm:$0xff]
        %v5282 = vld [vmem:[#allocation2 + $0x350] sm:$0xff]
        %v5283 = vld [vmem:[#allocation2 + $0x358] sm:$0xff]
        %v5284 = vld [vmem:[#allocation2 + $0x360] sm:$0xff]
        %v5285 = vld [vmem:[#allocation2 + $0x368] sm:$0xff]
        %v5286 = vld [vmem:[#allocation2 + $0x370] sm:$0xff]
        %v5287 = vld [vmem:[#allocation2 + $0x378] sm:$0xff]
        %v5288 = vld [vmem:[#allocation2 + $0x380] sm:$0xff]
        %v5289 = vld [vmem:[#allocation2 + $0x388] sm:$0xff]
        %v5290 = vld [vmem:[#allocation2 + $0x390] sm:$0xff]
        %v5291 = vld [vmem:[#allocation2 + $0x398] sm:$0xff]
        %v5292 = vld [vmem:[#allocation2 + $0x3a0] sm:$0xff]
        %v5293 = vld [vmem:[#allocation2 + $0x3a8] sm:$0xff]
        %v5294 = vld [vmem:[#allocation2 + $0x3b0] sm:$0xff]
        %v5295 = vld [vmem:[#allocation2 + $0x3b8] sm:$0xff]
        %v5296 = vld [vmem:[#allocation2 + $0x3c0] sm:$0xff]
        %v5297 = vld [vmem:[#allocation2 + $0x3c8] sm:$0xff]
        %v5298 = vld [vmem:[#allocation2 + $0x3d0] sm:$0xff]
        %v5299 = vld [vmem:[#allocation2 + $0x3d8] sm:$0xff]
        %v5300 = vld [vmem:[#allocation2 + $0x3e0] sm:$0xff]
        %v5301 = vld [vmem:[#allocation2 + $0x3e8] sm:$0xff]
        %v5302 = vld [vmem:[#allocation2 + $0x3f0] sm:$0xff]
        %v5303 = vld [vmem:[#allocation2 + $0x3f8] sm:$0xff]
        %v5304 = vmul.f32 %v5112, %v5176
        %v5305 = vmul.f32 %v5112, %v5177
        %v5306 = vmul.f32 %v5113, %v5178
        %v5307 = vmul.f32 %v5113, %v5179
        %v5308 = vmul.f32 %v5114, %v5180
        %v5309 = vmul.f32 %v5114, %v5181
        %v5310 = vmul.f32 %v5115, %v5182
        %v5311 = vmul.f32 %v5115, %v5183
        %v5312 = vmul.f32 %v5116, %v5184
        %v5313 = vmul.f32 %v5116, %v5185
        %v5314 = vmul.f32 %v5117, %v5186
        %v5315 = vmul.f32 %v5117, %v5187
        %v5316 = vmul.f32 %v5118, %v5188
        %v5317 = vmul.f32 %v5118, %v5189
        %v5318 = vmul.f32 %v5119, %v5190
        %v5319 = vmul.f32 %v5119, %v5191
        %v5320 = vmul.f32 %v5120, %v5192
        %v5321 = vmul.f32 %v5120, %v5193
        %v5322 = vmul.f32 %v5121, %v5194
        %v5323 = vmul.f32 %v5121, %v5195
        %v5324 = vmul.f32 %v5122, %v5196
        %v5325 = vmul.f32 %v5122, %v5197
        %v5326 = vmul.f32 %v5123, %v5198
        %v5327 = vmul.f32 %v5123, %v5199
        %v5328 = vmul.f32 %v5124, %v5200
        %v5329 = vmul.f32 %v5124, %v5201
        %v5330 = vmul.f32 %v5125, %v5202
        %v5331 = vmul.f32 %v5125, %v5203
        %v5332 = vmul.f32 %v5126, %v5204
        %v5333 = vmul.f32 %v5126, %v5205
        %v5334 = vmul.f32 %v5127, %v5206
        %v5335 = vmul.f32 %v5127, %v5207
        %v5336 = vmul.f32 %v5128, %v5208
        %v5337 = vmul.f32 %v5128, %v5209
        %v5338 = vmul.f32 %v5129, %v5210
        %v5339 = vmul.f32 %v5129, %v5211
        %v5340 = vmul.f32 %v5130, %v5212
        %v5341 = vmul.f32 %v5130, %v5213
        %v5342 = vmul.f32 %v5131, %v5214
        %v5343 = vmul.f32 %v5131, %v5215
        %v5344 = vmul.f32 %v5132, %v5216
        %v5345 = vmul.f32 %v5132, %v5217
        %v5346 = vmul.f32 %v5133, %v5218
        %v5347 = vmul.f32 %v5133, %v5219
        %v5348 = vmul.f32 %v5134, %v5220
        %v5349 = vmul.f32 %v5134, %v5221
        %v5350 = vmul.f32 %v5135, %v5222
        %v5351 = vmul.f32 %v5135, %v5223
        %v5352 = vmul.f32 %v5136, %v5224
        %v5353 = vmul.f32 %v5136, %v5225
        %v5354 = vmul.f32 %v5137, %v5226
        %v5355 = vmul.f32 %v5137, %v5227
        %v5356 = vmul.f32 %v5138, %v5228
        %v5357 = vmul.f32 %v5138, %v5229
        %v5358 = vmul.f32 %v5139, %v5230
        %v5359 = vmul.f32 %v5139, %v5231
        %v5360 = vmul.f32 %v5140, %v5232
        %v5361 = vmul.f32 %v5140, %v5233
        %v5362 = vmul.f32 %v5141, %v5234
        %v5363 = vmul.f32 %v5141, %v5235
        %v5364 = vmul.f32 %v5142, %v5236
        %v5365 = vmul.f32 %v5142, %v5237
        %v5366 = vmul.f32 %v5143, %v5238
        %v5367 = vmul.f32 %v5143, %v5239
        %v5368 = vmul.f32 %v5144, %v5240
        %v5369 = vmul.f32 %v5144, %v5241
        %v5370 = vmul.f32 %v5145, %v5242
        %v5371 = vmul.f32 %v5145, %v5243
        %v5372 = vmul.f32 %v5146, %v5244
        %v5373 = vmul.f32 %v5146, %v5245
        %v5374 = vmul.f32 %v5147, %v5246
        %v5375 = vmul.f32 %v5147, %v5247
        %v5376 = vmul.f32 %v5148, %v5248
        %v5377 = vmul.f32 %v5148, %v5249
        %v5378 = vmul.f32 %v5149, %v5250
        %v5379 = vmul.f32 %v5149, %v5251
        %v5380 = vmul.f32 %v5150, %v5252
        %v5381 = vmul.f32 %v5150, %v5253
        %v5382 = vmul.f32 %v5151, %v5254
        %v5383 = vmul.f32 %v5151, %v5255
        %v5384 = vmul.f32 %v5152, %v5256
        %v5385 = vmul.f32 %v5152, %v5257
        %v5386 = vmul.f32 %v5153, %v5258
        %v5387 = vmul.f32 %v5153, %v5259
        %v5388 = vmul.f32 %v5154, %v5260
        %v5389 = vmul.f32 %v5154, %v5261
        %v5390 = vmul.f32 %v5155, %v5262
        %v5391 = vmul.f32 %v5155, %v5263
        %v5392 = vmul.f32 %v5156, %v5264
        %v5393 = vmul.f32 %v5156, %v5265
        %v5394 = vmul.f32 %v5157, %v5266
        %v5395 = vmul.f32 %v5157, %v5267
        %v5396 = vmul.f32 %v5158, %v5268
        %v5397 = vmul.f32 %v5158, %v5269
        %v5398 = vmul.f32 %v5159, %v5270
        %v5399 = vmul.f32 %v5159, %v5271
        %v5400 = vmul.f32 %v5160, %v5272
        %v5401 = vmul.f32 %v5160, %v5273
        %v5402 = vmul.f32 %v5161, %v5274
        %v5403 = vmul.f32 %v5161, %v5275
        %v5404 = vmul.f32 %v5162, %v5276
        %v5405 = vmul.f32 %v5162, %v5277
        %v5406 = vmul.f32 %v5163, %v5278
        %v5407 = vmul.f32 %v5163, %v5279
        %v5408 = vmul.f32 %v5164, %v5280
        %v5409 = vmul.f32 %v5164, %v5281
        %v5410 = vmul.f32 %v5165, %v5282
        %v5411 = vmul.f32 %v5165, %v5283
        %v5412 = vmul.f32 %v5166, %v5284
        %v5413 = vmul.f32 %v5166, %v5285
        %v5414 = vmul.f32 %v5167, %v5286
        %v5415 = vmul.f32 %v5167, %v5287
        %v5416 = vmul.f32 %v5168, %v5288
        %v5417 = vmul.f32 %v5168, %v5289
        %v5418 = vmul.f32 %v5169, %v5290
        %v5419 = vmul.f32 %v5169, %v5291
        %v5420 = vmul.f32 %v5170, %v5292
        %v5421 = vmul.f32 %v5170, %v5293
        %v5422 = vmul.f32 %v5171, %v5294
        %v5423 = vmul.f32 %v5171, %v5295
        %v5424 = vmul.f32 %v5172, %v5296
        %v5425 = vmul.f32 %v5172, %v5297
        %v5426 = vmul.f32 %v5173, %v5298
        %v5427 = vmul.f32 %v5173, %v5299
        %v5428 = vmul.f32 %v5174, %v5300
        %v5429 = vmul.f32 %v5174, %v5301
        %v5430 = vmul.f32 %v5175, %v5302
        %v5431 = vmul.f32 %v5175, %v5303
        %5432 = vmatpush.msra.mxu0 %v630
        %5433 = vmatpush.msra.mxu0 %v627
        %5434 = vmatpush.msra.mxu0 %v624
        %5435 = vmatpush.msra.mxu0 %v621
        %5436 = vmatpush.msra.mxu0 %v618
        %5437 = vmatpush.msra.mxu0 %v615
        %5438 = vmatpush.msra.mxu0 %v612
        %5439 = vmatpush.msra.mxu0 %v609
        %5440 = vmatpush.msra.mxu0 %v606
        %5441 = vmatpush.msra.mxu0 %v603
        %5442 = vmatpush.msra.mxu0 %v600
        %5443 = vmatpush.msra.mxu0 %v597
        %5444 = vmatpush.msra.mxu0 %v594
        %5445 = vmatpush.msra.mxu0 %v591
        %5446 = vmatpush.msra.mxu0 %v588
        %5447 = vmatpush.msra.mxu0 %v585
        %5448 = vmatmul.f32.gmra.mxu0 %v5304
        %v5449 = vpop.f32.mrf.mxu0
        %v5450 = vadd.f32 0.0, %v5449
        %5451 = vmatmul.f32.gmra.mxu0 %v5306
        %v5452 = vpop.f32.mrf.mxu0
        %v5453 = vadd.f32 0.0, %v5452
        %5454 = vmatmul.f32.gmra.mxu0 %v5308
        %v5455 = vpop.f32.mrf.mxu0
        %v5456 = vadd.f32 0.0, %v5455
        %5457 = vmatmul.f32.gmra.mxu0 %v5310
        %v5458 = vpop.f32.mrf.mxu0
        %v5459 = vadd.f32 0.0, %v5458
        %5460 = vmatmul.f32.gmra.mxu0 %v5312
        %v5461 = vpop.f32.mrf.mxu0
        %v5462 = vadd.f32 0.0, %v5461
        %5463 = vmatmul.f32.gmra.mxu0 %v5314
        %v5464 = vpop.f32.mrf.mxu0
        %v5465 = vadd.f32 0.0, %v5464
        %5466 = vmatmul.f32.gmra.mxu0 %v5316
        %v5467 = vpop.f32.mrf.mxu0
        %v5468 = vadd.f32 0.0, %v5467
        %5469 = vmatmul.f32.gmra.mxu0 %v5318
        %v5470 = vpop.f32.mrf.mxu0
        %v5471 = vadd.f32 0.0, %v5470
        %5472 = vmatmul.f32.gmra.mxu0 %v5320
        %v5473 = vpop.f32.mrf.mxu0
        %v5474 = vadd.f32 0.0, %v5473
        %5475 = vmatmul.f32.gmra.mxu0 %v5322
        %v5476 = vpop.f32.mrf.mxu0
        %v5477 = vadd.f32 0.0, %v5476
        %5478 = vmatmul.f32.gmra.mxu0 %v5324
        %v5479 = vpop.f32.mrf.mxu0
        %v5480 = vadd.f32 0.0, %v5479
        %5481 = vmatmul.f32.gmra.mxu0 %v5326
        %v5482 = vpop.f32.mrf.mxu0
        %v5483 = vadd.f32 0.0, %v5482
        %5484 = vmatmul.f32.gmra.mxu0 %v5328
        %v5485 = vpop.f32.mrf.mxu0
        %v5486 = vadd.f32 0.0, %v5485
        %5487 = vmatmul.f32.gmra.mxu0 %v5330
        %v5488 = vpop.f32.mrf.mxu0
        %v5489 = vadd.f32 0.0, %v5488
        %5490 = vmatmul.f32.gmra.mxu0 %v5332
        %v5491 = vpop.f32.mrf.mxu0
        %v5492 = vadd.f32 0.0, %v5491
        %5493 = vmatmul.f32.gmra.mxu0 %v5334
        %v5494 = vpop.f32.mrf.mxu0
        %v5495 = vadd.f32 0.0, %v5494
        %5496 = vmatmul.f32.gmra.mxu0 %v5336
        %v5497 = vpop.f32.mrf.mxu0
        %v5498 = vadd.f32 0.0, %v5497
        %5499 = vmatmul.f32.gmra.mxu0 %v5338
        %v5500 = vpop.f32.mrf.mxu0
        %v5501 = vadd.f32 0.0, %v5500
        %5502 = vmatmul.f32.gmra.mxu0 %v5340
        %v5503 = vpop.f32.mrf.mxu0
        %v5504 = vadd.f32 0.0, %v5503
        %5505 = vmatmul.f32.gmra.mxu0 %v5342
        %v5506 = vpop.f32.mrf.mxu0
        %v5507 = vadd.f32 0.0, %v5506
        %5508 = vmatmul.f32.gmra.mxu0 %v5344
        %v5509 = vpop.f32.mrf.mxu0
        %v5510 = vadd.f32 0.0, %v5509
        %5511 = vmatmul.f32.gmra.mxu0 %v5346
        %v5512 = vpop.f32.mrf.mxu0
        %v5513 = vadd.f32 0.0, %v5512
        %5514 = vmatmul.f32.gmra.mxu0 %v5348
        %v5515 = vpop.f32.mrf.mxu0
        %v5516 = vadd.f32 0.0, %v5515
        %5517 = vmatmul.f32.gmra.mxu0 %v5350
        %v5518 = vpop.f32.mrf.mxu0
        %v5519 = vadd.f32 0.0, %v5518
        %5520 = vmatmul.f32.gmra.mxu0 %v5352
        %v5521 = vpop.f32.mrf.mxu0
        %v5522 = vadd.f32 0.0, %v5521
        %5523 = vmatmul.f32.gmra.mxu0 %v5354
        %v5524 = vpop.f32.mrf.mxu0
        %v5525 = vadd.f32 0.0, %v5524
        %5526 = vmatmul.f32.gmra.mxu0 %v5356
        %v5527 = vpop.f32.mrf.mxu0
        %v5528 = vadd.f32 0.0, %v5527
        %5529 = vmatmul.f32.gmra.mxu0 %v5358
        %v5530 = vpop.f32.mrf.mxu0
        %v5531 = vadd.f32 0.0, %v5530
        %5532 = vmatmul.f32.gmra.mxu0 %v5360
        %v5533 = vpop.f32.mrf.mxu0
        %v5534 = vadd.f32 0.0, %v5533
        %5535 = vmatmul.f32.gmra.mxu0 %v5362
        %v5536 = vpop.f32.mrf.mxu0
        %v5537 = vadd.f32 0.0, %v5536
        %5538 = vmatmul.f32.gmra.mxu0 %v5364
        %v5539 = vpop.f32.mrf.mxu0
        %v5540 = vadd.f32 0.0, %v5539
        %5541 = vmatmul.f32.gmra.mxu0 %v5366
        %v5542 = vpop.f32.mrf.mxu0
        %v5543 = vadd.f32 0.0, %v5542
        %5544 = vmatmul.f32.gmra.mxu0 %v5368
        %v5545 = vpop.f32.mrf.mxu0
        %v5546 = vadd.f32 0.0, %v5545
        %5547 = vmatmul.f32.gmra.mxu0 %v5370
        %v5548 = vpop.f32.mrf.mxu0
        %v5549 = vadd.f32 0.0, %v5548
        %5550 = vmatmul.f32.gmra.mxu0 %v5372
        %v5551 = vpop.f32.mrf.mxu0
        %v5552 = vadd.f32 0.0, %v5551
        %5553 = vmatmul.f32.gmra.mxu0 %v5374
        %v5554 = vpop.f32.mrf.mxu0
        %v5555 = vadd.f32 0.0, %v5554
        %5556 = vmatmul.f32.gmra.mxu0 %v5376
        %v5557 = vpop.f32.mrf.mxu0
        %v5558 = vadd.f32 0.0, %v5557
        %5559 = vmatmul.f32.gmra.mxu0 %v5378
        %v5560 = vpop.f32.mrf.mxu0
        %v5561 = vadd.f32 0.0, %v5560
        %5562 = vmatmul.f32.gmra.mxu0 %v5380
        %v5563 = vpop.f32.mrf.mxu0
        %v5564 = vadd.f32 0.0, %v5563
        %5565 = vmatmul.f32.gmra.mxu0 %v5382
        %v5566 = vpop.f32.mrf.mxu0
        %v5567 = vadd.f32 0.0, %v5566
        %5568 = vmatmul.f32.gmra.mxu0 %v5384
        %v5569 = vpop.f32.mrf.mxu0
        %v5570 = vadd.f32 0.0, %v5569
        %5571 = vmatmul.f32.gmra.mxu0 %v5386
        %v5572 = vpop.f32.mrf.mxu0
        %v5573 = vadd.f32 0.0, %v5572
        %5574 = vmatmul.f32.gmra.mxu0 %v5388
        %v5575 = vpop.f32.mrf.mxu0
        %v5576 = vadd.f32 0.0, %v5575
        %5577 = vmatmul.f32.gmra.mxu0 %v5390
        %v5578 = vpop.f32.mrf.mxu0
        %v5579 = vadd.f32 0.0, %v5578
        %5580 = vmatmul.f32.gmra.mxu0 %v5392
        %v5581 = vpop.f32.mrf.mxu0
        %v5582 = vadd.f32 0.0, %v5581
        %5583 = vmatmul.f32.gmra.mxu0 %v5394
        %v5584 = vpop.f32.mrf.mxu0
        %v5585 = vadd.f32 0.0, %v5584
        %5586 = vmatmul.f32.gmra.mxu0 %v5396
        %v5587 = vpop.f32.mrf.mxu0
        %v5588 = vadd.f32 0.0, %v5587
        %5589 = vmatmul.f32.gmra.mxu0 %v5398
        %v5590 = vpop.f32.mrf.mxu0
        %v5591 = vadd.f32 0.0, %v5590
        %5592 = vmatmul.f32.gmra.mxu0 %v5400
        %v5593 = vpop.f32.mrf.mxu0
        %v5594 = vadd.f32 0.0, %v5593
        %5595 = vmatmul.f32.gmra.mxu0 %v5402
        %v5596 = vpop.f32.mrf.mxu0
        %v5597 = vadd.f32 0.0, %v5596
        %5598 = vmatmul.f32.gmra.mxu0 %v5404
        %v5599 = vpop.f32.mrf.mxu0
        %v5600 = vadd.f32 0.0, %v5599
        %5601 = vmatmul.f32.gmra.mxu0 %v5406
        %v5602 = vpop.f32.mrf.mxu0
        %v5603 = vadd.f32 0.0, %v5602
        %5604 = vmatmul.f32.gmra.mxu0 %v5408
        %v5605 = vpop.f32.mrf.mxu0
        %v5606 = vadd.f32 0.0, %v5605
        %5607 = vmatmul.f32.gmra.mxu0 %v5410
        %v5608 = vpop.f32.mrf.mxu0
        %v5609 = vadd.f32 0.0, %v5608
        %5610 = vmatmul.f32.gmra.mxu0 %v5412
        %v5611 = vpop.f32.mrf.mxu0
        %v5612 = vadd.f32 0.0, %v5611
        %5613 = vmatmul.f32.gmra.mxu0 %v5414
        %v5614 = vpop.f32.mrf.mxu0
        %v5615 = vadd.f32 0.0, %v5614
        %5616 = vmatmul.f32.gmra.mxu0 %v5416
        %v5617 = vpop.f32.mrf.mxu0
        %v5618 = vadd.f32 0.0, %v5617
        %5619 = vmatmul.f32.gmra.mxu0 %v5418
        %v5620 = vpop.f32.mrf.mxu0
        %v5621 = vadd.f32 0.0, %v5620
        %5622 = vmatmul.f32.gmra.mxu0 %v5420
        %v5623 = vpop.f32.mrf.mxu0
        %v5624 = vadd.f32 0.0, %v5623
        %5625 = vmatmul.f32.gmra.mxu0 %v5422
        %v5626 = vpop.f32.mrf.mxu0
        %v5627 = vadd.f32 0.0, %v5626
        %5628 = vmatmul.f32.gmra.mxu0 %v5424
        %v5629 = vpop.f32.mrf.mxu0
        %v5630 = vadd.f32 0.0, %v5629
        %5631 = vmatmul.f32.gmra.mxu0 %v5426
        %v5632 = vpop.f32.mrf.mxu0
        %v5633 = vadd.f32 0.0, %v5632
        %5634 = vmatmul.f32.gmra.mxu0 %v5428
        %v5635 = vpop.f32.mrf.mxu0
        %v5636 = vadd.f32 0.0, %v5635
        %5637 = vmatmul.f32.gmra.mxu0 %v5430
        %v5638 = vpop.f32.mrf.mxu0
        %v5639 = vadd.f32 0.0, %v5638
        %5640 = vdwg.mxu0
        %5641 = vmatpush.msra.mxu0 %v678
        %5642 = vmatpush.msra.mxu0 %v675
        %5643 = vmatpush.msra.mxu0 %v672
        %5644 = vmatpush.msra.mxu0 %v669
        %5645 = vmatpush.msra.mxu0 %v666
        %5646 = vmatpush.msra.mxu0 %v663
        %5647 = vmatpush.msra.mxu0 %v660
        %5648 = vmatpush.msra.mxu0 %v657
        %5649 = vmatpush.msra.mxu0 %v654
        %5650 = vmatpush.msra.mxu0 %v651
        %5651 = vmatpush.msra.mxu0 %v648
        %5652 = vmatpush.msra.mxu0 %v645
        %5653 = vmatpush.msra.mxu0 %v642
        %5654 = vmatpush.msra.mxu0 %v639
        %5655 = vmatpush.msra.mxu0 %v636
        %5656 = vmatpush.msra.mxu0 %v633
        %5657 = vmatmul.f32.gmra.mxu0 %v5305
        %v5658 = vpop.f32.mrf.mxu0
        %v5659 = vadd.f32 %v5450, %v5658
        %5660 = vmatmul.f32.gmra.mxu0 %v5307
        %v5661 = vpop.f32.mrf.mxu0
        %v5662 = vadd.f32 %v5453, %v5661
        %5663 = vmatmul.f32.gmra.mxu0 %v5309
        %v5664 = vpop.f32.mrf.mxu0
        %v5665 = vadd.f32 %v5456, %v5664
        %5666 = vmatmul.f32.gmra.mxu0 %v5311
        %v5667 = vpop.f32.mrf.mxu0
        %v5668 = vadd.f32 %v5459, %v5667
        %5669 = vmatmul.f32.gmra.mxu0 %v5313
        %v5670 = vpop.f32.mrf.mxu0
        %v5671 = vadd.f32 %v5462, %v5670
        %5672 = vmatmul.f32.gmra.mxu0 %v5315
        %v5673 = vpop.f32.mrf.mxu0
        %v5674 = vadd.f32 %v5465, %v5673
        %5675 = vmatmul.f32.gmra.mxu0 %v5317
        %v5676 = vpop.f32.mrf.mxu0
        %v5677 = vadd.f32 %v5468, %v5676
        %5678 = vmatmul.f32.gmra.mxu0 %v5319
        %v5679 = vpop.f32.mrf.mxu0
        %v5680 = vadd.f32 %v5471, %v5679
        %5681 = vmatmul.f32.gmra.mxu0 %v5321
        %v5682 = vpop.f32.mrf.mxu0
        %v5683 = vadd.f32 %v5474, %v5682
        %5684 = vmatmul.f32.gmra.mxu0 %v5323
        %v5685 = vpop.f32.mrf.mxu0
        %v5686 = vadd.f32 %v5477, %v5685
        %5687 = vmatmul.f32.gmra.mxu0 %v5325
        %v5688 = vpop.f32.mrf.mxu0
        %v5689 = vadd.f32 %v5480, %v5688
        %5690 = vmatmul.f32.gmra.mxu0 %v5327
        %v5691 = vpop.f32.mrf.mxu0
        %v5692 = vadd.f32 %v5483, %v5691
        %5693 = vmatmul.f32.gmra.mxu0 %v5329
        %v5694 = vpop.f32.mrf.mxu0
        %v5695 = vadd.f32 %v5486, %v5694
        %5696 = vmatmul.f32.gmra.mxu0 %v5331
        %v5697 = vpop.f32.mrf.mxu0
        %v5698 = vadd.f32 %v5489, %v5697
        %5699 = vmatmul.f32.gmra.mxu0 %v5333
        %v5700 = vpop.f32.mrf.mxu0
        %v5701 = vadd.f32 %v5492, %v5700
        %5702 = vmatmul.f32.gmra.mxu0 %v5335
        %v5703 = vpop.f32.mrf.mxu0
        %v5704 = vadd.f32 %v5495, %v5703
        %5705 = vmatmul.f32.gmra.mxu0 %v5337
        %v5706 = vpop.f32.mrf.mxu0
        %v5707 = vadd.f32 %v5498, %v5706
        %5708 = vmatmul.f32.gmra.mxu0 %v5339
        %v5709 = vpop.f32.mrf.mxu0
        %v5710 = vadd.f32 %v5501, %v5709
        %5711 = vmatmul.f32.gmra.mxu0 %v5341
        %v5712 = vpop.f32.mrf.mxu0
        %v5713 = vadd.f32 %v5504, %v5712
        %5714 = vmatmul.f32.gmra.mxu0 %v5343
        %v5715 = vpop.f32.mrf.mxu0
        %v5716 = vadd.f32 %v5507, %v5715
        %5717 = vmatmul.f32.gmra.mxu0 %v5345
        %v5718 = vpop.f32.mrf.mxu0
        %v5719 = vadd.f32 %v5510, %v5718
        %5720 = vmatmul.f32.gmra.mxu0 %v5347
        %v5721 = vpop.f32.mrf.mxu0
        %v5722 = vadd.f32 %v5513, %v5721
        %5723 = vmatmul.f32.gmra.mxu0 %v5349
        %v5724 = vpop.f32.mrf.mxu0
        %v5725 = vadd.f32 %v5516, %v5724
        %5726 = vmatmul.f32.gmra.mxu0 %v5351
        %v5727 = vpop.f32.mrf.mxu0
        %v5728 = vadd.f32 %v5519, %v5727
        %5729 = vmatmul.f32.gmra.mxu0 %v5353
        %v5730 = vpop.f32.mrf.mxu0
        %v5731 = vadd.f32 %v5522, %v5730
        %5732 = vmatmul.f32.gmra.mxu0 %v5355
        %v5733 = vpop.f32.mrf.mxu0
        %v5734 = vadd.f32 %v5525, %v5733
        %5735 = vmatmul.f32.gmra.mxu0 %v5357
        %v5736 = vpop.f32.mrf.mxu0
        %v5737 = vadd.f32 %v5528, %v5736
        %5738 = vmatmul.f32.gmra.mxu0 %v5359
        %v5739 = vpop.f32.mrf.mxu0
        %v5740 = vadd.f32 %v5531, %v5739
        %5741 = vmatmul.f32.gmra.mxu0 %v5361
        %v5742 = vpop.f32.mrf.mxu0
        %v5743 = vadd.f32 %v5534, %v5742
        %5744 = vmatmul.f32.gmra.mxu0 %v5363
        %v5745 = vpop.f32.mrf.mxu0
        %v5746 = vadd.f32 %v5537, %v5745
        %5747 = vmatmul.f32.gmra.mxu0 %v5365
        %v5748 = vpop.f32.mrf.mxu0
        %v5749 = vadd.f32 %v5540, %v5748
        %5750 = vmatmul.f32.gmra.mxu0 %v5367
        %v5751 = vpop.f32.mrf.mxu0
        %v5752 = vadd.f32 %v5543, %v5751
        %5753 = vmatmul.f32.gmra.mxu0 %v5369
        %v5754 = vpop.f32.mrf.mxu0
        %v5755 = vadd.f32 %v5546, %v5754
        %5756 = vmatmul.f32.gmra.mxu0 %v5371
        %v5757 = vpop.f32.mrf.mxu0
        %v5758 = vadd.f32 %v5549, %v5757
        %5759 = vmatmul.f32.gmra.mxu0 %v5373
        %v5760 = vpop.f32.mrf.mxu0
        %v5761 = vadd.f32 %v5552, %v5760
        %5762 = vmatmul.f32.gmra.mxu0 %v5375
        %v5763 = vpop.f32.mrf.mxu0
        %v5764 = vadd.f32 %v5555, %v5763
        %5765 = vmatmul.f32.gmra.mxu0 %v5377
        %v5766 = vpop.f32.mrf.mxu0
        %v5767 = vadd.f32 %v5558, %v5766
        %5768 = vmatmul.f32.gmra.mxu0 %v5379
        %v5769 = vpop.f32.mrf.mxu0
        %v5770 = vadd.f32 %v5561, %v5769
        %5771 = vmatmul.f32.gmra.mxu0 %v5381
        %v5772 = vpop.f32.mrf.mxu0
        %v5773 = vadd.f32 %v5564, %v5772
        %5774 = vmatmul.f32.gmra.mxu0 %v5383
        %v5775 = vpop.f32.mrf.mxu0
        %v5776 = vadd.f32 %v5567, %v5775
        %5777 = vmatmul.f32.gmra.mxu0 %v5385
        %v5778 = vpop.f32.mrf.mxu0
        %v5779 = vadd.f32 %v5570, %v5778
        %5780 = vmatmul.f32.gmra.mxu0 %v5387
        %v5781 = vpop.f32.mrf.mxu0
        %v5782 = vadd.f32 %v5573, %v5781
        %5783 = vmatmul.f32.gmra.mxu0 %v5389
        %v5784 = vpop.f32.mrf.mxu0
        %v5785 = vadd.f32 %v5576, %v5784
        %5786 = vmatmul.f32.gmra.mxu0 %v5391
        %v5787 = vpop.f32.mrf.mxu0
        %v5788 = vadd.f32 %v5579, %v5787
        %5789 = vmatmul.f32.gmra.mxu0 %v5393
        %v5790 = vpop.f32.mrf.mxu0
        %v5791 = vadd.f32 %v5582, %v5790
        %5792 = vmatmul.f32.gmra.mxu0 %v5395
        %v5793 = vpop.f32.mrf.mxu0
        %v5794 = vadd.f32 %v5585, %v5793
        %5795 = vmatmul.f32.gmra.mxu0 %v5397
        %v5796 = vpop.f32.mrf.mxu0
        %v5797 = vadd.f32 %v5588, %v5796
        %5798 = vmatmul.f32.gmra.mxu0 %v5399
        %v5799 = vpop.f32.mrf.mxu0
        %v5800 = vadd.f32 %v5591, %v5799
        %5801 = vmatmul.f32.gmra.mxu0 %v5401
        %v5802 = vpop.f32.mrf.mxu0
        %v5803 = vadd.f32 %v5594, %v5802
        %5804 = vmatmul.f32.gmra.mxu0 %v5403
        %v5805 = vpop.f32.mrf.mxu0
        %v5806 = vadd.f32 %v5597, %v5805
        %5807 = vmatmul.f32.gmra.mxu0 %v5405
        %v5808 = vpop.f32.mrf.mxu0
        %v5809 = vadd.f32 %v5600, %v5808
        %5810 = vmatmul.f32.gmra.mxu0 %v5407
        %v5811 = vpop.f32.mrf.mxu0
        %v5812 = vadd.f32 %v5603, %v5811
        %5813 = vmatmul.f32.gmra.mxu0 %v5409
        %v5814 = vpop.f32.mrf.mxu0
        %v5815 = vadd.f32 %v5606, %v5814
        %5816 = vmatmul.f32.gmra.mxu0 %v5411
        %v5817 = vpop.f32.mrf.mxu0
        %v5818 = vadd.f32 %v5609, %v5817
        %5819 = vmatmul.f32.gmra.mxu0 %v5413
        %v5820 = vpop.f32.mrf.mxu0
        %v5821 = vadd.f32 %v5612, %v5820
        %5822 = vmatmul.f32.gmra.mxu0 %v5415
        %v5823 = vpop.f32.mrf.mxu0
        %v5824 = vadd.f32 %v5615, %v5823
        %5825 = vmatmul.f32.gmra.mxu0 %v5417
        %v5826 = vpop.f32.mrf.mxu0
        %v5827 = vadd.f32 %v5618, %v5826
        %5828 = vmatmul.f32.gmra.mxu0 %v5419
        %v5829 = vpop.f32.mrf.mxu0
        %v5830 = vadd.f32 %v5621, %v5829
        %5831 = vmatmul.f32.gmra.mxu0 %v5421
        %v5832 = vpop.f32.mrf.mxu0
        %v5833 = vadd.f32 %v5624, %v5832
        %5834 = vmatmul.f32.gmra.mxu0 %v5423
        %v5835 = vpop.f32.mrf.mxu0
        %v5836 = vadd.f32 %v5627, %v5835
        %5837 = vmatmul.f32.gmra.mxu0 %v5425
        %v5838 = vpop.f32.mrf.mxu0
        %v5839 = vadd.f32 %v5630, %v5838
        %5840 = vmatmul.f32.gmra.mxu0 %v5427
        %v5841 = vpop.f32.mrf.mxu0
        %v5842 = vadd.f32 %v5633, %v5841
        %5843 = vmatmul.f32.gmra.mxu0 %v5429
        %v5844 = vpop.f32.mrf.mxu0
        %v5845 = vadd.f32 %v5636, %v5844
        %5846 = vmatmul.f32.gmra.mxu0 %v5431
        %v5847 = vpop.f32.mrf.mxu0
        %v5848 = vadd.f32 %v5639, %v5847
        %5849 = vdwg.mxu0
        %v5850 = vld [vmem:[%s3] sm:$0xff]
        %v5851 = vld [vmem:[%s3 + $0x8] sm:$0xff]
        %v5852 = vld [vmem:[%s3 + $0x10] sm:$0xff]
        %v5853 = vld [vmem:[%s3 + $0x18] sm:$0xff]
        %v5854 = vld [vmem:[%s4] sm:$0x1]
        %v5856 = vperm.slane %v5854, 0
        %v5859 = vsel %vm737, %v5659, 0
        %v5862 = vsel %vm737, %v5662, 0
        %v5865 = vsel %vm737, %v5665, 0
        %v5868 = vsel %vm737, %v5668, 0
        %v5871 = vsel %vm737, %v5671, 0
        %v5874 = vsel %vm737, %v5674, 0
        %v5877 = vsel %vm737, %v5677, 0
        %v5880 = vsel %vm737, %v5680, 0
        %v5883 = vsel %vm737, %v5683, 0
        %v5886 = vsel %vm737, %v5686, 0
        %v5889 = vsel %vm737, %v5689, 0
        %v5892 = vsel %vm737, %v5692, 0
        %v5895 = vsel %vm737, %v5695, 0
        %v5898 = vsel %vm737, %v5698, 0
        %v5901 = vsel %vm737, %v5701, 0
        %v5904 = vsel %vm737, %v5704, 0
        %v5907 = vsel %vm737, %v5707, 0
        %v5910 = vsel %vm737, %v5710, 0
        %v5913 = vsel %vm737, %v5713, 0
        %v5916 = vsel %vm737, %v5716, 0
        %v5919 = vsel %vm737, %v5719, 0
        %v5922 = vsel %vm737, %v5722, 0
        %v5925 = vsel %vm737, %v5725, 0
        %v5928 = vsel %vm737, %v5728, 0
        %v5931 = vsel %vm737, %v5731, 0
        %v5934 = vsel %vm737, %v5734, 0
        %v5937 = vsel %vm737, %v5737, 0
        %v5940 = vsel %vm737, %v5740, 0
        %v5943 = vsel %vm737, %v5743, 0
        %v5946 = vsel %vm737, %v5746, 0
        %v5949 = vsel %vm737, %v5749, 0
        %v5952 = vsel %vm737, %v5752, 0
        %v5955 = vsel %vm737, %v5755, 0
        %v5958 = vsel %vm737, %v5758, 0
        %v5961 = vsel %vm737, %v5761, 0
        %v5964 = vsel %vm737, %v5764, 0
        %v5967 = vsel %vm737, %v5767, 0
        %v5970 = vsel %vm737, %v5770, 0
        %v5973 = vsel %vm737, %v5773, 0
        %v5976 = vsel %vm737, %v5776, 0
        %v5979 = vsel %vm737, %v5779, 0
        %v5982 = vsel %vm737, %v5782, 0
        %v5985 = vsel %vm737, %v5785, 0
        %v5988 = vsel %vm737, %v5788, 0
        %v5991 = vsel %vm737, %v5791, 0
        %v5994 = vsel %vm737, %v5794, 0
        %v5997 = vsel %vm737, %v5797, 0
        %v6000 = vsel %vm737, %v5800, 0
        %v6003 = vsel %vm737, %v5803, 0
        %v6006 = vsel %vm737, %v5806, 0
        %v6009 = vsel %vm737, %v5809, 0
        %v6012 = vsel %vm737, %v5812, 0
        %v6015 = vsel %vm737, %v5815, 0
        %v6018 = vsel %vm737, %v5818, 0
        %v6021 = vsel %vm737, %v5821, 0
        %v6024 = vsel %vm737, %v5824, 0
        %v6027 = vsel %vm737, %v5827, 0
        %v6030 = vsel %vm737, %v5830, 0
        %v6033 = vsel %vm737, %v5833, 0
        %v6036 = vsel %vm737, %v5836, 0
        %v6039 = vsel %vm737, %v5839, 0
        %v6042 = vsel %vm737, %v5842, 0
        %v6045 = vsel %vm737, %v5845, 0
        %v6048 = vsel %vm737, %v5848, 0
        %6050 = vmatpush.msra.mxu0 0.0
        %6051 = vmatpush.msra.mxu0 0.0
        %6052 = vmatpush.msra.mxu0 0.0
        %6053 = vmatpush.msra.mxu0 0.0
        %6054 = vmatpush.msra.mxu0 0.0
        %6055 = vmatpush.msra.mxu0 0.0
        %6056 = vmatpush.msra.mxu0 0.0
        %6057 = vmatpush.msra.mxu0 0.0
        %6058 = vmatpush.msra.mxu0 0.0
        %6059 = vmatpush.msra.mxu0 0.0
        %6060 = vmatpush.msra.mxu0 0.0
        %6061 = vmatpush.msra.mxu0 0.0
        %6062 = vmatpush.msra.mxu0 %v5853
        %6063 = vmatpush.msra.mxu0 %v5852
        %6064 = vmatpush.msra.mxu0 %v5851
        %6065 = vmatpush.msra.mxu0 %v5850
        %6066 = vmatmul.f32.gmra.mxu0 %v5859
        %v6067 = vpop.f32.mrf.mxu0
        %v6068 = vadd.f32 %v5856, %v6067
        %6069 = vmatmul.f32.gmra.mxu0 %v5862
        %v6070 = vpop.f32.mrf.mxu0
        %v6071 = vadd.f32 %v5856, %v6070
        %6072 = vmatmul.f32.gmra.mxu0 %v5865
        %v6073 = vpop.f32.mrf.mxu0
        %v6074 = vadd.f32 %v5856, %v6073
        %6075 = vmatmul.f32.gmra.mxu0 %v5868
        %v6076 = vpop.f32.mrf.mxu0
        %v6077 = vadd.f32 %v5856, %v6076
        %6078 = vmatmul.f32.gmra.mxu0 %v5871
        %v6079 = vpop.f32.mrf.mxu0
        %v6080 = vadd.f32 %v5856, %v6079
        %6081 = vmatmul.f32.gmra.mxu0 %v5874
        %v6082 = vpop.f32.mrf.mxu0
        %v6083 = vadd.f32 %v5856, %v6082
        %6084 = vmatmul.f32.gmra.mxu0 %v5877
        %v6085 = vpop.f32.mrf.mxu0
        %v6086 = vadd.f32 %v5856, %v6085
        %6087 = vmatmul.f32.gmra.mxu0 %v5880
        %v6088 = vpop.f32.mrf.mxu0
        %v6089 = vadd.f32 %v5856, %v6088
        %6090 = vmatmul.f32.gmra.mxu0 %v5883
        %v6091 = vpop.f32.mrf.mxu0
        %v6092 = vadd.f32 %v5856, %v6091
        %6093 = vmatmul.f32.gmra.mxu0 %v5886
        %v6094 = vpop.f32.mrf.mxu0
        %v6095 = vadd.f32 %v5856, %v6094
        %6096 = vmatmul.f32.gmra.mxu0 %v5889
        %v6097 = vpop.f32.mrf.mxu0
        %v6098 = vadd.f32 %v5856, %v6097
        %6099 = vmatmul.f32.gmra.mxu0 %v5892
        %v6100 = vpop.f32.mrf.mxu0
        %v6101 = vadd.f32 %v5856, %v6100
        %6102 = vmatmul.f32.gmra.mxu0 %v5895
        %v6103 = vpop.f32.mrf.mxu0
        %v6104 = vadd.f32 %v5856, %v6103
        %6105 = vmatmul.f32.gmra.mxu0 %v5898
        %v6106 = vpop.f32.mrf.mxu0
        %v6107 = vadd.f32 %v5856, %v6106
        %6108 = vmatmul.f32.gmra.mxu0 %v5901
        %v6109 = vpop.f32.mrf.mxu0
        %v6110 = vadd.f32 %v5856, %v6109
        %6111 = vmatmul.f32.gmra.mxu0 %v5904
        %v6112 = vpop.f32.mrf.mxu0
        %v6113 = vadd.f32 %v5856, %v6112
        %6114 = vmatmul.f32.gmra.mxu0 %v5907
        %v6115 = vpop.f32.mrf.mxu0
        %v6116 = vadd.f32 %v5856, %v6115
        %6117 = vmatmul.f32.gmra.mxu0 %v5910
        %v6118 = vpop.f32.mrf.mxu0
        %v6119 = vadd.f32 %v5856, %v6118
        %6120 = vmatmul.f32.gmra.mxu0 %v5913
        %v6121 = vpop.f32.mrf.mxu0
        %v6122 = vadd.f32 %v5856, %v6121
        %6123 = vmatmul.f32.gmra.mxu0 %v5916
        %v6124 = vpop.f32.mrf.mxu0
        %v6125 = vadd.f32 %v5856, %v6124
        %6126 = vmatmul.f32.gmra.mxu0 %v5919
        %v6127 = vpop.f32.mrf.mxu0
        %v6128 = vadd.f32 %v5856, %v6127
        %6129 = vmatmul.f32.gmra.mxu0 %v5922
        %v6130 = vpop.f32.mrf.mxu0
        %v6131 = vadd.f32 %v5856, %v6130
        %6132 = vmatmul.f32.gmra.mxu0 %v5925
        %v6133 = vpop.f32.mrf.mxu0
        %v6134 = vadd.f32 %v5856, %v6133
        %6135 = vmatmul.f32.gmra.mxu0 %v5928
        %v6136 = vpop.f32.mrf.mxu0
        %v6137 = vadd.f32 %v5856, %v6136
        %6138 = vmatmul.f32.gmra.mxu0 %v5931
        %v6139 = vpop.f32.mrf.mxu0
        %v6140 = vadd.f32 %v5856, %v6139
        %6141 = vmatmul.f32.gmra.mxu0 %v5934
        %v6142 = vpop.f32.mrf.mxu0
        %v6143 = vadd.f32 %v5856, %v6142
        %6144 = vmatmul.f32.gmra.mxu0 %v5937
        %v6145 = vpop.f32.mrf.mxu0
        %v6146 = vadd.f32 %v5856, %v6145
        %6147 = vmatmul.f32.gmra.mxu0 %v5940
        %v6148 = vpop.f32.mrf.mxu0
        %v6149 = vadd.f32 %v5856, %v6148
        %6150 = vmatmul.f32.gmra.mxu0 %v5943
        %v6151 = vpop.f32.mrf.mxu0
        %v6152 = vadd.f32 %v5856, %v6151
        %6153 = vmatmul.f32.gmra.mxu0 %v5946
        %v6154 = vpop.f32.mrf.mxu0
        %v6155 = vadd.f32 %v5856, %v6154
        %6156 = vmatmul.f32.gmra.mxu0 %v5949
        %v6157 = vpop.f32.mrf.mxu0
        %v6158 = vadd.f32 %v5856, %v6157
        %6159 = vmatmul.f32.gmra.mxu0 %v5952
        %v6160 = vpop.f32.mrf.mxu0
        %v6161 = vadd.f32 %v5856, %v6160
        %6162 = vmatmul.f32.gmra.mxu0 %v5955
        %v6163 = vpop.f32.mrf.mxu0
        %v6164 = vadd.f32 %v5856, %v6163
        %6165 = vmatmul.f32.gmra.mxu0 %v5958
        %v6166 = vpop.f32.mrf.mxu0
        %v6167 = vadd.f32 %v5856, %v6166
        %6168 = vmatmul.f32.gmra.mxu0 %v5961
        %v6169 = vpop.f32.mrf.mxu0
        %v6170 = vadd.f32 %v5856, %v6169
        %6171 = vmatmul.f32.gmra.mxu0 %v5964
        %v6172 = vpop.f32.mrf.mxu0
        %v6173 = vadd.f32 %v5856, %v6172
        %6174 = vmatmul.f32.gmra.mxu0 %v5967
        %v6175 = vpop.f32.mrf.mxu0
        %v6176 = vadd.f32 %v5856, %v6175
        %6177 = vmatmul.f32.gmra.mxu0 %v5970
        %v6178 = vpop.f32.mrf.mxu0
        %v6179 = vadd.f32 %v5856, %v6178
        %6180 = vmatmul.f32.gmra.mxu0 %v5973
        %v6181 = vpop.f32.mrf.mxu0
        %v6182 = vadd.f32 %v5856, %v6181
        %6183 = vmatmul.f32.gmra.mxu0 %v5976
        %v6184 = vpop.f32.mrf.mxu0
        %v6185 = vadd.f32 %v5856, %v6184
        %6186 = vmatmul.f32.gmra.mxu0 %v5979
        %v6187 = vpop.f32.mrf.mxu0
        %v6188 = vadd.f32 %v5856, %v6187
        %6189 = vmatmul.f32.gmra.mxu0 %v5982
        %v6190 = vpop.f32.mrf.mxu0
        %v6191 = vadd.f32 %v5856, %v6190
        %6192 = vmatmul.f32.gmra.mxu0 %v5985
        %v6193 = vpop.f32.mrf.mxu0
        %v6194 = vadd.f32 %v5856, %v6193
        %6195 = vmatmul.f32.gmra.mxu0 %v5988
        %v6196 = vpop.f32.mrf.mxu0
        %v6197 = vadd.f32 %v5856, %v6196
        %6198 = vmatmul.f32.gmra.mxu0 %v5991
        %v6199 = vpop.f32.mrf.mxu0
        %v6200 = vadd.f32 %v5856, %v6199
        %6201 = vmatmul.f32.gmra.mxu0 %v5994
        %v6202 = vpop.f32.mrf.mxu0
        %v6203 = vadd.f32 %v5856, %v6202
        %6204 = vmatmul.f32.gmra.mxu0 %v5997
        %v6205 = vpop.f32.mrf.mxu0
        %v6206 = vadd.f32 %v5856, %v6205
        %6207 = vmatmul.f32.gmra.mxu0 %v6000
        %v6208 = vpop.f32.mrf.mxu0
        %v6209 = vadd.f32 %v5856, %v6208
        %6210 = vmatmul.f32.gmra.mxu0 %v6003
        %v6211 = vpop.f32.mrf.mxu0
        %v6212 = vadd.f32 %v5856, %v6211
        %6213 = vmatmul.f32.gmra.mxu0 %v6006
        %v6214 = vpop.f32.mrf.mxu0
        %v6215 = vadd.f32 %v5856, %v6214
        %6216 = vmatmul.f32.gmra.mxu0 %v6009
        %v6217 = vpop.f32.mrf.mxu0
        %v6218 = vadd.f32 %v5856, %v6217
        %6219 = vmatmul.f32.gmra.mxu0 %v6012
        %v6220 = vpop.f32.mrf.mxu0
        %v6221 = vadd.f32 %v5856, %v6220
        %6222 = vmatmul.f32.gmra.mxu0 %v6015
        %v6223 = vpop.f32.mrf.mxu0
        %v6224 = vadd.f32 %v5856, %v6223
        %6225 = vmatmul.f32.gmra.mxu0 %v6018
        %v6226 = vpop.f32.mrf.mxu0
        %v6227 = vadd.f32 %v5856, %v6226
        %6228 = vmatmul.f32.gmra.mxu0 %v6021
        %v6229 = vpop.f32.mrf.mxu0
        %v6230 = vadd.f32 %v5856, %v6229
        %6231 = vmatmul.f32.gmra.mxu0 %v6024
        %v6232 = vpop.f32.mrf.mxu0
        %v6233 = vadd.f32 %v5856, %v6232
        %6234 = vmatmul.f32.gmra.mxu0 %v6027
        %v6235 = vpop.f32.mrf.mxu0
        %v6236 = vadd.f32 %v5856, %v6235
        %6237 = vmatmul.f32.gmra.mxu0 %v6030
        %v6238 = vpop.f32.mrf.mxu0
        %v6239 = vadd.f32 %v5856, %v6238
        %6240 = vmatmul.f32.gmra.mxu0 %v6033
        %v6241 = vpop.f32.mrf.mxu0
        %v6242 = vadd.f32 %v5856, %v6241
        %6243 = vmatmul.f32.gmra.mxu0 %v6036
        %v6244 = vpop.f32.mrf.mxu0
        %v6245 = vadd.f32 %v5856, %v6244
        %6246 = vmatmul.f32.gmra.mxu0 %v6039
        %v6247 = vpop.f32.mrf.mxu0
        %v6248 = vadd.f32 %v5856, %v6247
        %6249 = vmatmul.f32.gmra.mxu0 %v6042
        %v6250 = vpop.f32.mrf.mxu0
        %v6251 = vadd.f32 %v5856, %v6250
        %6252 = vmatmul.f32.gmra.mxu0 %v6045
        %v6253 = vpop.f32.mrf.mxu0
        %v6254 = vadd.f32 %v5856, %v6253
        %6255 = vmatmul.f32.gmra.mxu0 %v6048
        %v6256 = vpop.f32.mrf.mxu0
        %v6257 = vadd.f32 %v5856, %v6256
        %6258 = vdwg.mxu0
        %v6259 = vmax.f32 %v6068, 0.0
        %v6260 = vmax.f32 %v6071, 0.0
        %v6261 = vmax.f32 %v6074, 0.0
        %v6262 = vmax.f32 %v6077, 0.0
        %v6263 = vmax.f32 %v6080, 0.0
        %v6264 = vmax.f32 %v6083, 0.0
        %v6265 = vmax.f32 %v6086, 0.0
        %v6266 = vmax.f32 %v6089, 0.0
        %v6267 = vmax.f32 %v6092, 0.0
        %v6268 = vmax.f32 %v6095, 0.0
        %v6269 = vmax.f32 %v6098, 0.0
        %v6270 = vmax.f32 %v6101, 0.0
        %v6271 = vmax.f32 %v6104, 0.0
        %v6272 = vmax.f32 %v6107, 0.0
        %v6273 = vmax.f32 %v6110, 0.0
        %v6274 = vmax.f32 %v6113, 0.0
        %v6275 = vmax.f32 %v6116, 0.0
        %v6276 = vmax.f32 %v6119, 0.0
        %v6277 = vmax.f32 %v6122, 0.0
        %v6278 = vmax.f32 %v6125, 0.0
        %v6279 = vmax.f32 %v6128, 0.0
        %v6280 = vmax.f32 %v6131, 0.0
        %v6281 = vmax.f32 %v6134, 0.0
        %v6282 = vmax.f32 %v6137, 0.0
        %v6283 = vmax.f32 %v6140, 0.0
        %v6284 = vmax.f32 %v6143, 0.0
        %v6285 = vmax.f32 %v6146, 0.0
        %v6286 = vmax.f32 %v6149, 0.0
        %v6287 = vmax.f32 %v6152, 0.0
        %v6288 = vmax.f32 %v6155, 0.0
        %v6289 = vmax.f32 %v6158, 0.0
        %v6290 = vmax.f32 %v6161, 0.0
        %v6291 = vmax.f32 %v6164, 0.0
        %v6292 = vmax.f32 %v6167, 0.0
        %v6293 = vmax.f32 %v6170, 0.0
        %v6294 = vmax.f32 %v6173, 0.0
        %v6295 = vmax.f32 %v6176, 0.0
        %v6296 = vmax.f32 %v6179, 0.0
        %v6297 = vmax.f32 %v6182, 0.0
        %v6298 = vmax.f32 %v6185, 0.0
        %v6299 = vmax.f32 %v6188, 0.0
        %v6300 = vmax.f32 %v6191, 0.0
        %v6301 = vmax.f32 %v6194, 0.0
        %v6302 = vmax.f32 %v6197, 0.0
        %v6303 = vmax.f32 %v6200, 0.0
        %v6304 = vmax.f32 %v6203, 0.0
        %v6305 = vmax.f32 %v6206, 0.0
        %v6306 = vmax.f32 %v6209, 0.0
        %v6307 = vmax.f32 %v6212, 0.0
        %v6308 = vmax.f32 %v6215, 0.0
        %v6309 = vmax.f32 %v6218, 0.0
        %v6310 = vmax.f32 %v6221, 0.0
        %v6311 = vmax.f32 %v6224, 0.0
        %v6312 = vmax.f32 %v6227, 0.0
        %v6313 = vmax.f32 %v6230, 0.0
        %v6314 = vmax.f32 %v6233, 0.0
        %v6315 = vmax.f32 %v6236, 0.0
        %v6316 = vmax.f32 %v6239, 0.0
        %v6317 = vmax.f32 %v6242, 0.0
        %v6318 = vmax.f32 %v6245, 0.0
        %v6319 = vmax.f32 %v6248, 0.0
        %v6320 = vmax.f32 %v6251, 0.0
        %v6321 = vmax.f32 %v6254, 0.0
        %v6322 = vmax.f32 %v6257, 0.0
        %v6323 = vld [vmem:[%s5] sm:$0xff]
        %v6324 = vld [vmem:[%s5 + $0x8] sm:$0xff]
        %v6325 = vld [vmem:[%s5 + $0x10] sm:$0xff]
        %v6326 = vld [vmem:[%s5 + $0x18] sm:$0xff]
        %v6327 = vld [vmem:[%s6] sm:$0x1]
        %v6329 = vperm.slane %v6327, 0
        %v6332 = vsel %vm737, %v6259, 0
        %v6335 = vsel %vm737, %v6260, 0
        %v6338 = vsel %vm737, %v6261, 0
        %v6341 = vsel %vm737, %v6262, 0
        %v6344 = vsel %vm737, %v6263, 0
        %v6347 = vsel %vm737, %v6264, 0
        %v6350 = vsel %vm737, %v6265, 0
        %v6353 = vsel %vm737, %v6266, 0
        %v6356 = vsel %vm737, %v6267, 0
        %v6359 = vsel %vm737, %v6268, 0
        %v6362 = vsel %vm737, %v6269, 0
        %v6365 = vsel %vm737, %v6270, 0
        %v6368 = vsel %vm737, %v6271, 0
        %v6371 = vsel %vm737, %v6272, 0
        %v6374 = vsel %vm737, %v6273, 0
        %v6377 = vsel %vm737, %v6274, 0
        %v6380 = vsel %vm737, %v6275, 0
        %v6383 = vsel %vm737, %v6276, 0
        %v6386 = vsel %vm737, %v6277, 0
        %v6389 = vsel %vm737, %v6278, 0
        %v6392 = vsel %vm737, %v6279, 0
        %v6395 = vsel %vm737, %v6280, 0
        %v6398 = vsel %vm737, %v6281, 0
        %v6401 = vsel %vm737, %v6282, 0
        %v6404 = vsel %vm737, %v6283, 0
        %v6407 = vsel %vm737, %v6284, 0
        %v6410 = vsel %vm737, %v6285, 0
        %v6413 = vsel %vm737, %v6286, 0
        %v6416 = vsel %vm737, %v6287, 0
        %v6419 = vsel %vm737, %v6288, 0
        %v6422 = vsel %vm737, %v6289, 0
        %v6425 = vsel %vm737, %v6290, 0
        %v6428 = vsel %vm737, %v6291, 0
        %v6431 = vsel %vm737, %v6292, 0
        %v6434 = vsel %vm737, %v6293, 0
        %v6437 = vsel %vm737, %v6294, 0
        %v6440 = vsel %vm737, %v6295, 0
        %v6443 = vsel %vm737, %v6296, 0
        %v6446 = vsel %vm737, %v6297, 0
        %v6449 = vsel %vm737, %v6298, 0
        %v6452 = vsel %vm737, %v6299, 0
        %v6455 = vsel %vm737, %v6300, 0
        %v6458 = vsel %vm737, %v6301, 0
        %v6461 = vsel %vm737, %v6302, 0
        %v6464 = vsel %vm737, %v6303, 0
        %v6467 = vsel %vm737, %v6304, 0
        %v6470 = vsel %vm737, %v6305, 0
        %v6473 = vsel %vm737, %v6306, 0
        %v6476 = vsel %vm737, %v6307, 0
        %v6479 = vsel %vm737, %v6308, 0
        %v6482 = vsel %vm737, %v6309, 0
        %v6485 = vsel %vm737, %v6310, 0
        %v6488 = vsel %vm737, %v6311, 0
        %v6491 = vsel %vm737, %v6312, 0
        %v6494 = vsel %vm737, %v6313, 0
        %v6497 = vsel %vm737, %v6314, 0
        %v6500 = vsel %vm737, %v6315, 0
        %v6503 = vsel %vm737, %v6316, 0
        %v6506 = vsel %vm737, %v6317, 0
        %v6509 = vsel %vm737, %v6318, 0
        %v6512 = vsel %vm737, %v6319, 0
        %v6515 = vsel %vm737, %v6320, 0
        %v6518 = vsel %vm737, %v6321, 0
        %v6521 = vsel %vm737, %v6322, 0
        %6523 = vmatpush.msra.mxu0 0.0
        %6524 = vmatpush.msra.mxu0 0.0
        %6525 = vmatpush.msra.mxu0 0.0
        %6526 = vmatpush.msra.mxu0 0.0
        %6527 = vmatpush.msra.mxu0 0.0
        %6528 = vmatpush.msra.mxu0 0.0
        %6529 = vmatpush.msra.mxu0 0.0
        %6530 = vmatpush.msra.mxu0 0.0
        %6531 = vmatpush.msra.mxu0 0.0
        %6532 = vmatpush.msra.mxu0 0.0
        %6533 = vmatpush.msra.mxu0 0.0
        %6534 = vmatpush.msra.mxu0 0.0
        %6535 = vmatpush.msra.mxu0 %v6326
        %6536 = vmatpush.msra.mxu0 %v6325
        %6537 = vmatpush.msra.mxu0 %v6324
        %6538 = vmatpush.msra.mxu0 %v6323
        %6539 = vmatmul.f32.gmra.mxu0 %v6332
        %v6540 = vpop.f32.mrf.mxu0
        %v6541 = vadd.f32 %v6329, %v6540
        %6542 = vmatmul.f32.gmra.mxu0 %v6335
        %v6543 = vpop.f32.mrf.mxu0
        %v6544 = vadd.f32 %v6329, %v6543
        %6545 = vmatmul.f32.gmra.mxu0 %v6338
        %v6546 = vpop.f32.mrf.mxu0
        %v6547 = vadd.f32 %v6329, %v6546
        %6548 = vmatmul.f32.gmra.mxu0 %v6341
        %v6549 = vpop.f32.mrf.mxu0
        %v6550 = vadd.f32 %v6329, %v6549
        %6551 = vmatmul.f32.gmra.mxu0 %v6344
        %v6552 = vpop.f32.mrf.mxu0
        %v6553 = vadd.f32 %v6329, %v6552
        %6554 = vmatmul.f32.gmra.mxu0 %v6347
        %v6555 = vpop.f32.mrf.mxu0
        %v6556 = vadd.f32 %v6329, %v6555
        %6557 = vmatmul.f32.gmra.mxu0 %v6350
        %v6558 = vpop.f32.mrf.mxu0
        %v6559 = vadd.f32 %v6329, %v6558
        %6560 = vmatmul.f32.gmra.mxu0 %v6353
        %v6561 = vpop.f32.mrf.mxu0
        %v6562 = vadd.f32 %v6329, %v6561
        %6563 = vmatmul.f32.gmra.mxu0 %v6356
        %v6564 = vpop.f32.mrf.mxu0
        %v6565 = vadd.f32 %v6329, %v6564
        %6566 = vmatmul.f32.gmra.mxu0 %v6359
        %v6567 = vpop.f32.mrf.mxu0
        %v6568 = vadd.f32 %v6329, %v6567
        %6569 = vmatmul.f32.gmra.mxu0 %v6362
        %v6570 = vpop.f32.mrf.mxu0
        %v6571 = vadd.f32 %v6329, %v6570
        %6572 = vmatmul.f32.gmra.mxu0 %v6365
        %v6573 = vpop.f32.mrf.mxu0
        %v6574 = vadd.f32 %v6329, %v6573
        %6575 = vmatmul.f32.gmra.mxu0 %v6368
        %v6576 = vpop.f32.mrf.mxu0
        %v6577 = vadd.f32 %v6329, %v6576
        %6578 = vmatmul.f32.gmra.mxu0 %v6371
        %v6579 = vpop.f32.mrf.mxu0
        %v6580 = vadd.f32 %v6329, %v6579
        %6581 = vmatmul.f32.gmra.mxu0 %v6374
        %v6582 = vpop.f32.mrf.mxu0
        %v6583 = vadd.f32 %v6329, %v6582
        %6584 = vmatmul.f32.gmra.mxu0 %v6377
        %v6585 = vpop.f32.mrf.mxu0
        %v6586 = vadd.f32 %v6329, %v6585
        %6587 = vmatmul.f32.gmra.mxu0 %v6380
        %v6588 = vpop.f32.mrf.mxu0
        %v6589 = vadd.f32 %v6329, %v6588
        %6590 = vmatmul.f32.gmra.mxu0 %v6383
        %v6591 = vpop.f32.mrf.mxu0
        %v6592 = vadd.f32 %v6329, %v6591
        %6593 = vmatmul.f32.gmra.mxu0 %v6386
        %v6594 = vpop.f32.mrf.mxu0
        %v6595 = vadd.f32 %v6329, %v6594
        %6596 = vmatmul.f32.gmra.mxu0 %v6389
        %v6597 = vpop.f32.mrf.mxu0
        %v6598 = vadd.f32 %v6329, %v6597
        %6599 = vmatmul.f32.gmra.mxu0 %v6392
        %v6600 = vpop.f32.mrf.mxu0
        %v6601 = vadd.f32 %v6329, %v6600
        %6602 = vmatmul.f32.gmra.mxu0 %v6395
        %v6603 = vpop.f32.mrf.mxu0
        %v6604 = vadd.f32 %v6329, %v6603
        %6605 = vmatmul.f32.gmra.mxu0 %v6398
        %v6606 = vpop.f32.mrf.mxu0
        %v6607 = vadd.f32 %v6329, %v6606
        %6608 = vmatmul.f32.gmra.mxu0 %v6401
        %v6609 = vpop.f32.mrf.mxu0
        %v6610 = vadd.f32 %v6329, %v6609
        %6611 = vmatmul.f32.gmra.mxu0 %v6404
        %v6612 = vpop.f32.mrf.mxu0
        %v6613 = vadd.f32 %v6329, %v6612
        %6614 = vmatmul.f32.gmra.mxu0 %v6407
        %v6615 = vpop.f32.mrf.mxu0
        %v6616 = vadd.f32 %v6329, %v6615
        %6617 = vmatmul.f32.gmra.mxu0 %v6410
        %v6618 = vpop.f32.mrf.mxu0
        %v6619 = vadd.f32 %v6329, %v6618
        %6620 = vmatmul.f32.gmra.mxu0 %v6413
        %v6621 = vpop.f32.mrf.mxu0
        %v6622 = vadd.f32 %v6329, %v6621
        %6623 = vmatmul.f32.gmra.mxu0 %v6416
        %v6624 = vpop.f32.mrf.mxu0
        %v6625 = vadd.f32 %v6329, %v6624
        %6626 = vmatmul.f32.gmra.mxu0 %v6419
        %v6627 = vpop.f32.mrf.mxu0
        %v6628 = vadd.f32 %v6329, %v6627
        %6629 = vmatmul.f32.gmra.mxu0 %v6422
        %v6630 = vpop.f32.mrf.mxu0
        %v6631 = vadd.f32 %v6329, %v6630
        %6632 = vmatmul.f32.gmra.mxu0 %v6425
        %v6633 = vpop.f32.mrf.mxu0
        %v6634 = vadd.f32 %v6329, %v6633
        %6635 = vmatmul.f32.gmra.mxu0 %v6428
        %v6636 = vpop.f32.mrf.mxu0
        %v6637 = vadd.f32 %v6329, %v6636
        %6638 = vmatmul.f32.gmra.mxu0 %v6431
        %v6639 = vpop.f32.mrf.mxu0
        %v6640 = vadd.f32 %v6329, %v6639
        %6641 = vmatmul.f32.gmra.mxu0 %v6434
        %v6642 = vpop.f32.mrf.mxu0
        %v6643 = vadd.f32 %v6329, %v6642
        %6644 = vmatmul.f32.gmra.mxu0 %v6437
        %v6645 = vpop.f32.mrf.mxu0
        %v6646 = vadd.f32 %v6329, %v6645
        %6647 = vmatmul.f32.gmra.mxu0 %v6440
        %v6648 = vpop.f32.mrf.mxu0
        %v6649 = vadd.f32 %v6329, %v6648
        %6650 = vmatmul.f32.gmra.mxu0 %v6443
        %v6651 = vpop.f32.mrf.mxu0
        %v6652 = vadd.f32 %v6329, %v6651
        %6653 = vmatmul.f32.gmra.mxu0 %v6446
        %v6654 = vpop.f32.mrf.mxu0
        %v6655 = vadd.f32 %v6329, %v6654
        %6656 = vmatmul.f32.gmra.mxu0 %v6449
        %v6657 = vpop.f32.mrf.mxu0
        %v6658 = vadd.f32 %v6329, %v6657
        %6659 = vmatmul.f32.gmra.mxu0 %v6452
        %v6660 = vpop.f32.mrf.mxu0
        %v6661 = vadd.f32 %v6329, %v6660
        %6662 = vmatmul.f32.gmra.mxu0 %v6455
        %v6663 = vpop.f32.mrf.mxu0
        %v6664 = vadd.f32 %v6329, %v6663
        %6665 = vmatmul.f32.gmra.mxu0 %v6458
        %v6666 = vpop.f32.mrf.mxu0
        %v6667 = vadd.f32 %v6329, %v6666
        %6668 = vmatmul.f32.gmra.mxu0 %v6461
        %v6669 = vpop.f32.mrf.mxu0
        %v6670 = vadd.f32 %v6329, %v6669
        %6671 = vmatmul.f32.gmra.mxu0 %v6464
        %v6672 = vpop.f32.mrf.mxu0
        %v6673 = vadd.f32 %v6329, %v6672
        %6674 = vmatmul.f32.gmra.mxu0 %v6467
        %v6675 = vpop.f32.mrf.mxu0
        %v6676 = vadd.f32 %v6329, %v6675
        %6677 = vmatmul.f32.gmra.mxu0 %v6470
        %v6678 = vpop.f32.mrf.mxu0
        %v6679 = vadd.f32 %v6329, %v6678
        %6680 = vmatmul.f32.gmra.mxu0 %v6473
        %v6681 = vpop.f32.mrf.mxu0
        %v6682 = vadd.f32 %v6329, %v6681
        %6683 = vmatmul.f32.gmra.mxu0 %v6476
        %v6684 = vpop.f32.mrf.mxu0
        %v6685 = vadd.f32 %v6329, %v6684
        %6686 = vmatmul.f32.gmra.mxu0 %v6479
        %v6687 = vpop.f32.mrf.mxu0
        %v6688 = vadd.f32 %v6329, %v6687
        %6689 = vmatmul.f32.gmra.mxu0 %v6482
        %v6690 = vpop.f32.mrf.mxu0
        %v6691 = vadd.f32 %v6329, %v6690
        %6692 = vmatmul.f32.gmra.mxu0 %v6485
        %v6693 = vpop.f32.mrf.mxu0
        %v6694 = vadd.f32 %v6329, %v6693
        %6695 = vmatmul.f32.gmra.mxu0 %v6488
        %v6696 = vpop.f32.mrf.mxu0
        %v6697 = vadd.f32 %v6329, %v6696
        %6698 = vmatmul.f32.gmra.mxu0 %v6491
        %v6699 = vpop.f32.mrf.mxu0
        %v6700 = vadd.f32 %v6329, %v6699
        %6701 = vmatmul.f32.gmra.mxu0 %v6494
        %v6702 = vpop.f32.mrf.mxu0
        %v6703 = vadd.f32 %v6329, %v6702
        %6704 = vmatmul.f32.gmra.mxu0 %v6497
        %v6705 = vpop.f32.mrf.mxu0
        %v6706 = vadd.f32 %v6329, %v6705
        %6707 = vmatmul.f32.gmra.mxu0 %v6500
        %v6708 = vpop.f32.mrf.mxu0
        %v6709 = vadd.f32 %v6329, %v6708
        %6710 = vmatmul.f32.gmra.mxu0 %v6503
        %v6711 = vpop.f32.mrf.mxu0
        %v6712 = vadd.f32 %v6329, %v6711
        %6713 = vmatmul.f32.gmra.mxu0 %v6506
        %v6714 = vpop.f32.mrf.mxu0
        %v6715 = vadd.f32 %v6329, %v6714
        %6716 = vmatmul.f32.gmra.mxu0 %v6509
        %v6717 = vpop.f32.mrf.mxu0
        %v6718 = vadd.f32 %v6329, %v6717
        %6719 = vmatmul.f32.gmra.mxu0 %v6512
        %v6720 = vpop.f32.mrf.mxu0
        %v6721 = vadd.f32 %v6329, %v6720
        %6722 = vmatmul.f32.gmra.mxu0 %v6515
        %v6723 = vpop.f32.mrf.mxu0
        %v6724 = vadd.f32 %v6329, %v6723
        %6725 = vmatmul.f32.gmra.mxu0 %v6518
        %v6726 = vpop.f32.mrf.mxu0
        %v6727 = vadd.f32 %v6329, %v6726
        %6728 = vmatmul.f32.gmra.mxu0 %v6521
        %v6729 = vpop.f32.mrf.mxu0
        %v6730 = vadd.f32 %v6329, %v6729
        %6731 = vdwg.mxu0
        %v6732 = vadd.s32 %v827, 8
        %vm6733 = vcmp.lt.s32.totalorder %v827, 10
        %vm6734 = vcmp.lt.s32.totalorder %v6732, 10
        %v6735 = vsel %vm6733, 0.1, 0.0
        %v6736 = vsel %vm6734, 0.1, 0.0
        %v6737 = vmul.f32 %v6541, %v6735
        %v6738 = vmul.f32 %v6544, %v6736
        %v6739 = vmul.f32 %v6547, %v6735
        %v6740 = vmul.f32 %v6550, %v6736
        %v6741 = vmul.f32 %v6553, %v6735
        %v6742 = vmul.f32 %v6556, %v6736
        %v6743 = vmul.f32 %v6559, %v6735
        %v6744 = vmul.f32 %v6562, %v6736
        %v6745 = vmul.f32 %v6565, %v6735
        %v6746 = vmul.f32 %v6568, %v6736
        %v6747 = vmul.f32 %v6571, %v6735
        %v6748 = vmul.f32 %v6574, %v6736
        %v6749 = vmul.f32 %v6577, %v6735
        %v6750 = vmul.f32 %v6580, %v6736
        %v6751 = vmul.f32 %v6583, %v6735
        %v6752 = vmul.f32 %v6586, %v6736
        %v6753 = vmul.f32 %v6589, %v6735
        %v6754 = vmul.f32 %v6592, %v6736
        %v6755 = vmul.f32 %v6595, %v6735
        %v6756 = vmul.f32 %v6598, %v6736
        %v6757 = vmul.f32 %v6601, %v6735
        %v6758 = vmul.f32 %v6604, %v6736
        %v6759 = vmul.f32 %v6607, %v6735
        %v6760 = vmul.f32 %v6610, %v6736
        %v6761 = vmul.f32 %v6613, %v6735
        %v6762 = vmul.f32 %v6616, %v6736
        %v6763 = vmul.f32 %v6619, %v6735
        %v6764 = vmul.f32 %v6622, %v6736
        %v6765 = vmul.f32 %v6625, %v6735
        %v6766 = vmul.f32 %v6628, %v6736
        %v6767 = vmul.f32 %v6631, %v6735
        %v6768 = vmul.f32 %v6634, %v6736
        %v6769 = vmul.f32 %v6637, %v6735
        %v6770 = vmul.f32 %v6640, %v6736
        %v6771 = vmul.f32 %v6643, %v6735
        %v6772 = vmul.f32 %v6646, %v6736
        %v6773 = vmul.f32 %v6649, %v6735
        %v6774 = vmul.f32 %v6652, %v6736
        %v6775 = vmul.f32 %v6655, %v6735
        %v6776 = vmul.f32 %v6658, %v6736
        %v6777 = vmul.f32 %v6661, %v6735
        %v6778 = vmul.f32 %v6664, %v6736
        %v6779 = vmul.f32 %v6667, %v6735
        %v6780 = vmul.f32 %v6670, %v6736
        %v6781 = vmul.f32 %v6673, %v6735
        %v6782 = vmul.f32 %v6676, %v6736
        %v6783 = vmul.f32 %v6679, %v6735
        %v6784 = vmul.f32 %v6682, %v6736
        %v6785 = vmul.f32 %v6685, %v6735
        %v6786 = vmul.f32 %v6688, %v6736
        %v6787 = vmul.f32 %v6691, %v6735
        %v6788 = vmul.f32 %v6694, %v6736
        %v6789 = vmul.f32 %v6697, %v6735
        %v6790 = vmul.f32 %v6700, %v6736
        %v6791 = vmul.f32 %v6703, %v6735
        %v6792 = vmul.f32 %v6706, %v6736
        %v6793 = vmul.f32 %v6709, %v6735
        %v6794 = vmul.f32 %v6712, %v6736
        %v6795 = vmul.f32 %v6715, %v6735
        %v6796 = vmul.f32 %v6718, %v6736
        %v6797 = vmul.f32 %v6721, %v6735
        %v6798 = vmul.f32 %v6724, %v6736
        %v6799 = vmul.f32 %v6727, %v6735
        %v6800 = vmul.f32 %v6730, %v6736
        %v6801 = vsel %vm737, %v6737, 0.0
        %v6802 = vsel %vm737, %v6738, 0.0
        %v6803 = vadd.f32 %v6801, %v6802
        %v6804 = vrot.slane %v6803, 4
        %v6805 = vadd.f32 %v6803, %v6804
        %v6806 = vrot.slane %v6805, 2
        %v6807 = vadd.f32 %v6805, %v6806
        %v6808 = vrot.slane %v6807, 1
        %v6809 = vadd.f32 %v6807, %v6808
        %v6810 = vsel %vm737, %v6739, 0.0
        %v6811 = vsel %vm737, %v6740, 0.0
        %v6812 = vadd.f32 %v6810, %v6811
        %v6813 = vrot.slane %v6812, 4
        %v6814 = vadd.f32 %v6812, %v6813
        %v6815 = vrot.slane %v6814, 2
        %v6816 = vadd.f32 %v6814, %v6815
        %v6817 = vrot.slane %v6816, 1
        %v6818 = vadd.f32 %v6816, %v6817
        %v6819 = vsel %vm737, %v6741, 0.0
        %v6820 = vsel %vm737, %v6742, 0.0
        %v6821 = vadd.f32 %v6819, %v6820
        %v6822 = vrot.slane %v6821, 4
        %v6823 = vadd.f32 %v6821, %v6822
        %v6824 = vrot.slane %v6823, 2
        %v6825 = vadd.f32 %v6823, %v6824
        %v6826 = vrot.slane %v6825, 1
        %v6827 = vadd.f32 %v6825, %v6826
        %v6828 = vsel %vm737, %v6743, 0.0
        %v6829 = vsel %vm737, %v6744, 0.0
        %v6830 = vadd.f32 %v6828, %v6829
        %v6831 = vrot.slane %v6830, 4
        %v6832 = vadd.f32 %v6830, %v6831
        %v6833 = vrot.slane %v6832, 2
        %v6834 = vadd.f32 %v6832, %v6833
        %v6835 = vrot.slane %v6834, 1
        %v6836 = vadd.f32 %v6834, %v6835
        %v6837 = vsel %vm737, %v6745, 0.0
        %v6838 = vsel %vm737, %v6746, 0.0
        %v6839 = vadd.f32 %v6837, %v6838
        %v6840 = vrot.slane %v6839, 4
        %v6841 = vadd.f32 %v6839, %v6840
        %v6842 = vrot.slane %v6841, 2
        %v6843 = vadd.f32 %v6841, %v6842
        %v6844 = vrot.slane %v6843, 1
        %v6845 = vadd.f32 %v6843, %v6844
        %v6846 = vsel %vm737, %v6747, 0.0
        %v6847 = vsel %vm737, %v6748, 0.0
        %v6848 = vadd.f32 %v6846, %v6847
        %v6849 = vrot.slane %v6848, 4
        %v6850 = vadd.f32 %v6848, %v6849
        %v6851 = vrot.slane %v6850, 2
        %v6852 = vadd.f32 %v6850, %v6851
        %v6853 = vrot.slane %v6852, 1
        %v6854 = vadd.f32 %v6852, %v6853
        %v6855 = vsel %vm737, %v6749, 0.0
        %v6856 = vsel %vm737, %v6750, 0.0
        %v6857 = vadd.f32 %v6855, %v6856
        %v6858 = vrot.slane %v6857, 4
        %v6859 = vadd.f32 %v6857, %v6858
        %v6860 = vrot.slane %v6859, 2
        %v6861 = vadd.f32 %v6859, %v6860
        %v6862 = vrot.slane %v6861, 1
        %v6863 = vadd.f32 %v6861, %v6862
        %v6864 = vsel %vm737, %v6751, 0.0
        %v6865 = vsel %vm737, %v6752, 0.0
        %v6866 = vadd.f32 %v6864, %v6865
        %v6867 = vrot.slane %v6866, 4
        %v6868 = vadd.f32 %v6866, %v6867
        %v6869 = vrot.slane %v6868, 2
        %v6870 = vadd.f32 %v6868, %v6869
        %v6871 = vrot.slane %v6870, 1
        %v6872 = vadd.f32 %v6870, %v6871
        %v6873 = vsel %vm737, %v6753, 0.0
        %v6874 = vsel %vm737, %v6754, 0.0
        %v6875 = vadd.f32 %v6873, %v6874
        %v6876 = vrot.slane %v6875, 4
        %v6877 = vadd.f32 %v6875, %v6876
        %v6878 = vrot.slane %v6877, 2
        %v6879 = vadd.f32 %v6877, %v6878
        %v6880 = vrot.slane %v6879, 1
        %v6881 = vadd.f32 %v6879, %v6880
        %v6882 = vsel %vm737, %v6755, 0.0
        %v6883 = vsel %vm737, %v6756, 0.0
        %v6884 = vadd.f32 %v6882, %v6883
        %v6885 = vrot.slane %v6884, 4
        %v6886 = vadd.f32 %v6884, %v6885
        %v6887 = vrot.slane %v6886, 2
        %v6888 = vadd.f32 %v6886, %v6887
        %v6889 = vrot.slane %v6888, 1
        %v6890 = vadd.f32 %v6888, %v6889
        %v6891 = vsel %vm737, %v6757, 0.0
        %v6892 = vsel %vm737, %v6758, 0.0
        %v6893 = vadd.f32 %v6891, %v6892
        %v6894 = vrot.slane %v6893, 4
        %v6895 = vadd.f32 %v6893, %v6894
        %v6896 = vrot.slane %v6895, 2
        %v6897 = vadd.f32 %v6895, %v6896
        %v6898 = vrot.slane %v6897, 1
        %v6899 = vadd.f32 %v6897, %v6898
        %v6900 = vsel %vm737, %v6759, 0.0
        %v6901 = vsel %vm737, %v6760, 0.0
        %v6902 = vadd.f32 %v6900, %v6901
        %v6903 = vrot.slane %v6902, 4
        %v6904 = vadd.f32 %v6902, %v6903
        %v6905 = vrot.slane %v6904, 2
        %v6906 = vadd.f32 %v6904, %v6905
        %v6907 = vrot.slane %v6906, 1
        %v6908 = vadd.f32 %v6906, %v6907
        %v6909 = vsel %vm737, %v6761, 0.0
        %v6910 = vsel %vm737, %v6762, 0.0
        %v6911 = vadd.f32 %v6909, %v6910
        %v6912 = vrot.slane %v6911, 4
        %v6913 = vadd.f32 %v6911, %v6912
        %v6914 = vrot.slane %v6913, 2
        %v6915 = vadd.f32 %v6913, %v6914
        %v6916 = vrot.slane %v6915, 1
        %v6917 = vadd.f32 %v6915, %v6916
        %v6918 = vsel %vm737, %v6763, 0.0
        %v6919 = vsel %vm737, %v6764, 0.0
        %v6920 = vadd.f32 %v6918, %v6919
        %v6921 = vrot.slane %v6920, 4
        %v6922 = vadd.f32 %v6920, %v6921
        %v6923 = vrot.slane %v6922, 2
        %v6924 = vadd.f32 %v6922, %v6923
        %v6925 = vrot.slane %v6924, 1
        %v6926 = vadd.f32 %v6924, %v6925
        %v6927 = vsel %vm737, %v6765, 0.0
        %v6928 = vsel %vm737, %v6766, 0.0
        %v6929 = vadd.f32 %v6927, %v6928
        %v6930 = vrot.slane %v6929, 4
        %v6931 = vadd.f32 %v6929, %v6930
        %v6932 = vrot.slane %v6931, 2
        %v6933 = vadd.f32 %v6931, %v6932
        %v6934 = vrot.slane %v6933, 1
        %v6935 = vadd.f32 %v6933, %v6934
        %v6936 = vsel %vm737, %v6767, 0.0
        %v6937 = vsel %vm737, %v6768, 0.0
        %v6938 = vadd.f32 %v6936, %v6937
        %v6939 = vrot.slane %v6938, 4
        %v6940 = vadd.f32 %v6938, %v6939
        %v6941 = vrot.slane %v6940, 2
        %v6942 = vadd.f32 %v6940, %v6941
        %v6943 = vrot.slane %v6942, 1
        %v6944 = vadd.f32 %v6942, %v6943
        %v6945 = vsel %vm737, %v6769, 0.0
        %v6946 = vsel %vm737, %v6770, 0.0
        %v6947 = vadd.f32 %v6945, %v6946
        %v6948 = vrot.slane %v6947, 4
        %v6949 = vadd.f32 %v6947, %v6948
        %v6950 = vrot.slane %v6949, 2
        %v6951 = vadd.f32 %v6949, %v6950
        %v6952 = vrot.slane %v6951, 1
        %v6953 = vadd.f32 %v6951, %v6952
        %v6954 = vsel %vm737, %v6771, 0.0
        %v6955 = vsel %vm737, %v6772, 0.0
        %v6956 = vadd.f32 %v6954, %v6955
        %v6957 = vrot.slane %v6956, 4
        %v6958 = vadd.f32 %v6956, %v6957
        %v6959 = vrot.slane %v6958, 2
        %v6960 = vadd.f32 %v6958, %v6959
        %v6961 = vrot.slane %v6960, 1
        %v6962 = vadd.f32 %v6960, %v6961
        %v6963 = vsel %vm737, %v6773, 0.0
        %v6964 = vsel %vm737, %v6774, 0.0
        %v6965 = vadd.f32 %v6963, %v6964
        %v6966 = vrot.slane %v6965, 4
        %v6967 = vadd.f32 %v6965, %v6966
        %v6968 = vrot.slane %v6967, 2
        %v6969 = vadd.f32 %v6967, %v6968
        %v6970 = vrot.slane %v6969, 1
        %v6971 = vadd.f32 %v6969, %v6970
        %v6972 = vsel %vm737, %v6775, 0.0
        %v6973 = vsel %vm737, %v6776, 0.0
        %v6974 = vadd.f32 %v6972, %v6973
        %v6975 = vrot.slane %v6974, 4
        %v6976 = vadd.f32 %v6974, %v6975
        %v6977 = vrot.slane %v6976, 2
        %v6978 = vadd.f32 %v6976, %v6977
        %v6979 = vrot.slane %v6978, 1
        %v6980 = vadd.f32 %v6978, %v6979
        %v6981 = vsel %vm737, %v6777, 0.0
        %v6982 = vsel %vm737, %v6778, 0.0
        %v6983 = vadd.f32 %v6981, %v6982
        %v6984 = vrot.slane %v6983, 4
        %v6985 = vadd.f32 %v6983, %v6984
        %v6986 = vrot.slane %v6985, 2
        %v6987 = vadd.f32 %v6985, %v6986
        %v6988 = vrot.slane %v6987, 1
        %v6989 = vadd.f32 %v6987, %v6988
        %v6990 = vsel %vm737, %v6779, 0.0
        %v6991 = vsel %vm737, %v6780, 0.0
        %v6992 = vadd.f32 %v6990, %v6991
        %v6993 = vrot.slane %v6992, 4
        %v6994 = vadd.f32 %v6992, %v6993
        %v6995 = vrot.slane %v6994, 2
        %v6996 = vadd.f32 %v6994, %v6995
        %v6997 = vrot.slane %v6996, 1
        %v6998 = vadd.f32 %v6996, %v6997
        %v6999 = vsel %vm737, %v6781, 0.0
        %v7000 = vsel %vm737, %v6782, 0.0
        %v7001 = vadd.f32 %v6999, %v7000
        %v7002 = vrot.slane %v7001, 4
        %v7003 = vadd.f32 %v7001, %v7002
        %v7004 = vrot.slane %v7003, 2
        %v7005 = vadd.f32 %v7003, %v7004
        %v7006 = vrot.slane %v7005, 1
        %v7007 = vadd.f32 %v7005, %v7006
        %v7008 = vsel %vm737, %v6783, 0.0
        %v7009 = vsel %vm737, %v6784, 0.0
        %v7010 = vadd.f32 %v7008, %v7009
        %v7011 = vrot.slane %v7010, 4
        %v7012 = vadd.f32 %v7010, %v7011
        %v7013 = vrot.slane %v7012, 2
        %v7014 = vadd.f32 %v7012, %v7013
        %v7015 = vrot.slane %v7014, 1
        %v7016 = vadd.f32 %v7014, %v7015
        %v7017 = vsel %vm737, %v6785, 0.0
        %v7018 = vsel %vm737, %v6786, 0.0
        %v7019 = vadd.f32 %v7017, %v7018
        %v7020 = vrot.slane %v7019, 4
        %v7021 = vadd.f32 %v7019, %v7020
        %v7022 = vrot.slane %v7021, 2
        %v7023 = vadd.f32 %v7021, %v7022
        %v7024 = vrot.slane %v7023, 1
        %v7025 = vadd.f32 %v7023, %v7024
        %v7026 = vsel %vm737, %v6787, 0.0
        %v7027 = vsel %vm737, %v6788, 0.0
        %v7028 = vadd.f32 %v7026, %v7027
        %v7029 = vrot.slane %v7028, 4
        %v7030 = vadd.f32 %v7028, %v7029
        %v7031 = vrot.slane %v7030, 2
        %v7032 = vadd.f32 %v7030, %v7031
        %v7033 = vrot.slane %v7032, 1
        %v7034 = vadd.f32 %v7032, %v7033
        %v7035 = vsel %vm737, %v6789, 0.0
        %v7036 = vsel %vm737, %v6790, 0.0
        %v7037 = vadd.f32 %v7035, %v7036
        %v7038 = vrot.slane %v7037, 4
        %v7039 = vadd.f32 %v7037, %v7038
        %v7040 = vrot.slane %v7039, 2
        %v7041 = vadd.f32 %v7039, %v7040
        %v7042 = vrot.slane %v7041, 1
        %v7043 = vadd.f32 %v7041, %v7042
        %v7044 = vsel %vm737, %v6791, 0.0
        %v7045 = vsel %vm737, %v6792, 0.0
        %v7046 = vadd.f32 %v7044, %v7045
        %v7047 = vrot.slane %v7046, 4
        %v7048 = vadd.f32 %v7046, %v7047
        %v7049 = vrot.slane %v7048, 2
        %v7050 = vadd.f32 %v7048, %v7049
        %v7051 = vrot.slane %v7050, 1
        %v7052 = vadd.f32 %v7050, %v7051
        %v7053 = vsel %vm737, %v6793, 0.0
        %v7054 = vsel %vm737, %v6794, 0.0
        %v7055 = vadd.f32 %v7053, %v7054
        %v7056 = vrot.slane %v7055, 4
        %v7057 = vadd.f32 %v7055, %v7056
        %v7058 = vrot.slane %v7057, 2
        %v7059 = vadd.f32 %v7057, %v7058
        %v7060 = vrot.slane %v7059, 1
        %v7061 = vadd.f32 %v7059, %v7060
        %v7062 = vsel %vm737, %v6795, 0.0
        %v7063 = vsel %vm737, %v6796, 0.0
        %v7064 = vadd.f32 %v7062, %v7063
        %v7065 = vrot.slane %v7064, 4
        %v7066 = vadd.f32 %v7064, %v7065
        %v7067 = vrot.slane %v7066, 2
        %v7068 = vadd.f32 %v7066, %v7067
        %v7069 = vrot.slane %v7068, 1
        %v7070 = vadd.f32 %v7068, %v7069
        %v7071 = vsel %vm737, %v6797, 0.0
        %v7072 = vsel %vm737, %v6798, 0.0
        %v7073 = vadd.f32 %v7071, %v7072
        %v7074 = vrot.slane %v7073, 4
        %v7075 = vadd.f32 %v7073, %v7074
        %v7076 = vrot.slane %v7075, 2
        %v7077 = vadd.f32 %v7075, %v7076
        %v7078 = vrot.slane %v7077, 1
        %v7079 = vadd.f32 %v7077, %v7078
        %v7080 = vsel %vm737, %v6799, 0.0
        %v7081 = vsel %vm737, %v6800, 0.0
        %v7082 = vadd.f32 %v7080, %v7081
        %v7083 = vrot.slane %v7082, 4
        %v7084 = vadd.f32 %v7082, %v7083
        %v7085 = vrot.slane %v7084, 2
        %v7086 = vadd.f32 %v7084, %v7085
        %v7087 = vrot.slane %v7086, 1
        %v7088 = vadd.f32 %v7086, %v7087
        %v7089 = vld [vmem:[%s7] sm:$0xff]
        %v7090 = vld [vmem:[%s7 + $0x8] sm:$0xff]
        %v7091 = vld [vmem:[%s7 + $0x10] sm:$0xff]
        %v7092 = vld [vmem:[%s7 + $0x18] sm:$0xff]
        %v7093 = vld [vmem:[%s8] sm:$0x1]
        %v7095 = vperm.slane %v7093, 0
        %vm7129 = vcmask 1041409
        %v7130 = vsel %vm7129, %v6818, %v6809
        %vm7131 = vcmask 1042434
        %v7132 = vsel %vm7131, %v6827, %v7130
        %vm7133 = vcmask 1043459
        %v7134 = vsel %vm7133, %v6836, %v7132
        %vm7135 = vcmask 1044484
        %v7136 = vsel %vm7135, %v6845, %v7134
        %vm7137 = vcmask 1045509
        %v7138 = vsel %vm7137, %v6854, %v7136
        %vm7139 = vcmask 1046534
        %v7140 = vsel %vm7139, %v6863, %v7138
        %vm7141 = vcmask 1047559
        %v7142 = vsel %vm7141, %v6872, %v7140
        %v7143 = vsel %vm7129, %v6890, %v6881
        %v7144 = vsel %vm7131, %v6899, %v7143
        %v7145 = vsel %vm7133, %v6908, %v7144
        %v7146 = vsel %vm7135, %v6917, %v7145
        %v7147 = vsel %vm7137, %v6926, %v7146
        %v7148 = vsel %vm7139, %v6935, %v7147
        %v7149 = vsel %vm7141, %v6944, %v7148
        %v7150 = vsel %vm7129, %v6962, %v6953
        %v7151 = vsel %vm7131, %v6971, %v7150
        %v7152 = vsel %vm7133, %v6980, %v7151
        %v7153 = vsel %vm7135, %v6989, %v7152
        %v7154 = vsel %vm7137, %v6998, %v7153
        %v7155 = vsel %vm7139, %v7007, %v7154
        %v7156 = vsel %vm7141, %v7016, %v7155
        %v7157 = vsel %vm7129, %v7034, %v7025
        %v7158 = vsel %vm7131, %v7043, %v7157
        %v7159 = vsel %vm7133, %v7052, %v7158
        %v7160 = vsel %vm7135, %v7061, %v7159
        %v7161 = vsel %vm7137, %v7070, %v7160
        %v7162 = vsel %vm7139, %v7079, %v7161
        %v7163 = vsel %vm7141, %v7088, %v7162
        %v7164 = vsel %vm737, %v7142, 0
        %v7166 = vsel %vm737, %v7149, 0
        %v7168 = vsel %vm737, %v7156, 0
        %v7170 = vsel %vm737, %v7163, 0
        %7172 = vmatpush.msra.mxu0 0.0
        %7173 = vmatpush.msra.mxu0 0.0
        %7174 = vmatpush.msra.mxu0 0.0
        %7175 = vmatpush.msra.mxu0 0.0
        %7176 = vmatpush.msra.mxu0 0.0
        %7177 = vmatpush.msra.mxu0 0.0
        %7178 = vmatpush.msra.mxu0 0.0
        %7179 = vmatpush.msra.mxu0 0.0
        %7180 = vmatpush.msra.mxu0 0.0
        %7181 = vmatpush.msra.mxu0 0.0
        %7182 = vmatpush.msra.mxu0 0.0
        %7183 = vmatpush.msra.mxu0 0.0
        %7184 = vmatpush.msra.mxu0 %v7092
        %7185 = vmatpush.msra.mxu0 %v7091
        %7186 = vmatpush.msra.mxu0 %v7090
        %7187 = vmatpush.msra.mxu0 %v7089
        %7188 = vmatmul.f32.gmra.mxu0 %v7164
        %v7189 = vpop.f32.mrf.mxu0
        %v7190 = vadd.f32 %v7095, %v7189
        %7191 = vmatmul.f32.gmra.mxu0 %v7166
        %v7192 = vpop.f32.mrf.mxu0
        %v7193 = vadd.f32 %v7095, %v7192
        %7194 = vmatmul.f32.gmra.mxu0 %v7168
        %v7195 = vpop.f32.mrf.mxu0
        %v7196 = vadd.f32 %v7095, %v7195
        %7197 = vmatmul.f32.gmra.mxu0 %v7170
        %v7198 = vpop.f32.mrf.mxu0
        %v7199 = vadd.f32 %v7095, %v7198
        %7200 = vdwg.mxu0
        %v7201 = vmax.f32 %v7190, 0.0
        %v7202 = vmax.f32 %v7193, 0.0
        %v7203 = vmax.f32 %v7196, 0.0
        %v7204 = vmax.f32 %v7199, 0.0
        %v7205 = vld [vmem:[%s9] sm:$0xff]
        %v7206 = vld [vmem:[%s9 + $0x8] sm:$0xff]
        %v7207 = vld [vmem:[%s9 + $0x10] sm:$0xff]
        %v7208 = vld [vmem:[%s9 + $0x18] sm:$0xff]
        %v7209 = vld [vmem:[%s10] sm:$0x1]
        %v7211 = vperm.slane %v7209, 0
        %v7214 = vsel %vm737, %v7201, 0
        %v7217 = vsel %vm737, %v7202, 0
        %v7220 = vsel %vm737, %v7203, 0
        %v7223 = vsel %vm737, %v7204, 0
        %7225 = vmatpush.msra.mxu0 0.0
        %7226 = vmatpush.msra.mxu0 0.0
        %7227 = vmatpush.msra.mxu0 0.0
        %7228 = vmatpush.msra.mxu0 0.0
        %7229 = vmatpush.msra.mxu0 0.0
        %7230 = vmatpush.msra.mxu0 0.0
        %7231 = vmatpush.msra.mxu0 0.0
        %7232 = vmatpush.msra.mxu0 0.0
        %7233 = vmatpush.msra.mxu0 0.0
        %7234 = vmatpush.msra.mxu0 0.0
        %7235 = vmatpush.msra.mxu0 0.0
        %7236 = vmatpush.msra.mxu0 0.0
        %7237 = vmatpush.msra.mxu0 %v7208
        %7238 = vmatpush.msra.mxu0 %v7207
        %7239 = vmatpush.msra.mxu0 %v7206
        %7240 = vmatpush.msra.mxu0 %v7205
        %7241 = vmatmul.f32.gmra.mxu0 %v7214
        %v7242 = vpop.f32.mrf.mxu0
        %v7243 = vadd.f32 %v7211, %v7242
        %7244 = vmatmul.f32.gmra.mxu0 %v7217
        %v7245 = vpop.f32.mrf.mxu0
        %v7246 = vadd.f32 %v7211, %v7245
        %7247 = vmatmul.f32.gmra.mxu0 %v7220
        %v7248 = vpop.f32.mrf.mxu0
        %v7249 = vadd.f32 %v7211, %v7248
        %7250 = vmatmul.f32.gmra.mxu0 %v7223
        %v7251 = vpop.f32.mrf.mxu0
        %v7252 = vadd.f32 %v7211, %v7251
        %7253 = vdwg.mxu0
        %7254 = vst [vmem:[%s424] sm:$0xff] %v7243
        %7255 = vst [vmem:[%s424 + $0x8] sm:$0xff] %v7246
        %7256 = vst [vmem:[%s424 + $0x10] sm:$0xff] %v7249
        %7257 = vst [vmem:[%s424 + $0x18] sm:$0xff] %v7252
        %s7258 = sand.u32 %s292, 1
        %s7259 = scalar_lea.sflag [#allocation4], %s7258
        %s7260 = sand.u32 %s292, 1
        %s7261 = smul.addr %s7260, 32
        %s7262 = scalar_lea.vmem [#allocation5], %s7261
        // Predicated region
        $region73: #{tpu_custom_call.1} parent=67 // pred_check
          %p7263 = pneg %p302
        $region74: #{tpu_custom_call.1} parent=67 // pred_check_branch
          %7265 = sbr.rel (%p7263) target = $region76
        $region75: #{tpu_custom_call.1} parent=67 // pred_region
          %s7266 = smul.u32 4, %s27
          %7268 = vsyncadd %s7259, 0
          %s7269 = smul.addr %s7266, 8
          %s7270 = scalar_lea.hbm %s12, %s7269
          %s7271 = sshll.u32 %s7262, 4
          %s7272 = int_to_ptr.vmem [resolvable:$true] %s7271
          %s7273 = sshll.u32 %s7270, 4
          %s7274 = int_to_ptr.hbm [resolvable:$true] %s7273
          %7279 = dma.vmem_to_hbm [thread:$0]  %s7272, 512, %s7274, %s7259, 128, 128, 8
        $region76: #{tpu_custom_call.1} parent=67 // pred_fallthru
          _
      $region68: #{tpu_custom_call.1} parent=5 // pred_fallthru
        _
      %p7280 = scmp.le.s32.totalorder 2, %s22
      // Predicated region
      $region77: #{tpu_custom_call.1} parent=5 // pred_check
        %p7281 = pneg %p7280
      $region78: #{tpu_custom_call.1} parent=5 // pred_check_branch
        %7283 = sbr.rel (%p7281) target = $region80
      $region79: #{tpu_custom_call.1} parent=5 // pred_region
        %s7284 = ssub.s32 %s22, 2
        // Predicated region
        $region81: #{tpu_custom_call.1} parent=79 // pred_check
          %p7285 = pneg %p308
        $region82: #{tpu_custom_call.1} parent=79 // pred_check_branch
          %7287 = sbr.rel (%p7285) target = $region84
        $region83: #{tpu_custom_call.1} parent=79 // pred_region
          %s7288 = sand.u32 %s293, 1
          %s7289 = scalar_lea.sflag [#allocation4], %s7288
          %s7290 = sand.u32 %s293, 1
          %s7291 = smul.addr %s7290, 32
          %s7292 = scalar_lea.vmem [#allocation5], %s7291
          %7294 = dma.done %s7289, 512
        $region84: #{tpu_custom_call.1} parent=79 // pred_fallthru
          _
      $region80: #{tpu_custom_call.1} parent=5 // pred_fallthru
        _
    $region6: #{tpu_custom_call.1} parent=1 // loop_footer
      %s26 = sadd.s32 1, %s22
    $region7: #{tpu_custom_call.1} parent=1 // loop_footer_branch
      %21 = sbr.rel target = $region3
    $region8: #{tpu_custom_call.1} parent=1 // loop_exit
      _
    %7295 = vsyncpa [#allocation3], 1
    %s7296 = scalar_lea.sflag [#allocation3], 1
    %7297 = vsyncpa %s7296, 1
    %7298 = vsyncpa [#allocation4], 1
    %s7299 = scalar_lea.sflag [#allocation4], 1
    %7300 = vsyncpa %s7299, 1

</llo_original>
